<compile_context>
chip_gen: v5e
topology: v5e:2x2
jax: 0.10.0
libtpu: 0.0.40
codegen_flags: <defaults>
</compile_context>

<pallas_src>
import jax
import jax.numpy as jnp
from jax.experimental import pallas as pl
from jax.experimental.pallas import tpu as pltpu


# ----------------------------- Pallas kernel ------------------------------

def _make_fused_kernel(B, P):
    """Build the fused forward kernel for static batch B and patches-per-image P."""
    inv_p = 1.0 / float(P)

    def kernel(p_ref, ws_ref, bs_ref, wcomb_ref, z_ref):
        """Entire forward pass in one kernel (no grid).

        p_ref    : (2B*P, Kp) bf16  im2col patches of x and y stacked along batch
        ws_ref   : (Kp, C)    bf16  stem conv weight (rows zero-padded 27->Kp)
        bs_ref   : (1, C)     f32   stem conv bias
        wcomb_ref: (C, 50)    f32   folded w_head @ w_cls (Linear biases cancel in cx - cy)
        z_ref    : (B, 1)     f32   pairwise distance output
        """
        # Stem conv-as-matmul (bf16 in, f32 accumulate) + SiLU for both branches at once.
        h = jnp.dot(p_ref[...], ws_ref[...],
                    preferred_element_type=jnp.float32) + bs_ref[...]
        h = h * jax.nn.sigmoid(h)                                   # SiLU (EfficientNet stem)

        # Global-average-pool + branch difference via tile-aligned sublane reductions
        # (P = Ho*Wo is a multiple of 8, so static slices stay on (8,128) tile boundaries).
        rows = []
        for b in range(B):
            sx = jnp.sum(h[b * P:(b + 1) * P, :], axis=0, keepdims=True)          # GAP(x_b)*P
            sy = jnp.sum(h[(B + b) * P:(B + b + 1) * P, :], axis=0, keepdims=True)  # GAP(y_b)*P
            rows.append((sx - sy) * inv_p)                          # fx_b - fy_b  (1, C)
        df = jnp.concatenate(rows, axis=0)                          # (B, C)

        # Folded head+classifier applied to the difference: cd == cx - cy.
        cd = jnp.dot(df, wcomb_ref[...], preferred_element_type=jnp.float32)  # (B, 50)
        d = cd + 1e-6                                               # F.pairwise_distance eps
        z_ref[...] = jnp.sqrt(jnp.sum(d * d, axis=-1, keepdims=True))          # (B, 1)

    return kernel


# ------------------------------- JAX glue ---------------------------------

_KP = 32  # stem contraction dim padded 27 -> 32 for aligned lanes


def _im2col_nhwc(x, kh, kw, stride, pad):
    """x: (N, H, W, C) -> patches (N*Ho*Wo, kh*kw*C) with a single final reshape."""
    x = jnp.pad(x, ((0, 0), (pad, pad), (pad, pad), (0, 0)))
    N, H, W, C = x.shape
    Ho = (H - kh) // stride + 1
    Wo = (W - kw) // stride + 1
    cols = [x[:, i:i + Ho * stride:stride, j:j + Wo * stride:stride, :]
            for i in range(kh) for j in range(kw)]
    p = jnp.stack(cols, axis=3)                                     # (N, Ho, Wo, kh*kw, C)
    return p.reshape(N * Ho * Wo, kh * kw * C)                      # (N*P, K)


@jax.jit
def base_model_forward(x, y, prep):
    """x, y: (B, 3, H, W) NCHW -> z: (B, 1). One grid-less pallas_call for the whole forward."""
    B, _, H, W = x.shape
    Ho = (H + 2 - 3) // 2 + 1
    Wo = (W + 2 - 3) // 2 + 1
    P = Ho * Wo

    xy = jnp.concatenate([x, y], axis=0)                            # (2B, 3, H, W)
    xy = jnp.transpose(xy, (0, 2, 3, 1)).astype(jnp.bfloat16)       # NCHW -> NHWC, bf16 early

    patches = _im2col_nhwc(xy, 3, 3, 2, 1)                          # (2B*P, 27) bf16
    K = patches.shape[1]
    patches = jnp.pad(patches, ((0, 0), (0, _KP - K)))              # (2B*P, 32), zero pad

    vmem = pl.BlockSpec(memory_space=pltpu.MemorySpace.VMEM)        # whole-array VMEM residency
    return pl.pallas_call(
        _make_fused_kernel(B, P),
        out_shape=jax.ShapeDtypeStruct((B, 1), jnp.float32),
        in_specs=[vmem, vmem, vmem, vmem],
        out_specs=vmem,
    )(patches, prep["w_stem"], prep["b_stem"], prep["w_comb"])


def init_params(key):
    """Raw weights mirroring the PyTorch module layout (synthetic, deterministic)."""
    c_in, c_stem = 3, 32
    k_dim = 3 * 3 * c_in                                            # 27 (true conv-weight size)
    feat_dim, n_cls = 1000, 50
    k1, k2, k3 = jax.random.split(key, 3)
    return {
        "w_stem": jax.random.normal(k1, (k_dim, c_stem), jnp.float32) * 0.1,
        "b_stem": jnp.zeros((1, c_stem), jnp.float32),
        "w_head": jax.random.normal(k2, (c_stem, feat_dim), jnp.float32) * 0.05,
        "b_head": jnp.zeros((1, feat_dim), jnp.float32),             # cancels in cx - cy
        "w_cls": jax.random.normal(k3, (feat_dim, n_cls), jnp.float32) * 0.02,
        "b_cls": jnp.zeros((1, n_cls), jnp.float32),                 # cancels in cx - cy
    }


def prepare_params(params):
    """One-time preprocessing (outside jit): pad+cast stem weight, fold head @ classifier."""
    k_dim = params["w_stem"].shape[0]
    w_stem = jnp.pad(params["w_stem"], ((0, _KP - k_dim), (0, 0))).astype(jnp.bfloat16)
    w_comb = jnp.dot(params["w_head"], params["w_cls"],
                     preferred_element_type=jnp.float32)             # (32, 50); biases cancel
    return {
        "w_stem": w_stem,                                            # (Kp, 32) bf16
        "b_stem": params["b_stem"].astype(jnp.float32),              # (1, 32)  f32
        "w_comb": w_comb.astype(jnp.float32),                        # (32, 50) f32
    }


if __name__ == "__main__":
    key = jax.random.PRNGKey(0)
    kp, kx, ky = jax.random.split(key, 3)
    params = init_params(kp)
    prep = prepare_params(params)

    # Small NCHW image pair (batch=2, channels=3, spatial=32) like the PyTorch inputs.
    x = jax.random.normal(kx, (2, 3, 32, 32), jnp.float32)
    y = jax.random.normal(ky, (2, 3, 32, 32), jnp.float32)

    z = base_model_forward(x, y, prep)
    jax.block_until_ready(z)
    assert z.shape == (2, 1) and z.dtype == jnp.float32
    print("KERNEL_OK")
</pallas_src>

<mosaic_0001>
module attributes {stable_mosaic.version = 11 : i64} {
  func.func @kernel(%arg0: memref<1024x32xbf16, #tpu.memory_space<vmem>>, %arg1: memref<32x32xbf16, #tpu.memory_space<vmem>>, %arg2: memref<1x32xf32, #tpu.memory_space<vmem>>, %arg3: memref<32x50xf32, #tpu.memory_space<vmem>>, %arg4: memref<2x1xf32, #tpu.memory_space<vmem>>) attributes {dimension_semantics = [], scalar_prefetch = 0 : i64, scratch_operands = 0 : i64, tpu.core_type = #tpu.core_type<tc>} {
    %c0 = arith.constant 0 : index
    %c0_0 = arith.constant 0 : index
    %0 = vector.load %arg0[%c0, %c0_0] : memref<1024x32xbf16, #tpu.memory_space<vmem>>, vector<1024x32xbf16>
    %c0_1 = arith.constant 0 : index
    %c0_2 = arith.constant 0 : index
    %1 = vector.load %arg1[%c0_1, %c0_2] : memref<32x32xbf16, #tpu.memory_space<vmem>>, vector<32x32xbf16>
    %cst = arith.constant dense<0.000000e+00> : vector<1024x32xf32>
    %2 = tpu.matmul %0, %1, %cst {dimension_numbers = #tpu.dot_dimension_numbers<[1], [0], [0], [1], [0, 0, 1, 1], [], []>} : vector<1024x32xbf16>, vector<32x32xbf16>, vector<1024x32xf32> -> vector<1024x32xf32>
    %c0_3 = arith.constant 0 : index
    %c0_4 = arith.constant 0 : index
    %3 = vector.load %arg2[%c0_3, %c0_4] : memref<1x32xf32, #tpu.memory_space<vmem>>, vector<1x32xf32>
    %4 = vector.broadcast %3 : vector<1x32xf32> to vector<1024x32xf32>
    %5 = arith.addf %2, %4 : vector<1024x32xf32>
    %6 = arith.negf %5 : vector<1024x32xf32>
    %7 = math.exp %6 : vector<1024x32xf32>
    %cst_5 = arith.constant 1.000000e+00 : f32
    %8 = vector.broadcast %cst_5 : f32 to vector<1024x32xf32>
    %9 = arith.addf %8, %7 : vector<1024x32xf32>
    %10 = arith.divf %8, %9 : vector<1024x32xf32>
    %11 = arith.mulf %5, %10 : vector<1024x32xf32>
    %12 = vector.extract_strided_slice %11 {offsets = [0, 0], sizes = [256, 32], strides = [1, 1]} : vector<1024x32xf32> to vector<256x32xf32>
    %cst_6 = arith.constant dense<0.000000e+00> : vector<32xf32>
    %13 = vector.multi_reduction <add>, %12, %cst_6 [0] : vector<256x32xf32> to vector<32xf32>
    %14 = vector.shape_cast %13 : vector<32xf32> to vector<1x32xf32>
    %15 = vector.extract_strided_slice %11 {offsets = [512, 0], sizes = [256, 32], strides = [1, 1]} : vector<1024x32xf32> to vector<256x32xf32>
    %cst_7 = arith.constant dense<0.000000e+00> : vector<32xf32>
    %16 = vector.multi_reduction <add>, %15, %cst_7 [0] : vector<256x32xf32> to vector<32xf32>
    %17 = vector.shape_cast %16 : vector<32xf32> to vector<1x32xf32>
    %18 = arith.subf %14, %17 : vector<1x32xf32>
    %cst_8 = arith.constant 3.906250e-03 : f32
    %19 = vector.broadcast %cst_8 : f32 to vector<1x32xf32>
    %20 = arith.mulf %18, %19 : vector<1x32xf32>
    %21 = vector.extract_strided_slice %11 {offsets = [256, 0], sizes = [256, 32], strides = [1, 1]} : vector<1024x32xf32> to vector<256x32xf32>
    %cst_9 = arith.constant dense<0.000000e+00> : vector<32xf32>
    %22 = vector.multi_reduction <add>, %21, %cst_9 [0] : vector<256x32xf32> to vector<32xf32>
    %23 = vector.shape_cast %22 : vector<32xf32> to vector<1x32xf32>
    %24 = vector.extract_strided_slice %11 {offsets = [768, 0], sizes = [256, 32], strides = [1, 1]} : vector<1024x32xf32> to vector<256x32xf32>
    %cst_10 = arith.constant dense<0.000000e+00> : vector<32xf32>
    %25 = vector.multi_reduction <add>, %24, %cst_10 [0] : vector<256x32xf32> to vector<32xf32>
    %26 = vector.shape_cast %25 : vector<32xf32> to vector<1x32xf32>
    %27 = arith.subf %23, %26 : vector<1x32xf32>
    %cst_11 = arith.constant 3.906250e-03 : f32
    %28 = vector.broadcast %cst_11 : f32 to vector<1x32xf32>
    %29 = arith.mulf %27, %28 : vector<1x32xf32>
    %30 = tpu.concatenate %20, %29 in 0 : vector<1x32xf32>, vector<1x32xf32> -> vector<2x32xf32>
    %c0_12 = arith.constant 0 : index
    %c0_13 = arith.constant 0 : index
    %31 = vector.load %arg3[%c0_12, %c0_13] : memref<32x50xf32, #tpu.memory_space<vmem>>, vector<32x50xf32>
    %cst_14 = arith.constant dense<0.000000e+00> : vector<2x50xf32>
    %32 = tpu.matmul %30, %31, %cst_14 {dimension_numbers = #tpu.dot_dimension_numbers<[1], [0], [0], [1], [0, 0, 1, 1], [], []>} : vector<2x32xf32>, vector<32x50xf32>, vector<2x50xf32> -> vector<2x50xf32>
    %cst_15 = arith.constant 9.99999997E-7 : f32
    %33 = vector.broadcast %cst_15 : f32 to vector<2x50xf32>
    %34 = arith.addf %32, %33 : vector<2x50xf32>
    %35 = arith.mulf %34, %34 : vector<2x50xf32>
    %cst_16 = arith.constant dense<0.000000e+00> : vector<2xf32>
    %36 = vector.multi_reduction <add>, %35, %cst_16 [1] : vector<2x50xf32> to vector<2xf32>
    %37 = vector.shape_cast %36 : vector<2xf32> to vector<2x1xf32>
    %38 = math.sqrt %37 : vector<2x1xf32>
    %c0_17 = arith.constant 0 : index
    %c0_18 = arith.constant 0 : index
    %39 = vector.load %arg4[%c0_17, %c0_18] : memref<2x1xf32, #tpu.memory_space<vmem>>, vector<2x1xf32>
    tpu.vector_store %arg4[%c0_17, %c0_18], %38 {strides = array<i32>} : memref<2x1xf32, #tpu.memory_space<vmem>>, vector<2x1xf32>,
    return
  }
}

</mosaic_0001>

<llo_original>
// kernel: base_model_forward.1
$region0: #{base_model_forward.1}
  #allocation0 [shape = 'u32[]', space=smem, size = 0x4, offset = 0x4, fixed_abs, tag = 'smem constant byte address 0x4 - core index']
  #allocation1 [shape = 'u32[72,128]{1,0:T(1,128)}', space=vmem, size = 0x9000, scoped, tag = 'internal scratch']
  %s0 = inlined_call_operand.vmem [shape: bf16[1024,32], index: 0, kind: input, shape index: {}]
  %s1 = inlined_call_operand.vmem [shape: bf16[32,32], index: 1, kind: input, shape index: {}]
  %s2 = inlined_call_operand.vmem [shape: f32[1,32], index: 2, kind: input, shape index: {}]
  %s3 = inlined_call_operand.vmem [shape: f32[32,50], index: 3, kind: input, shape index: {}]
  %s4 = inlined_call_operand.vmem [shape: f32[2,1], index: 4, kind: output, shape index: {}]
  %s5 = sld [smem:[#allocation0]]
  $region26: #{base_model_forward.1} parent=0
    _
  %s7 = ssub.s32 1, %s5
  %s8 = scalar_select 0, %s7, %s5
  // Predicated region
  $region2: #{base_model_forward.1} parent=0 // pred_check
    _
  $region3: #{base_model_forward.1} parent=0 // pred_check_branch
    %10 = sbr.rel (0) target = $region5
  $region4: #{base_model_forward.1} parent=0 // pred_region
    _
  $region5: #{base_model_forward.1} parent=0 // pred_fallthru
    _
  // Predicated region
  $region6: #{base_model_forward.1} parent=0 // pred_check
    _
  $region7: #{base_model_forward.1} parent=0 // pred_check_branch
    %12 = sbr.rel (0) target = $region9
  $region8: #{base_model_forward.1} parent=0 // pred_region
    _
  $region9: #{base_model_forward.1} parent=0 // pred_fallthru
    _
  // Predicated region
  $region10: #{base_model_forward.1} parent=0 // pred_check
    _
  $region11: #{base_model_forward.1} parent=0 // pred_check_branch
    %14 = sbr.rel (0) target = $region13
  $region12: #{base_model_forward.1} parent=0 // pred_region
    _
  $region13: #{base_model_forward.1} parent=0 // pred_fallthru
    _
  // Predicated region
  $region14: #{base_model_forward.1} parent=0 // pred_check
    _
  $region15: #{base_model_forward.1} parent=0 // pred_check_branch
    %16 = sbr.rel (0) target = $region17
  $region16: #{base_model_forward.1} parent=0 // pred_region
    _
  $region17: #{base_model_forward.1} parent=0 // pred_fallthru
    _
  %v18 = vld [vmem:[%s0] sm:$0xf]
  %v19 = vld [vmem:[%s0 + $0x4] sm:$0xf]
  %v20 = vld [vmem:[%s0 + $0x8] sm:$0xf]
  %v21 = vld [vmem:[%s0 + $0xc] sm:$0xf]
  %v22 = vld [vmem:[%s0 + $0x10] sm:$0xf]
  %v23 = vld [vmem:[%s0 + $0x14] sm:$0xf]
  %v24 = vld [vmem:[%s0 + $0x18] sm:$0xf]
  %v25 = vld [vmem:[%s0 + $0x1c] sm:$0xf]
  %v26 = vld [vmem:[%s0 + $0x20] sm:$0xf]
  %v27 = vld [vmem:[%s0 + $0x24] sm:$0xf]
  %v28 = vld [vmem:[%s0 + $0x28] sm:$0xf]
  %v29 = vld [vmem:[%s0 + $0x2c] sm:$0xf]
  %v30 = vld [vmem:[%s0 + $0x30] sm:$0xf]
  %v31 = vld [vmem:[%s0 + $0x34] sm:$0xf]
  %v32 = vld [vmem:[%s0 + $0x38] sm:$0xf]
  %v33 = vld [vmem:[%s0 + $0x3c] sm:$0xf]
  %v34 = vld [vmem:[%s0 + $0x40] sm:$0xf]
  %v35 = vld [vmem:[%s0 + $0x44] sm:$0xf]
  %v36 = vld [vmem:[%s0 + $0x48] sm:$0xf]
  %v37 = vld [vmem:[%s0 + $0x4c] sm:$0xf]
  %v38 = vld [vmem:[%s0 + $0x50] sm:$0xf]
  %v39 = vld [vmem:[%s0 + $0x54] sm:$0xf]
  %v40 = vld [vmem:[%s0 + $0x58] sm:$0xf]
  %v41 = vld [vmem:[%s0 + $0x5c] sm:$0xf]
  %v42 = vld [vmem:[%s0 + $0x60] sm:$0xf]
  %v43 = vld [vmem:[%s0 + $0x64] sm:$0xf]
  %v44 = vld [vmem:[%s0 + $0x68] sm:$0xf]
  %v45 = vld [vmem:[%s0 + $0x6c] sm:$0xf]
  %v46 = vld [vmem:[%s0 + $0x70] sm:$0xf]
  %v47 = vld [vmem:[%s0 + $0x74] sm:$0xf]
  %v48 = vld [vmem:[%s0 + $0x78] sm:$0xf]
  %v49 = vld [vmem:[%s0 + $0x7c] sm:$0xf]
  %v50 = vld [vmem:[%s0 + $0x80] sm:$0xf]
  %v51 = vld [vmem:[%s0 + $0x84] sm:$0xf]
  %v52 = vld [vmem:[%s0 + $0x88] sm:$0xf]
  %v53 = vld [vmem:[%s0 + $0x8c] sm:$0xf]
  %v54 = vld [vmem:[%s0 + $0x90] sm:$0xf]
  %v55 = vld [vmem:[%s0 + $0x94] sm:$0xf]
  %v56 = vld [vmem:[%s0 + $0x98] sm:$0xf]
  %v57 = vld [vmem:[%s0 + $0x9c] sm:$0xf]
  %v58 = vld [vmem:[%s0 + $0xa0] sm:$0xf]
  %v59 = vld [vmem:[%s0 + $0xa4] sm:$0xf]
  %v60 = vld [vmem:[%s0 + $0xa8] sm:$0xf]
  %v61 = vld [vmem:[%s0 + $0xac] sm:$0xf]
  %v62 = vld [vmem:[%s0 + $0xb0] sm:$0xf]
  %v63 = vld [vmem:[%s0 + $0xb4] sm:$0xf]
  %v64 = vld [vmem:[%s0 + $0xb8] sm:$0xf]
  %v65 = vld [vmem:[%s0 + $0xbc] sm:$0xf]
  %v66 = vld [vmem:[%s0 + $0xc0] sm:$0xf]
  %v67 = vld [vmem:[%s0 + $0xc4] sm:$0xf]
  %v68 = vld [vmem:[%s0 + $0xc8] sm:$0xf]
  %v69 = vld [vmem:[%s0 + $0xcc] sm:$0xf]
  %v70 = vld [vmem:[%s0 + $0xd0] sm:$0xf]
  %v71 = vld [vmem:[%s0 + $0xd4] sm:$0xf]
  %v72 = vld [vmem:[%s0 + $0xd8] sm:$0xf]
  %v73 = vld [vmem:[%s0 + $0xdc] sm:$0xf]
  %v74 = vld [vmem:[%s0 + $0xe0] sm:$0xf]
  %v75 = vld [vmem:[%s0 + $0xe4] sm:$0xf]
  %v76 = vld [vmem:[%s0 + $0xe8] sm:$0xf]
  %v77 = vld [vmem:[%s0 + $0xec] sm:$0xf]
  %v78 = vld [vmem:[%s0 + $0xf0] sm:$0xf]
  %v79 = vld [vmem:[%s0 + $0xf4] sm:$0xf]
  %v80 = vld [vmem:[%s0 + $0xf8] sm:$0xf]
  %v81 = vld [vmem:[%s0 + $0xfc] sm:$0xf]
  %v82 = vld [vmem:[%s0 + $0x100] sm:$0xf]
  %v83 = vld [vmem:[%s0 + $0x104] sm:$0xf]
  %v84 = vld [vmem:[%s0 + $0x108] sm:$0xf]
  %v85 = vld [vmem:[%s0 + $0x10c] sm:$0xf]
  %v86 = vld [vmem:[%s0 + $0x110] sm:$0xf]
  %v87 = vld [vmem:[%s0 + $0x114] sm:$0xf]
  %v88 = vld [vmem:[%s0 + $0x118] sm:$0xf]
  %v89 = vld [vmem:[%s0 + $0x11c] sm:$0xf]
  %v90 = vld [vmem:[%s0 + $0x120] sm:$0xf]
  %v91 = vld [vmem:[%s0 + $0x124] sm:$0xf]
  %v92 = vld [vmem:[%s0 + $0x128] sm:$0xf]
  %v93 = vld [vmem:[%s0 + $0x12c] sm:$0xf]
  %v94 = vld [vmem:[%s0 + $0x130] sm:$0xf]
  %v95 = vld [vmem:[%s0 + $0x134] sm:$0xf]
  %v96 = vld [vmem:[%s0 + $0x138] sm:$0xf]
  %v97 = vld [vmem:[%s0 + $0x13c] sm:$0xf]
  %v98 = vld [vmem:[%s0 + $0x140] sm:$0xf]
  %v99 = vld [vmem:[%s0 + $0x144] sm:$0xf]
  %v100 = vld [vmem:[%s0 + $0x148] sm:$0xf]
  %v101 = vld [vmem:[%s0 + $0x14c] sm:$0xf]
  %v102 = vld [vmem:[%s0 + $0x150] sm:$0xf]
  %v103 = vld [vmem:[%s0 + $0x154] sm:$0xf]
  %v104 = vld [vmem:[%s0 + $0x158] sm:$0xf]
  %v105 = vld [vmem:[%s0 + $0x15c] sm:$0xf]
  %v106 = vld [vmem:[%s0 + $0x160] sm:$0xf]
  %v107 = vld [vmem:[%s0 + $0x164] sm:$0xf]
  %v108 = vld [vmem:[%s0 + $0x168] sm:$0xf]
  %v109 = vld [vmem:[%s0 + $0x16c] sm:$0xf]
  %v110 = vld [vmem:[%s0 + $0x170] sm:$0xf]
  %v111 = vld [vmem:[%s0 + $0x174] sm:$0xf]
  %v112 = vld [vmem:[%s0 + $0x178] sm:$0xf]
  %v113 = vld [vmem:[%s0 + $0x17c] sm:$0xf]
  %v114 = vld [vmem:[%s0 + $0x180] sm:$0xf]
  %v115 = vld [vmem:[%s0 + $0x184] sm:$0xf]
  %v116 = vld [vmem:[%s0 + $0x188] sm:$0xf]
  %v117 = vld [vmem:[%s0 + $0x18c] sm:$0xf]
  %v118 = vld [vmem:[%s0 + $0x190] sm:$0xf]
  %v119 = vld [vmem:[%s0 + $0x194] sm:$0xf]
  %v120 = vld [vmem:[%s0 + $0x198] sm:$0xf]
  %v121 = vld [vmem:[%s0 + $0x19c] sm:$0xf]
  %v122 = vld [vmem:[%s0 + $0x1a0] sm:$0xf]
  %v123 = vld [vmem:[%s0 + $0x1a4] sm:$0xf]
  %v124 = vld [vmem:[%s0 + $0x1a8] sm:$0xf]
  %v125 = vld [vmem:[%s0 + $0x1ac] sm:$0xf]
  %v126 = vld [vmem:[%s0 + $0x1b0] sm:$0xf]
  %v127 = vld [vmem:[%s0 + $0x1b4] sm:$0xf]
  %v128 = vld [vmem:[%s0 + $0x1b8] sm:$0xf]
  %v129 = vld [vmem:[%s0 + $0x1bc] sm:$0xf]
  %v130 = vld [vmem:[%s0 + $0x1c0] sm:$0xf]
  %v131 = vld [vmem:[%s0 + $0x1c4] sm:$0xf]
  %v132 = vld [vmem:[%s0 + $0x1c8] sm:$0xf]
  %v133 = vld [vmem:[%s0 + $0x1cc] sm:$0xf]
  %v134 = vld [vmem:[%s0 + $0x1d0] sm:$0xf]
  %v135 = vld [vmem:[%s0 + $0x1d4] sm:$0xf]
  %v136 = vld [vmem:[%s0 + $0x1d8] sm:$0xf]
  %v137 = vld [vmem:[%s0 + $0x1dc] sm:$0xf]
  %v138 = vld [vmem:[%s0 + $0x1e0] sm:$0xf]
  %v139 = vld [vmem:[%s0 + $0x1e4] sm:$0xf]
  %v140 = vld [vmem:[%s0 + $0x1e8] sm:$0xf]
  %v141 = vld [vmem:[%s0 + $0x1ec] sm:$0xf]
  %v142 = vld [vmem:[%s0 + $0x1f0] sm:$0xf]
  %v143 = vld [vmem:[%s0 + $0x1f4] sm:$0xf]
  %v144 = vld [vmem:[%s0 + $0x1f8] sm:$0xf]
  %v145 = vld [vmem:[%s0 + $0x1fc] sm:$0xf]
  %v146 = vld [vmem:[%s1] sm:$0xf]
  %v147 = vld [vmem:[%s1 + $0x4] sm:$0xf]
  %v148 = vld [vmem:[%s1 + $0x8] sm:$0xf]
  %v149 = vld [vmem:[%s1 + $0xc] sm:$0xf]
  %v150 = vld [vmem:[%s2] sm:$0x1]
  %v152 = vperm.slane %v150, 0
  %v282 = vunpack.c.l.b16 %v18
  %v283 = vunpack.c.l.b16 %v19
  %v284 = vunpack.c.l.b16 %v20
  %v285 = vunpack.c.l.b16 %v21
  %v286 = vunpack.c.l.b16 %v22
  %v287 = vunpack.c.l.b16 %v23
  %v288 = vunpack.c.l.b16 %v24
  %v289 = vunpack.c.l.b16 %v25
  %v290 = vunpack.c.l.b16 %v26
  %v291 = vunpack.c.l.b16 %v27
  %v292 = vunpack.c.l.b16 %v28
  %v293 = vunpack.c.l.b16 %v29
  %v294 = vunpack.c.l.b16 %v30
  %v295 = vunpack.c.l.b16 %v31
  %v296 = vunpack.c.l.b16 %v32
  %v297 = vunpack.c.l.b16 %v33
  %v298 = vunpack.c.l.b16 %v34
  %v299 = vunpack.c.l.b16 %v35
  %v300 = vunpack.c.l.b16 %v36
  %v301 = vunpack.c.l.b16 %v37
  %v302 = vunpack.c.l.b16 %v38
  %v303 = vunpack.c.l.b16 %v39
  %v304 = vunpack.c.l.b16 %v40
  %v305 = vunpack.c.l.b16 %v41
  %v306 = vunpack.c.l.b16 %v42
  %v307 = vunpack.c.l.b16 %v43
  %v308 = vunpack.c.l.b16 %v44
  %v309 = vunpack.c.l.b16 %v45
  %v310 = vunpack.c.l.b16 %v46
  %v311 = vunpack.c.l.b16 %v47
  %v312 = vunpack.c.l.b16 %v48
  %v313 = vunpack.c.l.b16 %v49
  %v314 = vunpack.c.l.b16 %v50
  %v315 = vunpack.c.l.b16 %v51
  %v316 = vunpack.c.l.b16 %v52
  %v317 = vunpack.c.l.b16 %v53
  %v318 = vunpack.c.l.b16 %v54
  %v319 = vunpack.c.l.b16 %v55
  %v320 = vunpack.c.l.b16 %v56
  %v321 = vunpack.c.l.b16 %v57
  %v322 = vunpack.c.l.b16 %v58
  %v323 = vunpack.c.l.b16 %v59
  %v324 = vunpack.c.l.b16 %v60
  %v325 = vunpack.c.l.b16 %v61
  %v326 = vunpack.c.l.b16 %v62
  %v327 = vunpack.c.l.b16 %v63
  %v328 = vunpack.c.l.b16 %v64
  %v329 = vunpack.c.l.b16 %v65
  %v330 = vunpack.c.l.b16 %v66
  %v331 = vunpack.c.l.b16 %v67
  %v332 = vunpack.c.l.b16 %v68
  %v333 = vunpack.c.l.b16 %v69
  %v334 = vunpack.c.l.b16 %v70
  %v335 = vunpack.c.l.b16 %v71
  %v336 = vunpack.c.l.b16 %v72
  %v337 = vunpack.c.l.b16 %v73
  %v338 = vunpack.c.l.b16 %v74
  %v339 = vunpack.c.l.b16 %v75
  %v340 = vunpack.c.l.b16 %v76
  %v341 = vunpack.c.l.b16 %v77
  %v342 = vunpack.c.l.b16 %v78
  %v343 = vunpack.c.l.b16 %v79
  %v344 = vunpack.c.l.b16 %v80
  %v345 = vunpack.c.l.b16 %v81
  %v346 = vunpack.c.l.b16 %v82
  %v347 = vunpack.c.l.b16 %v83
  %v348 = vunpack.c.l.b16 %v84
  %v349 = vunpack.c.l.b16 %v85
  %v350 = vunpack.c.l.b16 %v86
  %v351 = vunpack.c.l.b16 %v87
  %v352 = vunpack.c.l.b16 %v88
  %v353 = vunpack.c.l.b16 %v89
  %v354 = vunpack.c.l.b16 %v90
  %v355 = vunpack.c.l.b16 %v91
  %v356 = vunpack.c.l.b16 %v92
  %v357 = vunpack.c.l.b16 %v93
  %v358 = vunpack.c.l.b16 %v94
  %v359 = vunpack.c.l.b16 %v95
  %v360 = vunpack.c.l.b16 %v96
  %v361 = vunpack.c.l.b16 %v97
  %v362 = vunpack.c.l.b16 %v98
  %v363 = vunpack.c.l.b16 %v99
  %v364 = vunpack.c.l.b16 %v100
  %v365 = vunpack.c.l.b16 %v101
  %v366 = vunpack.c.l.b16 %v102
  %v367 = vunpack.c.l.b16 %v103
  %v368 = vunpack.c.l.b16 %v104
  %v369 = vunpack.c.l.b16 %v105
  %v370 = vunpack.c.l.b16 %v106
  %v371 = vunpack.c.l.b16 %v107
  %v372 = vunpack.c.l.b16 %v108
  %v373 = vunpack.c.l.b16 %v109
  %v374 = vunpack.c.l.b16 %v110
  %v375 = vunpack.c.l.b16 %v111
  %v376 = vunpack.c.l.b16 %v112
  %v377 = vunpack.c.l.b16 %v113
  %v378 = vunpack.c.l.b16 %v114
  %v379 = vunpack.c.l.b16 %v115
  %v380 = vunpack.c.l.b16 %v116
  %v381 = vunpack.c.l.b16 %v117
  %v382 = vunpack.c.l.b16 %v118
  %v383 = vunpack.c.l.b16 %v119
  %v384 = vunpack.c.l.b16 %v120
  %v385 = vunpack.c.l.b16 %v121
  %v386 = vunpack.c.l.b16 %v122
  %v387 = vunpack.c.l.b16 %v123
  %v388 = vunpack.c.l.b16 %v124
  %v389 = vunpack.c.l.b16 %v125
  %v390 = vunpack.c.l.b16 %v126
  %v391 = vunpack.c.l.b16 %v127
  %v392 = vunpack.c.l.b16 %v128
  %v393 = vunpack.c.l.b16 %v129
  %v394 = vunpack.c.l.b16 %v130
  %v395 = vunpack.c.l.b16 %v131
  %v396 = vunpack.c.l.b16 %v132
  %v397 = vunpack.c.l.b16 %v133
  %v398 = vunpack.c.l.b16 %v134
  %v399 = vunpack.c.l.b16 %v135
  %v400 = vunpack.c.l.b16 %v136
  %v401 = vunpack.c.l.b16 %v137
  %v402 = vunpack.c.l.b16 %v138
  %v403 = vunpack.c.l.b16 %v139
  %v404 = vunpack.c.l.b16 %v140
  %v405 = vunpack.c.l.b16 %v141
  %v406 = vunpack.c.l.b16 %v142
  %v407 = vunpack.c.l.b16 %v143
  %v408 = vunpack.c.l.b16 %v144
  %v409 = vunpack.c.l.b16 %v145
  %v410 = vpack.c.b16 %v283, %v282
  %v411 = vpack.c.b16 %v285, %v284
  %v412 = vpack.c.b16 %v287, %v286
  %v413 = vpack.c.b16 %v289, %v288
  %v414 = vpack.c.b16 %v291, %v290
  %v415 = vpack.c.b16 %v293, %v292
  %v416 = vpack.c.b16 %v295, %v294
  %v417 = vpack.c.b16 %v297, %v296
  %v418 = vpack.c.b16 %v299, %v298
  %v419 = vpack.c.b16 %v301, %v300
  %v420 = vpack.c.b16 %v303, %v302
  %v421 = vpack.c.b16 %v305, %v304
  %v422 = vpack.c.b16 %v307, %v306
  %v423 = vpack.c.b16 %v309, %v308
  %v424 = vpack.c.b16 %v311, %v310
  %v425 = vpack.c.b16 %v313, %v312
  %v426 = vpack.c.b16 %v315, %v314
  %v427 = vpack.c.b16 %v317, %v316
  %v428 = vpack.c.b16 %v319, %v318
  %v429 = vpack.c.b16 %v321, %v320
  %v430 = vpack.c.b16 %v323, %v322
  %v431 = vpack.c.b16 %v325, %v324
  %v432 = vpack.c.b16 %v327, %v326
  %v433 = vpack.c.b16 %v329, %v328
  %v434 = vpack.c.b16 %v331, %v330
  %v435 = vpack.c.b16 %v333, %v332
  %v436 = vpack.c.b16 %v335, %v334
  %v437 = vpack.c.b16 %v337, %v336
  %v438 = vpack.c.b16 %v339, %v338
  %v439 = vpack.c.b16 %v341, %v340
  %v440 = vpack.c.b16 %v343, %v342
  %v441 = vpack.c.b16 %v345, %v344
  %v442 = vpack.c.b16 %v347, %v346
  %v443 = vpack.c.b16 %v349, %v348
  %v444 = vpack.c.b16 %v351, %v350
  %v445 = vpack.c.b16 %v353, %v352
  %v446 = vpack.c.b16 %v355, %v354
  %v447 = vpack.c.b16 %v357, %v356
  %v448 = vpack.c.b16 %v359, %v358
  %v449 = vpack.c.b16 %v361, %v360
  %v450 = vpack.c.b16 %v363, %v362
  %v451 = vpack.c.b16 %v365, %v364
  %v452 = vpack.c.b16 %v367, %v366
  %v453 = vpack.c.b16 %v369, %v368
  %v454 = vpack.c.b16 %v371, %v370
  %v455 = vpack.c.b16 %v373, %v372
  %v456 = vpack.c.b16 %v375, %v374
  %v457 = vpack.c.b16 %v377, %v376
  %v458 = vpack.c.b16 %v379, %v378
  %v459 = vpack.c.b16 %v381, %v380
  %v460 = vpack.c.b16 %v383, %v382
  %v461 = vpack.c.b16 %v385, %v384
  %v462 = vpack.c.b16 %v387, %v386
  %v463 = vpack.c.b16 %v389, %v388
  %v464 = vpack.c.b16 %v391, %v390
  %v465 = vpack.c.b16 %v393, %v392
  %v466 = vpack.c.b16 %v395, %v394
  %v467 = vpack.c.b16 %v397, %v396
  %v468 = vpack.c.b16 %v399, %v398
  %v469 = vpack.c.b16 %v401, %v400
  %v470 = vpack.c.b16 %v403, %v402
  %v471 = vpack.c.b16 %v405, %v404
  %v472 = vpack.c.b16 %v407, %v406
  %v473 = vpack.c.b16 %v409, %v408
  %v478 = vunpack.c.l.b16 %v146
  %v479 = vunpack.c.l.b16 %v147
  %v480 = vunpack.c.l.b16 %v148
  %v481 = vunpack.c.l.b16 %v149
  %v482 = vpack.c.b16 %v479, %v478
  %v483 = vpack.c.b16 %v481, %v480
  %vm486 = vcmask 261120
  %v488 = vsel %vm486, %v410, 0
  %v491 = vsel %vm486, %v411, 0
  %v494 = vsel %vm486, %v412, 0
  %v497 = vsel %vm486, %v413, 0
  %v500 = vsel %vm486, %v414, 0
  %v503 = vsel %vm486, %v415, 0
  %v506 = vsel %vm486, %v416, 0
  %v509 = vsel %vm486, %v417, 0
  %v512 = vsel %vm486, %v418, 0
  %v515 = vsel %vm486, %v419, 0
  %v518 = vsel %vm486, %v420, 0
  %v521 = vsel %vm486, %v421, 0
  %v524 = vsel %vm486, %v422, 0
  %v527 = vsel %vm486, %v423, 0
  %v530 = vsel %vm486, %v424, 0
  %v533 = vsel %vm486, %v425, 0
  %v536 = vsel %vm486, %v426, 0
  %v539 = vsel %vm486, %v427, 0
  %v542 = vsel %vm486, %v428, 0
  %v545 = vsel %vm486, %v429, 0
  %v548 = vsel %vm486, %v430, 0
  %v551 = vsel %vm486, %v431, 0
  %v554 = vsel %vm486, %v432, 0
  %v557 = vsel %vm486, %v433, 0
  %v560 = vsel %vm486, %v434, 0
  %v563 = vsel %vm486, %v435, 0
  %v566 = vsel %vm486, %v436, 0
  %v569 = vsel %vm486, %v437, 0
  %v572 = vsel %vm486, %v438, 0
  %v575 = vsel %vm486, %v439, 0
  %v578 = vsel %vm486, %v440, 0
  %v581 = vsel %vm486, %v441, 0
  %v584 = vsel %vm486, %v442, 0
  %v587 = vsel %vm486, %v443, 0
  %v590 = vsel %vm486, %v444, 0
  %v593 = vsel %vm486, %v445, 0
  %v596 = vsel %vm486, %v446, 0
  %v599 = vsel %vm486, %v447, 0
  %v602 = vsel %vm486, %v448, 0
  %v605 = vsel %vm486, %v449, 0
  %v608 = vsel %vm486, %v450, 0
  %v611 = vsel %vm486, %v451, 0
  %v614 = vsel %vm486, %v452, 0
  %v617 = vsel %vm486, %v453, 0
  %v620 = vsel %vm486, %v454, 0
  %v623 = vsel %vm486, %v455, 0
  %v626 = vsel %vm486, %v456, 0
  %v629 = vsel %vm486, %v457, 0
  %v632 = vsel %vm486, %v458, 0
  %v635 = vsel %vm486, %v459, 0
  %v638 = vsel %vm486, %v460, 0
  %v641 = vsel %vm486, %v461, 0
  %v644 = vsel %vm486, %v462, 0
  %v647 = vsel %vm486, %v463, 0
  %v650 = vsel %vm486, %v464, 0
  %v653 = vsel %vm486, %v465, 0
  %v656 = vsel %vm486, %v466, 0
  %v659 = vsel %vm486, %v467, 0
  %v662 = vsel %vm486, %v468, 0
  %v665 = vsel %vm486, %v469, 0
  %v668 = vsel %vm486, %v470, 0
  %v671 = vsel %vm486, %v471, 0
  %v674 = vsel %vm486, %v472, 0
  %v677 = vsel %vm486, %v473, 0
  %679 = vmatpush.bf16.msra.mxu0 0
  %680 = vmatpush.bf16.msra.mxu0 0
  %681 = vmatpush.bf16.msra.mxu0 0
  %682 = vmatpush.bf16.msra.mxu0 0
  %683 = vmatpush.bf16.msra.mxu0 0
  %684 = vmatpush.bf16.msra.mxu0 0
  %685 = vmatpush.bf16.msra.mxu0 %v483
  %686 = vmatpush.bf16.msra.mxu0 %v482
  %687 = vmatmul.bf16.gmra.mxu0 %v488
  %v688 = vpop.f32.mrf.mxu0
  %v689 = vadd.f32 %v152, %v688
  %v690 = vpop.f32.mrf.mxu0
  %v691 = vadd.f32 %v152, %v690
  %692 = vmatmul.bf16.gmra.mxu0 %v491
  %v693 = vpop.f32.mrf.mxu0
  %v694 = vadd.f32 %v152, %v693
  %v695 = vpop.f32.mrf.mxu0
  %v696 = vadd.f32 %v152, %v695
  %697 = vmatmul.bf16.gmra.mxu0 %v494
  %v698 = vpop.f32.mrf.mxu0
  %v699 = vadd.f32 %v152, %v698
  %v700 = vpop.f32.mrf.mxu0
  %v701 = vadd.f32 %v152, %v700
  %702 = vmatmul.bf16.gmra.mxu0 %v497
  %v703 = vpop.f32.mrf.mxu0
  %v704 = vadd.f32 %v152, %v703
  %v705 = vpop.f32.mrf.mxu0
  %v706 = vadd.f32 %v152, %v705
  %707 = vmatmul.bf16.gmra.mxu0 %v500
  %v708 = vpop.f32.mrf.mxu0
  %v709 = vadd.f32 %v152, %v708
  %v710 = vpop.f32.mrf.mxu0
  %v711 = vadd.f32 %v152, %v710
  %712 = vmatmul.bf16.gmra.mxu0 %v503
  %v713 = vpop.f32.mrf.mxu0
  %v714 = vadd.f32 %v152, %v713
  %v715 = vpop.f32.mrf.mxu0
  %v716 = vadd.f32 %v152, %v715
  %717 = vmatmul.bf16.gmra.mxu0 %v506
  %v718 = vpop.f32.mrf.mxu0
  %v719 = vadd.f32 %v152, %v718
  %v720 = vpop.f32.mrf.mxu0
  %v721 = vadd.f32 %v152, %v720
  %722 = vmatmul.bf16.gmra.mxu0 %v509
  %v723 = vpop.f32.mrf.mxu0
  %v724 = vadd.f32 %v152, %v723
  %v725 = vpop.f32.mrf.mxu0
  %v726 = vadd.f32 %v152, %v725
  %727 = vmatmul.bf16.gmra.mxu0 %v512
  %v728 = vpop.f32.mrf.mxu0
  %v729 = vadd.f32 %v152, %v728
  %v730 = vpop.f32.mrf.mxu0
  %v731 = vadd.f32 %v152, %v730
  %732 = vmatmul.bf16.gmra.mxu0 %v515
  %v733 = vpop.f32.mrf.mxu0
  %v734 = vadd.f32 %v152, %v733
  %v735 = vpop.f32.mrf.mxu0
  %v736 = vadd.f32 %v152, %v735
  %737 = vmatmul.bf16.gmra.mxu0 %v518
  %v738 = vpop.f32.mrf.mxu0
  %v739 = vadd.f32 %v152, %v738
  %v740 = vpop.f32.mrf.mxu0
  %v741 = vadd.f32 %v152, %v740
  %742 = vmatmul.bf16.gmra.mxu0 %v521
  %v743 = vpop.f32.mrf.mxu0
  %v744 = vadd.f32 %v152, %v743
  %v745 = vpop.f32.mrf.mxu0
  %v746 = vadd.f32 %v152, %v745
  %747 = vmatmul.bf16.gmra.mxu0 %v524
  %v748 = vpop.f32.mrf.mxu0
  %v749 = vadd.f32 %v152, %v748
  %v750 = vpop.f32.mrf.mxu0
  %v751 = vadd.f32 %v152, %v750
  %752 = vmatmul.bf16.gmra.mxu0 %v527
  %v753 = vpop.f32.mrf.mxu0
  %v754 = vadd.f32 %v152, %v753
  %v755 = vpop.f32.mrf.mxu0
  %v756 = vadd.f32 %v152, %v755
  %757 = vmatmul.bf16.gmra.mxu0 %v530
  %v758 = vpop.f32.mrf.mxu0
  %v759 = vadd.f32 %v152, %v758
  %v760 = vpop.f32.mrf.mxu0
  %v761 = vadd.f32 %v152, %v760
  %762 = vmatmul.bf16.gmra.mxu0 %v533
  %v763 = vpop.f32.mrf.mxu0
  %v764 = vadd.f32 %v152, %v763
  %v765 = vpop.f32.mrf.mxu0
  %v766 = vadd.f32 %v152, %v765
  %767 = vmatmul.bf16.gmra.mxu0 %v536
  %v768 = vpop.f32.mrf.mxu0
  %v769 = vadd.f32 %v152, %v768
  %v770 = vpop.f32.mrf.mxu0
  %v771 = vadd.f32 %v152, %v770
  %772 = vmatmul.bf16.gmra.mxu0 %v539
  %v773 = vpop.f32.mrf.mxu0
  %v774 = vadd.f32 %v152, %v773
  %v775 = vpop.f32.mrf.mxu0
  %v776 = vadd.f32 %v152, %v775
  %777 = vmatmul.bf16.gmra.mxu0 %v542
  %v778 = vpop.f32.mrf.mxu0
  %v779 = vadd.f32 %v152, %v778
  %v780 = vpop.f32.mrf.mxu0
  %v781 = vadd.f32 %v152, %v780
  %782 = vmatmul.bf16.gmra.mxu0 %v545
  %v783 = vpop.f32.mrf.mxu0
  %v784 = vadd.f32 %v152, %v783
  %v785 = vpop.f32.mrf.mxu0
  %v786 = vadd.f32 %v152, %v785
  %787 = vmatmul.bf16.gmra.mxu0 %v548
  %v788 = vpop.f32.mrf.mxu0
  %v789 = vadd.f32 %v152, %v788
  %v790 = vpop.f32.mrf.mxu0
  %v791 = vadd.f32 %v152, %v790
  %792 = vmatmul.bf16.gmra.mxu0 %v551
  %v793 = vpop.f32.mrf.mxu0
  %v794 = vadd.f32 %v152, %v793
  %v795 = vpop.f32.mrf.mxu0
  %v796 = vadd.f32 %v152, %v795
  %797 = vmatmul.bf16.gmra.mxu0 %v554
  %v798 = vpop.f32.mrf.mxu0
  %v799 = vadd.f32 %v152, %v798
  %v800 = vpop.f32.mrf.mxu0
  %v801 = vadd.f32 %v152, %v800
  %802 = vmatmul.bf16.gmra.mxu0 %v557
  %v803 = vpop.f32.mrf.mxu0
  %v804 = vadd.f32 %v152, %v803
  %v805 = vpop.f32.mrf.mxu0
  %v806 = vadd.f32 %v152, %v805
  %807 = vmatmul.bf16.gmra.mxu0 %v560
  %v808 = vpop.f32.mrf.mxu0
  %v809 = vadd.f32 %v152, %v808
  %v810 = vpop.f32.mrf.mxu0
  %v811 = vadd.f32 %v152, %v810
  %812 = vmatmul.bf16.gmra.mxu0 %v563
  %v813 = vpop.f32.mrf.mxu0
  %v814 = vadd.f32 %v152, %v813
  %v815 = vpop.f32.mrf.mxu0
  %v816 = vadd.f32 %v152, %v815
  %817 = vmatmul.bf16.gmra.mxu0 %v566
  %v818 = vpop.f32.mrf.mxu0
  %v819 = vadd.f32 %v152, %v818
  %v820 = vpop.f32.mrf.mxu0
  %v821 = vadd.f32 %v152, %v820
  %822 = vmatmul.bf16.gmra.mxu0 %v569
  %v823 = vpop.f32.mrf.mxu0
  %v824 = vadd.f32 %v152, %v823
  %v825 = vpop.f32.mrf.mxu0
  %v826 = vadd.f32 %v152, %v825
  %827 = vmatmul.bf16.gmra.mxu0 %v572
  %v828 = vpop.f32.mrf.mxu0
  %v829 = vadd.f32 %v152, %v828
  %v830 = vpop.f32.mrf.mxu0
  %v831 = vadd.f32 %v152, %v830
  %832 = vmatmul.bf16.gmra.mxu0 %v575
  %v833 = vpop.f32.mrf.mxu0
  %v834 = vadd.f32 %v152, %v833
  %v835 = vpop.f32.mrf.mxu0
  %v836 = vadd.f32 %v152, %v835
  %837 = vmatmul.bf16.gmra.mxu0 %v578
  %v838 = vpop.f32.mrf.mxu0
  %v839 = vadd.f32 %v152, %v838
  %v840 = vpop.f32.mrf.mxu0
  %v841 = vadd.f32 %v152, %v840
  %842 = vmatmul.bf16.gmra.mxu0 %v581
  %v843 = vpop.f32.mrf.mxu0
  %v844 = vadd.f32 %v152, %v843
  %v845 = vpop.f32.mrf.mxu0
  %v846 = vadd.f32 %v152, %v845
  %847 = vmatmul.bf16.gmra.mxu0 %v584
  %v848 = vpop.f32.mrf.mxu0
  %v849 = vadd.f32 %v152, %v848
  %v850 = vpop.f32.mrf.mxu0
  %v851 = vadd.f32 %v152, %v850
  %852 = vmatmul.bf16.gmra.mxu0 %v587
  %v853 = vpop.f32.mrf.mxu0
  %v854 = vadd.f32 %v152, %v853
  %v855 = vpop.f32.mrf.mxu0
  %v856 = vadd.f32 %v152, %v855
  %857 = vmatmul.bf16.gmra.mxu0 %v590
  %v858 = vpop.f32.mrf.mxu0
  %v859 = vadd.f32 %v152, %v858
  %v860 = vpop.f32.mrf.mxu0
  %v861 = vadd.f32 %v152, %v860
  %862 = vmatmul.bf16.gmra.mxu0 %v593
  %v863 = vpop.f32.mrf.mxu0
  %v864 = vadd.f32 %v152, %v863
  %v865 = vpop.f32.mrf.mxu0
  %v866 = vadd.f32 %v152, %v865
  %867 = vmatmul.bf16.gmra.mxu0 %v596
  %v868 = vpop.f32.mrf.mxu0
  %v869 = vadd.f32 %v152, %v868
  %v870 = vpop.f32.mrf.mxu0
  %v871 = vadd.f32 %v152, %v870
  %872 = vmatmul.bf16.gmra.mxu0 %v599
  %v873 = vpop.f32.mrf.mxu0
  %v874 = vadd.f32 %v152, %v873
  %v875 = vpop.f32.mrf.mxu0
  %v876 = vadd.f32 %v152, %v875
  %877 = vmatmul.bf16.gmra.mxu0 %v602
  %v878 = vpop.f32.mrf.mxu0
  %v879 = vadd.f32 %v152, %v878
  %v880 = vpop.f32.mrf.mxu0
  %v881 = vadd.f32 %v152, %v880
  %882 = vmatmul.bf16.gmra.mxu0 %v605
  %v883 = vpop.f32.mrf.mxu0
  %v884 = vadd.f32 %v152, %v883
  %v885 = vpop.f32.mrf.mxu0
  %v886 = vadd.f32 %v152, %v885
  %887 = vmatmul.bf16.gmra.mxu0 %v608
  %v888 = vpop.f32.mrf.mxu0
  %v889 = vadd.f32 %v152, %v888
  %v890 = vpop.f32.mrf.mxu0
  %v891 = vadd.f32 %v152, %v890
  %892 = vmatmul.bf16.gmra.mxu0 %v611
  %v893 = vpop.f32.mrf.mxu0
  %v894 = vadd.f32 %v152, %v893
  %v895 = vpop.f32.mrf.mxu0
  %v896 = vadd.f32 %v152, %v895
  %897 = vmatmul.bf16.gmra.mxu0 %v614
  %v898 = vpop.f32.mrf.mxu0
  %v899 = vadd.f32 %v152, %v898
  %v900 = vpop.f32.mrf.mxu0
  %v901 = vadd.f32 %v152, %v900
  %902 = vmatmul.bf16.gmra.mxu0 %v617
  %v903 = vpop.f32.mrf.mxu0
  %v904 = vadd.f32 %v152, %v903
  %v905 = vpop.f32.mrf.mxu0
  %v906 = vadd.f32 %v152, %v905
  %907 = vmatmul.bf16.gmra.mxu0 %v620
  %v908 = vpop.f32.mrf.mxu0
  %v909 = vadd.f32 %v152, %v908
  %v910 = vpop.f32.mrf.mxu0
  %v911 = vadd.f32 %v152, %v910
  %912 = vmatmul.bf16.gmra.mxu0 %v623
  %v913 = vpop.f32.mrf.mxu0
  %v914 = vadd.f32 %v152, %v913
  %v915 = vpop.f32.mrf.mxu0
  %v916 = vadd.f32 %v152, %v915
  %917 = vmatmul.bf16.gmra.mxu0 %v626
  %v918 = vpop.f32.mrf.mxu0
  %v919 = vadd.f32 %v152, %v918
  %v920 = vpop.f32.mrf.mxu0
  %v921 = vadd.f32 %v152, %v920
  %922 = vmatmul.bf16.gmra.mxu0 %v629
  %v923 = vpop.f32.mrf.mxu0
  %v924 = vadd.f32 %v152, %v923
  %v925 = vpop.f32.mrf.mxu0
  %v926 = vadd.f32 %v152, %v925
  %927 = vmatmul.bf16.gmra.mxu0 %v632
  %v928 = vpop.f32.mrf.mxu0
  %v929 = vadd.f32 %v152, %v928
  %v930 = vpop.f32.mrf.mxu0
  %v931 = vadd.f32 %v152, %v930
  %932 = vmatmul.bf16.gmra.mxu0 %v635
  %v933 = vpop.f32.mrf.mxu0
  %v934 = vadd.f32 %v152, %v933
  %v935 = vpop.f32.mrf.mxu0
  %v936 = vadd.f32 %v152, %v935
  %937 = vmatmul.bf16.gmra.mxu0 %v638
  %v938 = vpop.f32.mrf.mxu0
  %v939 = vadd.f32 %v152, %v938
  %v940 = vpop.f32.mrf.mxu0
  %v941 = vadd.f32 %v152, %v940
  %942 = vmatmul.bf16.gmra.mxu0 %v641
  %v943 = vpop.f32.mrf.mxu0
  %v944 = vadd.f32 %v152, %v943
  %v945 = vpop.f32.mrf.mxu0
  %v946 = vadd.f32 %v152, %v945
  %947 = vmatmul.bf16.gmra.mxu0 %v644
  %v948 = vpop.f32.mrf.mxu0
  %v949 = vadd.f32 %v152, %v948
  %v950 = vpop.f32.mrf.mxu0
  %v951 = vadd.f32 %v152, %v950
  %952 = vmatmul.bf16.gmra.mxu0 %v647
  %v953 = vpop.f32.mrf.mxu0
  %v954 = vadd.f32 %v152, %v953
  %v955 = vpop.f32.mrf.mxu0
  %v956 = vadd.f32 %v152, %v955
  %957 = vmatmul.bf16.gmra.mxu0 %v650
  %v958 = vpop.f32.mrf.mxu0
  %v959 = vadd.f32 %v152, %v958
  %v960 = vpop.f32.mrf.mxu0
  %v961 = vadd.f32 %v152, %v960
  %962 = vmatmul.bf16.gmra.mxu0 %v653
  %v963 = vpop.f32.mrf.mxu0
  %v964 = vadd.f32 %v152, %v963
  %v965 = vpop.f32.mrf.mxu0
  %v966 = vadd.f32 %v152, %v965
  %967 = vmatmul.bf16.gmra.mxu0 %v656
  %v968 = vpop.f32.mrf.mxu0
  %v969 = vadd.f32 %v152, %v968
  %v970 = vpop.f32.mrf.mxu0
  %v971 = vadd.f32 %v152, %v970
  %972 = vmatmul.bf16.gmra.mxu0 %v659
  %v973 = vpop.f32.mrf.mxu0
  %v974 = vadd.f32 %v152, %v973
  %v975 = vpop.f32.mrf.mxu0
  %v976 = vadd.f32 %v152, %v975
  %977 = vmatmul.bf16.gmra.mxu0 %v662
  %v978 = vpop.f32.mrf.mxu0
  %v979 = vadd.f32 %v152, %v978
  %v980 = vpop.f32.mrf.mxu0
  %v981 = vadd.f32 %v152, %v980
  %982 = vmatmul.bf16.gmra.mxu0 %v665
  %v983 = vpop.f32.mrf.mxu0
  %v984 = vadd.f32 %v152, %v983
  %v985 = vpop.f32.mrf.mxu0
  %v986 = vadd.f32 %v152, %v985
  %987 = vmatmul.bf16.gmra.mxu0 %v668
  %v988 = vpop.f32.mrf.mxu0
  %v989 = vadd.f32 %v152, %v988
  %v990 = vpop.f32.mrf.mxu0
  %v991 = vadd.f32 %v152, %v990
  %992 = vmatmul.bf16.gmra.mxu0 %v671
  %v993 = vpop.f32.mrf.mxu0
  %v994 = vadd.f32 %v152, %v993
  %v995 = vpop.f32.mrf.mxu0
  %v996 = vadd.f32 %v152, %v995
  %997 = vmatmul.bf16.gmra.mxu0 %v674
  %v998 = vpop.f32.mrf.mxu0
  %v999 = vadd.f32 %v152, %v998
  %v1000 = vpop.f32.mrf.mxu0
  %v1001 = vadd.f32 %v152, %v1000
  %1002 = vmatmul.bf16.gmra.mxu0 %v677
  %v1003 = vpop.f32.mrf.mxu0
  %v1004 = vadd.f32 %v152, %v1003
  %v1005 = vpop.f32.mrf.mxu0
  %v1006 = vadd.f32 %v152, %v1005
  %1007 = vdwg.mxu0
  %v1008 = vxor.u32 %v689, 2147483648
  %v1009 = vxor.u32 %v691, 2147483648
  %v1010 = vxor.u32 %v694, 2147483648
  %v1011 = vxor.u32 %v696, 2147483648
  %v1012 = vxor.u32 %v699, 2147483648
  %v1013 = vxor.u32 %v701, 2147483648
  %v1014 = vxor.u32 %v704, 2147483648
  %v1015 = vxor.u32 %v706, 2147483648
  %v1016 = vxor.u32 %v709, 2147483648
  %v1017 = vxor.u32 %v711, 2147483648
  %v1018 = vxor.u32 %v714, 2147483648
  %v1019 = vxor.u32 %v716, 2147483648
  %v1020 = vxor.u32 %v719, 2147483648
  %v1021 = vxor.u32 %v721, 2147483648
  %v1022 = vxor.u32 %v724, 2147483648
  %v1023 = vxor.u32 %v726, 2147483648
  %v1024 = vxor.u32 %v729, 2147483648
  %v1025 = vxor.u32 %v731, 2147483648
  %v1026 = vxor.u32 %v734, 2147483648
  %v1027 = vxor.u32 %v736, 2147483648
  %v1028 = vxor.u32 %v739, 2147483648
  %v1029 = vxor.u32 %v741, 2147483648
  %v1030 = vxor.u32 %v744, 2147483648
  %v1031 = vxor.u32 %v746, 2147483648
  %v1032 = vxor.u32 %v749, 2147483648
  %v1033 = vxor.u32 %v751, 2147483648
  %v1034 = vxor.u32 %v754, 2147483648
  %v1035 = vxor.u32 %v756, 2147483648
  %v1036 = vxor.u32 %v759, 2147483648
  %v1037 = vxor.u32 %v761, 2147483648
  %v1038 = vxor.u32 %v764, 2147483648
  %v1039 = vxor.u32 %v766, 2147483648
  %v1040 = vxor.u32 %v769, 2147483648
  %v1041 = vxor.u32 %v771, 2147483648
  %v1042 = vxor.u32 %v774, 2147483648
  %v1043 = vxor.u32 %v776, 2147483648
  %v1044 = vxor.u32 %v779, 2147483648
  %v1045 = vxor.u32 %v781, 2147483648
  %v1046 = vxor.u32 %v784, 2147483648
  %v1047 = vxor.u32 %v786, 2147483648
  %v1048 = vxor.u32 %v789, 2147483648
  %v1049 = vxor.u32 %v791, 2147483648
  %v1050 = vxor.u32 %v794, 2147483648
  %v1051 = vxor.u32 %v796, 2147483648
  %v1052 = vxor.u32 %v799, 2147483648
  %v1053 = vxor.u32 %v801, 2147483648
  %v1054 = vxor.u32 %v804, 2147483648
  %v1055 = vxor.u32 %v806, 2147483648
  %v1056 = vxor.u32 %v809, 2147483648
  %v1057 = vxor.u32 %v811, 2147483648
  %v1058 = vxor.u32 %v814, 2147483648
  %v1059 = vxor.u32 %v816, 2147483648
  %v1060 = vxor.u32 %v819, 2147483648
  %v1061 = vxor.u32 %v821, 2147483648
  %v1062 = vxor.u32 %v824, 2147483648
  %v1063 = vxor.u32 %v826, 2147483648
  %v1064 = vxor.u32 %v829, 2147483648
  %v1065 = vxor.u32 %v831, 2147483648
  %v1066 = vxor.u32 %v834, 2147483648
  %v1067 = vxor.u32 %v836, 2147483648
  %v1068 = vxor.u32 %v839, 2147483648
  %v1069 = vxor.u32 %v841, 2147483648
  %v1070 = vxor.u32 %v844, 2147483648
  %v1071 = vxor.u32 %v846, 2147483648
  %v1072 = vxor.u32 %v849, 2147483648
  %v1073 = vxor.u32 %v851, 2147483648
  %v1074 = vxor.u32 %v854, 2147483648
  %v1075 = vxor.u32 %v856, 2147483648
  %v1076 = vxor.u32 %v859, 2147483648
  %v1077 = vxor.u32 %v861, 2147483648
  %v1078 = vxor.u32 %v864, 2147483648
  %v1079 = vxor.u32 %v866, 2147483648
  %v1080 = vxor.u32 %v869, 2147483648
  %v1081 = vxor.u32 %v871, 2147483648
  %v1082 = vxor.u32 %v874, 2147483648
  %v1083 = vxor.u32 %v876, 2147483648
  %v1084 = vxor.u32 %v879, 2147483648
  %v1085 = vxor.u32 %v881, 2147483648
  %v1086 = vxor.u32 %v884, 2147483648
  %v1087 = vxor.u32 %v886, 2147483648
  %v1088 = vxor.u32 %v889, 2147483648
  %v1089 = vxor.u32 %v891, 2147483648
  %v1090 = vxor.u32 %v894, 2147483648
  %v1091 = vxor.u32 %v896, 2147483648
  %v1092 = vxor.u32 %v899, 2147483648
  %v1093 = vxor.u32 %v901, 2147483648
  %v1094 = vxor.u32 %v904, 2147483648
  %v1095 = vxor.u32 %v906, 2147483648
  %v1096 = vxor.u32 %v909, 2147483648
  %v1097 = vxor.u32 %v911, 2147483648
  %v1098 = vxor.u32 %v914, 2147483648
  %v1099 = vxor.u32 %v916, 2147483648
  %v1100 = vxor.u32 %v919, 2147483648
  %v1101 = vxor.u32 %v921, 2147483648
  %v1102 = vxor.u32 %v924, 2147483648
  %v1103 = vxor.u32 %v926, 2147483648
  %v1104 = vxor.u32 %v929, 2147483648
  %v1105 = vxor.u32 %v931, 2147483648
  %v1106 = vxor.u32 %v934, 2147483648
  %v1107 = vxor.u32 %v936, 2147483648
  %v1108 = vxor.u32 %v939, 2147483648
  %v1109 = vxor.u32 %v941, 2147483648
  %v1110 = vxor.u32 %v944, 2147483648
  %v1111 = vxor.u32 %v946, 2147483648
  %v1112 = vxor.u32 %v949, 2147483648
  %v1113 = vxor.u32 %v951, 2147483648
  %v1114 = vxor.u32 %v954, 2147483648
  %v1115 = vxor.u32 %v956, 2147483648
  %v1116 = vxor.u32 %v959, 2147483648
  %v1117 = vxor.u32 %v961, 2147483648
  %v1118 = vxor.u32 %v964, 2147483648
  %v1119 = vxor.u32 %v966, 2147483648
  %v1120 = vxor.u32 %v969, 2147483648
  %v1121 = vxor.u32 %v971, 2147483648
  %v1122 = vxor.u32 %v974, 2147483648
  %v1123 = vxor.u32 %v976, 2147483648
  %v1124 = vxor.u32 %v979, 2147483648
  %v1125 = vxor.u32 %v981, 2147483648
  %v1126 = vxor.u32 %v984, 2147483648
  %v1127 = vxor.u32 %v986, 2147483648
  %v1128 = vxor.u32 %v989, 2147483648
  %v1129 = vxor.u32 %v991, 2147483648
  %v1130 = vxor.u32 %v994, 2147483648
  %v1131 = vxor.u32 %v996, 2147483648
  %v1132 = vxor.u32 %v999, 2147483648
  %v1133 = vxor.u32 %v1001, 2147483648
  %v1134 = vxor.u32 %v1004, 2147483648
  %v1135 = vxor.u32 %v1006, 2147483648
  %v1136 = vmul.f32 %v1008, 1.442695
  %v1137 = vpow.pop %v1136
  %v1138 = vmul.f32 %v1009, 1.442695
  %v1139 = vpow.pop %v1138
  %v1140 = vmul.f32 %v1010, 1.442695
  %v1141 = vpow.pop %v1140
  %v1142 = vmul.f32 %v1011, 1.442695
  %v1143 = vpow.pop %v1142
  %v1144 = vmul.f32 %v1012, 1.442695
  %v1145 = vpow.pop %v1144
  %v1146 = vmul.f32 %v1013, 1.442695
  %v1147 = vpow.pop %v1146
  %v1148 = vmul.f32 %v1014, 1.442695
  %v1149 = vpow.pop %v1148
  %v1150 = vmul.f32 %v1015, 1.442695
  %v1151 = vpow.pop %v1150
  %v1152 = vmul.f32 %v1016, 1.442695
  %v1153 = vpow.pop %v1152
  %v1154 = vmul.f32 %v1017, 1.442695
  %v1155 = vpow.pop %v1154
  %v1156 = vmul.f32 %v1018, 1.442695
  %v1157 = vpow.pop %v1156
  %v1158 = vmul.f32 %v1019, 1.442695
  %v1159 = vpow.pop %v1158
  %v1160 = vmul.f32 %v1020, 1.442695
  %v1161 = vpow.pop %v1160
  %v1162 = vmul.f32 %v1021, 1.442695
  %v1163 = vpow.pop %v1162
  %v1164 = vmul.f32 %v1022, 1.442695
  %v1165 = vpow.pop %v1164
  %v1166 = vmul.f32 %v1023, 1.442695
  %v1167 = vpow.pop %v1166
  %v1168 = vmul.f32 %v1024, 1.442695
  %v1169 = vpow.pop %v1168
  %v1170 = vmul.f32 %v1025, 1.442695
  %v1171 = vpow.pop %v1170
  %v1172 = vmul.f32 %v1026, 1.442695
  %v1173 = vpow.pop %v1172
  %v1174 = vmul.f32 %v1027, 1.442695
  %v1175 = vpow.pop %v1174
  %v1176 = vmul.f32 %v1028, 1.442695
  %v1177 = vpow.pop %v1176
  %v1178 = vmul.f32 %v1029, 1.442695
  %v1179 = vpow.pop %v1178
  %v1180 = vmul.f32 %v1030, 1.442695
  %v1181 = vpow.pop %v1180
  %v1182 = vmul.f32 %v1031, 1.442695
  %v1183 = vpow.pop %v1182
  %v1184 = vmul.f32 %v1032, 1.442695
  %v1185 = vpow.pop %v1184
  %v1186 = vmul.f32 %v1033, 1.442695
  %v1187 = vpow.pop %v1186
  %v1188 = vmul.f32 %v1034, 1.442695
  %v1189 = vpow.pop %v1188
  %v1190 = vmul.f32 %v1035, 1.442695
  %v1191 = vpow.pop %v1190
  %v1192 = vmul.f32 %v1036, 1.442695
  %v1193 = vpow.pop %v1192
  %v1194 = vmul.f32 %v1037, 1.442695
  %v1195 = vpow.pop %v1194
  %v1196 = vmul.f32 %v1038, 1.442695
  %v1197 = vpow.pop %v1196
  %v1198 = vmul.f32 %v1039, 1.442695
  %v1199 = vpow.pop %v1198
  %v1200 = vmul.f32 %v1040, 1.442695
  %v1201 = vpow.pop %v1200
  %v1202 = vmul.f32 %v1041, 1.442695
  %v1203 = vpow.pop %v1202
  %v1204 = vmul.f32 %v1042, 1.442695
  %v1205 = vpow.pop %v1204
  %v1206 = vmul.f32 %v1043, 1.442695
  %v1207 = vpow.pop %v1206
  %v1208 = vmul.f32 %v1044, 1.442695
  %v1209 = vpow.pop %v1208
  %v1210 = vmul.f32 %v1045, 1.442695
  %v1211 = vpow.pop %v1210
  %v1212 = vmul.f32 %v1046, 1.442695
  %v1213 = vpow.pop %v1212
  %v1214 = vmul.f32 %v1047, 1.442695
  %v1215 = vpow.pop %v1214
  %v1216 = vmul.f32 %v1048, 1.442695
  %v1217 = vpow.pop %v1216
  %v1218 = vmul.f32 %v1049, 1.442695
  %v1219 = vpow.pop %v1218
  %v1220 = vmul.f32 %v1050, 1.442695
  %v1221 = vpow.pop %v1220
  %v1222 = vmul.f32 %v1051, 1.442695
  %v1223 = vpow.pop %v1222
  %v1224 = vmul.f32 %v1052, 1.442695
  %v1225 = vpow.pop %v1224
  %v1226 = vmul.f32 %v1053, 1.442695
  %v1227 = vpow.pop %v1226
  %v1228 = vmul.f32 %v1054, 1.442695
  %v1229 = vpow.pop %v1228
  %v1230 = vmul.f32 %v1055, 1.442695
  %v1231 = vpow.pop %v1230
  %v1232 = vmul.f32 %v1056, 1.442695
  %v1233 = vpow.pop %v1232
  %v1234 = vmul.f32 %v1057, 1.442695
  %v1235 = vpow.pop %v1234
  %v1236 = vmul.f32 %v1058, 1.442695
  %v1237 = vpow.pop %v1236
  %v1238 = vmul.f32 %v1059, 1.442695
  %v1239 = vpow.pop %v1238
  %v1240 = vmul.f32 %v1060, 1.442695
  %v1241 = vpow.pop %v1240
  %v1242 = vmul.f32 %v1061, 1.442695
  %v1243 = vpow.pop %v1242
  %v1244 = vmul.f32 %v1062, 1.442695
  %v1245 = vpow.pop %v1244
  %v1246 = vmul.f32 %v1063, 1.442695
  %v1247 = vpow.pop %v1246
  %v1248 = vmul.f32 %v1064, 1.442695
  %v1249 = vpow.pop %v1248
  %v1250 = vmul.f32 %v1065, 1.442695
  %v1251 = vpow.pop %v1250
  %v1252 = vmul.f32 %v1066, 1.442695
  %v1253 = vpow.pop %v1252
  %v1254 = vmul.f32 %v1067, 1.442695
  %v1255 = vpow.pop %v1254
  %v1256 = vmul.f32 %v1068, 1.442695
  %v1257 = vpow.pop %v1256
  %v1258 = vmul.f32 %v1069, 1.442695
  %v1259 = vpow.pop %v1258
  %v1260 = vmul.f32 %v1070, 1.442695
  %v1261 = vpow.pop %v1260
  %v1262 = vmul.f32 %v1071, 1.442695
  %v1263 = vpow.pop %v1262
  %v1264 = vmul.f32 %v1072, 1.442695
  %v1265 = vpow.pop %v1264
  %v1266 = vmul.f32 %v1073, 1.442695
  %v1267 = vpow.pop %v1266
  %v1268 = vmul.f32 %v1074, 1.442695
  %v1269 = vpow.pop %v1268
  %v1270 = vmul.f32 %v1075, 1.442695
  %v1271 = vpow.pop %v1270
  %v1272 = vmul.f32 %v1076, 1.442695
  %v1273 = vpow.pop %v1272
  %v1274 = vmul.f32 %v1077, 1.442695
  %v1275 = vpow.pop %v1274
  %v1276 = vmul.f32 %v1078, 1.442695
  %v1277 = vpow.pop %v1276
  %v1278 = vmul.f32 %v1079, 1.442695
  %v1279 = vpow.pop %v1278
  %v1280 = vmul.f32 %v1080, 1.442695
  %v1281 = vpow.pop %v1280
  %v1282 = vmul.f32 %v1081, 1.442695
  %v1283 = vpow.pop %v1282
  %v1284 = vmul.f32 %v1082, 1.442695
  %v1285 = vpow.pop %v1284
  %v1286 = vmul.f32 %v1083, 1.442695
  %v1287 = vpow.pop %v1286
  %v1288 = vmul.f32 %v1084, 1.442695
  %v1289 = vpow.pop %v1288
  %v1290 = vmul.f32 %v1085, 1.442695
  %v1291 = vpow.pop %v1290
  %v1292 = vmul.f32 %v1086, 1.442695
  %v1293 = vpow.pop %v1292
  %v1294 = vmul.f32 %v1087, 1.442695
  %v1295 = vpow.pop %v1294
  %v1296 = vmul.f32 %v1088, 1.442695
  %v1297 = vpow.pop %v1296
  %v1298 = vmul.f32 %v1089, 1.442695
  %v1299 = vpow.pop %v1298
  %v1300 = vmul.f32 %v1090, 1.442695
  %v1301 = vpow.pop %v1300
  %v1302 = vmul.f32 %v1091, 1.442695
  %v1303 = vpow.pop %v1302
  %v1304 = vmul.f32 %v1092, 1.442695
  %v1305 = vpow.pop %v1304
  %v1306 = vmul.f32 %v1093, 1.442695
  %v1307 = vpow.pop %v1306
  %v1308 = vmul.f32 %v1094, 1.442695
  %v1309 = vpow.pop %v1308
  %v1310 = vmul.f32 %v1095, 1.442695
  %v1311 = vpow.pop %v1310
  %v1312 = vmul.f32 %v1096, 1.442695
  %v1313 = vpow.pop %v1312
  %v1314 = vmul.f32 %v1097, 1.442695
  %v1315 = vpow.pop %v1314
  %v1316 = vmul.f32 %v1098, 1.442695
  %v1317 = vpow.pop %v1316
  %v1318 = vmul.f32 %v1099, 1.442695
  %v1319 = vpow.pop %v1318
  %v1320 = vmul.f32 %v1100, 1.442695
  %v1321 = vpow.pop %v1320
  %v1322 = vmul.f32 %v1101, 1.442695
  %v1323 = vpow.pop %v1322
  %v1324 = vmul.f32 %v1102, 1.442695
  %v1325 = vpow.pop %v1324
  %v1326 = vmul.f32 %v1103, 1.442695
  %v1327 = vpow.pop %v1326
  %v1328 = vmul.f32 %v1104, 1.442695
  %v1329 = vpow.pop %v1328
  %v1330 = vmul.f32 %v1105, 1.442695
  %v1331 = vpow.pop %v1330
  %v1332 = vmul.f32 %v1106, 1.442695
  %v1333 = vpow.pop %v1332
  %v1334 = vmul.f32 %v1107, 1.442695
  %v1335 = vpow.pop %v1334
  %v1336 = vmul.f32 %v1108, 1.442695
  %v1337 = vpow.pop %v1336
  %v1338 = vmul.f32 %v1109, 1.442695
  %v1339 = vpow.pop %v1338
  %v1340 = vmul.f32 %v1110, 1.442695
  %v1341 = vpow.pop %v1340
  %v1342 = vmul.f32 %v1111, 1.442695
  %v1343 = vpow.pop %v1342
  %v1344 = vmul.f32 %v1112, 1.442695
  %v1345 = vpow.pop %v1344
  %v1346 = vmul.f32 %v1113, 1.442695
  %v1347 = vpow.pop %v1346
  %v1348 = vmul.f32 %v1114, 1.442695
  %v1349 = vpow.pop %v1348
  %v1350 = vmul.f32 %v1115, 1.442695
  %v1351 = vpow.pop %v1350
  %v1352 = vmul.f32 %v1116, 1.442695
  %v1353 = vpow.pop %v1352
  %v1354 = vmul.f32 %v1117, 1.442695
  %v1355 = vpow.pop %v1354
  %v1356 = vmul.f32 %v1118, 1.442695
  %v1357 = vpow.pop %v1356
  %v1358 = vmul.f32 %v1119, 1.442695
  %v1359 = vpow.pop %v1358
  %v1360 = vmul.f32 %v1120, 1.442695
  %v1361 = vpow.pop %v1360
  %v1362 = vmul.f32 %v1121, 1.442695
  %v1363 = vpow.pop %v1362
  %v1364 = vmul.f32 %v1122, 1.442695
  %v1365 = vpow.pop %v1364
  %v1366 = vmul.f32 %v1123, 1.442695
  %v1367 = vpow.pop %v1366
  %v1368 = vmul.f32 %v1124, 1.442695
  %v1369 = vpow.pop %v1368
  %v1370 = vmul.f32 %v1125, 1.442695
  %v1371 = vpow.pop %v1370
  %v1372 = vmul.f32 %v1126, 1.442695
  %v1373 = vpow.pop %v1372
  %v1374 = vmul.f32 %v1127, 1.442695
  %v1375 = vpow.pop %v1374
  %v1376 = vmul.f32 %v1128, 1.442695
  %v1377 = vpow.pop %v1376
  %v1378 = vmul.f32 %v1129, 1.442695
  %v1379 = vpow.pop %v1378
  %v1380 = vmul.f32 %v1130, 1.442695
  %v1381 = vpow.pop %v1380
  %v1382 = vmul.f32 %v1131, 1.442695
  %v1383 = vpow.pop %v1382
  %v1384 = vmul.f32 %v1132, 1.442695
  %v1385 = vpow.pop %v1384
  %v1386 = vmul.f32 %v1133, 1.442695
  %v1387 = vpow.pop %v1386
  %v1388 = vmul.f32 %v1134, 1.442695
  %v1389 = vpow.pop %v1388
  %v1390 = vmul.f32 %v1135, 1.442695
  %v1391 = vpow.pop %v1390
  %v1392 = vadd.f32 %v1137, 1.0
  %v1393 = vadd.f32 %v1139, 1.0
  %v1394 = vadd.f32 %v1141, 1.0
  %v1395 = vadd.f32 %v1143, 1.0
  %v1396 = vadd.f32 %v1145, 1.0
  %v1397 = vadd.f32 %v1147, 1.0
  %v1398 = vadd.f32 %v1149, 1.0
  %v1399 = vadd.f32 %v1151, 1.0
  %v1400 = vadd.f32 %v1153, 1.0
  %v1401 = vadd.f32 %v1155, 1.0
  %v1402 = vadd.f32 %v1157, 1.0
  %v1403 = vadd.f32 %v1159, 1.0
  %v1404 = vadd.f32 %v1161, 1.0
  %v1405 = vadd.f32 %v1163, 1.0
  %v1406 = vadd.f32 %v1165, 1.0
  %v1407 = vadd.f32 %v1167, 1.0
  %v1408 = vadd.f32 %v1169, 1.0
  %v1409 = vadd.f32 %v1171, 1.0
  %v1410 = vadd.f32 %v1173, 1.0
  %v1411 = vadd.f32 %v1175, 1.0
  %v1412 = vadd.f32 %v1177, 1.0
  %v1413 = vadd.f32 %v1179, 1.0
  %v1414 = vadd.f32 %v1181, 1.0
  %v1415 = vadd.f32 %v1183, 1.0
  %v1416 = vadd.f32 %v1185, 1.0
  %v1417 = vadd.f32 %v1187, 1.0
  %v1418 = vadd.f32 %v1189, 1.0
  %v1419 = vadd.f32 %v1191, 1.0
  %v1420 = vadd.f32 %v1193, 1.0
  %v1421 = vadd.f32 %v1195, 1.0
  %v1422 = vadd.f32 %v1197, 1.0
  %v1423 = vadd.f32 %v1199, 1.0
  %v1424 = vadd.f32 %v1201, 1.0
  %v1425 = vadd.f32 %v1203, 1.0
  %v1426 = vadd.f32 %v1205, 1.0
  %v1427 = vadd.f32 %v1207, 1.0
  %v1428 = vadd.f32 %v1209, 1.0
  %v1429 = vadd.f32 %v1211, 1.0
  %v1430 = vadd.f32 %v1213, 1.0
  %v1431 = vadd.f32 %v1215, 1.0
  %v1432 = vadd.f32 %v1217, 1.0
  %v1433 = vadd.f32 %v1219, 1.0
  %v1434 = vadd.f32 %v1221, 1.0
  %v1435 = vadd.f32 %v1223, 1.0
  %v1436 = vadd.f32 %v1225, 1.0
  %v1437 = vadd.f32 %v1227, 1.0
  %v1438 = vadd.f32 %v1229, 1.0
  %v1439 = vadd.f32 %v1231, 1.0
  %v1440 = vadd.f32 %v1233, 1.0
  %v1441 = vadd.f32 %v1235, 1.0
  %v1442 = vadd.f32 %v1237, 1.0
  %v1443 = vadd.f32 %v1239, 1.0
  %v1444 = vadd.f32 %v1241, 1.0
  %v1445 = vadd.f32 %v1243, 1.0
  %v1446 = vadd.f32 %v1245, 1.0
  %v1447 = vadd.f32 %v1247, 1.0
  %v1448 = vadd.f32 %v1249, 1.0
  %v1449 = vadd.f32 %v1251, 1.0
  %v1450 = vadd.f32 %v1253, 1.0
  %v1451 = vadd.f32 %v1255, 1.0
  %v1452 = vadd.f32 %v1257, 1.0
  %v1453 = vadd.f32 %v1259, 1.0
  %v1454 = vadd.f32 %v1261, 1.0
  %v1455 = vadd.f32 %v1263, 1.0
  %v1456 = vadd.f32 %v1265, 1.0
  %v1457 = vadd.f32 %v1267, 1.0
  %v1458 = vadd.f32 %v1269, 1.0
  %v1459 = vadd.f32 %v1271, 1.0
  %v1460 = vadd.f32 %v1273, 1.0
  %v1461 = vadd.f32 %v1275, 1.0
  %v1462 = vadd.f32 %v1277, 1.0
  %v1463 = vadd.f32 %v1279, 1.0
  %v1464 = vadd.f32 %v1281, 1.0
  %v1465 = vadd.f32 %v1283, 1.0
  %v1466 = vadd.f32 %v1285, 1.0
  %v1467 = vadd.f32 %v1287, 1.0
  %v1468 = vadd.f32 %v1289, 1.0
  %v1469 = vadd.f32 %v1291, 1.0
  %v1470 = vadd.f32 %v1293, 1.0
  %v1471 = vadd.f32 %v1295, 1.0
  %v1472 = vadd.f32 %v1297, 1.0
  %v1473 = vadd.f32 %v1299, 1.0
  %v1474 = vadd.f32 %v1301, 1.0
  %v1475 = vadd.f32 %v1303, 1.0
  %v1476 = vadd.f32 %v1305, 1.0
  %v1477 = vadd.f32 %v1307, 1.0
  %v1478 = vadd.f32 %v1309, 1.0
  %v1479 = vadd.f32 %v1311, 1.0
  %v1480 = vadd.f32 %v1313, 1.0
  %v1481 = vadd.f32 %v1315, 1.0
  %v1482 = vadd.f32 %v1317, 1.0
  %v1483 = vadd.f32 %v1319, 1.0
  %v1484 = vadd.f32 %v1321, 1.0
  %v1485 = vadd.f32 %v1323, 1.0
  %v1486 = vadd.f32 %v1325, 1.0
  %v1487 = vadd.f32 %v1327, 1.0
  %v1488 = vadd.f32 %v1329, 1.0
  %v1489 = vadd.f32 %v1331, 1.0
  %v1490 = vadd.f32 %v1333, 1.0
  %v1491 = vadd.f32 %v1335, 1.0
  %v1492 = vadd.f32 %v1337, 1.0
  %v1493 = vadd.f32 %v1339, 1.0
  %v1494 = vadd.f32 %v1341, 1.0
  %v1495 = vadd.f32 %v1343, 1.0
  %v1496 = vadd.f32 %v1345, 1.0
  %v1497 = vadd.f32 %v1347, 1.0
  %v1498 = vadd.f32 %v1349, 1.0
  %v1499 = vadd.f32 %v1351, 1.0
  %v1500 = vadd.f32 %v1353, 1.0
  %v1501 = vadd.f32 %v1355, 1.0
  %v1502 = vadd.f32 %v1357, 1.0
  %v1503 = vadd.f32 %v1359, 1.0
  %v1504 = vadd.f32 %v1361, 1.0
  %v1505 = vadd.f32 %v1363, 1.0
  %v1506 = vadd.f32 %v1365, 1.0
  %v1507 = vadd.f32 %v1367, 1.0
  %v1508 = vadd.f32 %v1369, 1.0
  %v1509 = vadd.f32 %v1371, 1.0
  %v1510 = vadd.f32 %v1373, 1.0
  %v1511 = vadd.f32 %v1375, 1.0
  %v1512 = vadd.f32 %v1377, 1.0
  %v1513 = vadd.f32 %v1379, 1.0
  %v1514 = vadd.f32 %v1381, 1.0
  %v1515 = vadd.f32 %v1383, 1.0
  %v1516 = vadd.f32 %v1385, 1.0
  %v1517 = vadd.f32 %v1387, 1.0
  %v1518 = vadd.f32 %v1389, 1.0
  %v1519 = vadd.f32 %v1391, 1.0
  %v1520 = vrcp.pop %v1392
  %v1521 = vmul.f32 %v1392, %v1520
  %v1522 = vsub.f32 1.0, %v1521
  %v1523 = vmul.f32 %v1520, %v1522
  %v1524 = vadd.f32 %v1520, %v1523
  %vm1525 = vweird.f32 %v1392
  %vm1526 = vweird.f32 %v1520
  %vm1527 = vmor %vm1525, %vm1526
  %v1528 = vsel %vm1527, %v1520, %v1524
  %v1529 = vand.u32 2147483647, %v1392
  %vm1530 = vcmp.eq.f32.partialorder %v1529, 8.507059e+37
  %v1531 = vand.u32 %v1392, 2147483648
  %v1532 = vor.u32 1.1754944e-38, %v1531
  %v1533 = vsel %vm1530, %v1532, %v1528
  %v1534 = vmul.f32 1.0, %v1533
  %v1535 = vrcp.pop %v1393
  %v1536 = vmul.f32 %v1393, %v1535
  %v1537 = vsub.f32 1.0, %v1536
  %v1538 = vmul.f32 %v1535, %v1537
  %v1539 = vadd.f32 %v1535, %v1538
  %vm1540 = vweird.f32 %v1393
  %vm1541 = vweird.f32 %v1535
  %vm1542 = vmor %vm1540, %vm1541
  %v1543 = vsel %vm1542, %v1535, %v1539
  %v1544 = vand.u32 2147483647, %v1393
  %vm1545 = vcmp.eq.f32.partialorder %v1544, 8.507059e+37
  %v1546 = vand.u32 %v1393, 2147483648
  %v1547 = vor.u32 1.1754944e-38, %v1546
  %v1548 = vsel %vm1545, %v1547, %v1543
  %v1549 = vmul.f32 1.0, %v1548
  %v1550 = vrcp.pop %v1394
  %v1551 = vmul.f32 %v1394, %v1550
  %v1552 = vsub.f32 1.0, %v1551
  %v1553 = vmul.f32 %v1550, %v1552
  %v1554 = vadd.f32 %v1550, %v1553
  %vm1555 = vweird.f32 %v1394
  %vm1556 = vweird.f32 %v1550
  %vm1557 = vmor %vm1555, %vm1556
  %v1558 = vsel %vm1557, %v1550, %v1554
  %v1559 = vand.u32 2147483647, %v1394
  %vm1560 = vcmp.eq.f32.partialorder %v1559, 8.507059e+37
  %v1561 = vand.u32 %v1394, 2147483648
  %v1562 = vor.u32 1.1754944e-38, %v1561
  %v1563 = vsel %vm1560, %v1562, %v1558
  %v1564 = vmul.f32 1.0, %v1563
  %v1565 = vrcp.pop %v1395
  %v1566 = vmul.f32 %v1395, %v1565
  %v1567 = vsub.f32 1.0, %v1566
  %v1568 = vmul.f32 %v1565, %v1567
  %v1569 = vadd.f32 %v1565, %v1568
  %vm1570 = vweird.f32 %v1395
  %vm1571 = vweird.f32 %v1565
  %vm1572 = vmor %vm1570, %vm1571
  %v1573 = vsel %vm1572, %v1565, %v1569
  %v1574 = vand.u32 2147483647, %v1395
  %vm1575 = vcmp.eq.f32.partialorder %v1574, 8.507059e+37
  %v1576 = vand.u32 %v1395, 2147483648
  %v1577 = vor.u32 1.1754944e-38, %v1576
  %v1578 = vsel %vm1575, %v1577, %v1573
  %v1579 = vmul.f32 1.0, %v1578
  %v1580 = vrcp.pop %v1396
  %v1581 = vmul.f32 %v1396, %v1580
  %v1582 = vsub.f32 1.0, %v1581
  %v1583 = vmul.f32 %v1580, %v1582
  %v1584 = vadd.f32 %v1580, %v1583
  %vm1585 = vweird.f32 %v1396
  %vm1586 = vweird.f32 %v1580
  %vm1587 = vmor %vm1585, %vm1586
  %v1588 = vsel %vm1587, %v1580, %v1584
  %v1589 = vand.u32 2147483647, %v1396
  %vm1590 = vcmp.eq.f32.partialorder %v1589, 8.507059e+37
  %v1591 = vand.u32 %v1396, 2147483648
  %v1592 = vor.u32 1.1754944e-38, %v1591
  %v1593 = vsel %vm1590, %v1592, %v1588
  %v1594 = vmul.f32 1.0, %v1593
  %v1595 = vrcp.pop %v1397
  %v1596 = vmul.f32 %v1397, %v1595
  %v1597 = vsub.f32 1.0, %v1596
  %v1598 = vmul.f32 %v1595, %v1597
  %v1599 = vadd.f32 %v1595, %v1598
  %vm1600 = vweird.f32 %v1397
  %vm1601 = vweird.f32 %v1595
  %vm1602 = vmor %vm1600, %vm1601
  %v1603 = vsel %vm1602, %v1595, %v1599
  %v1604 = vand.u32 2147483647, %v1397
  %vm1605 = vcmp.eq.f32.partialorder %v1604, 8.507059e+37
  %v1606 = vand.u32 %v1397, 2147483648
  %v1607 = vor.u32 1.1754944e-38, %v1606
  %v1608 = vsel %vm1605, %v1607, %v1603
  %v1609 = vmul.f32 1.0, %v1608
  %v1610 = vrcp.pop %v1398
  %v1611 = vmul.f32 %v1398, %v1610
  %v1612 = vsub.f32 1.0, %v1611
  %v1613 = vmul.f32 %v1610, %v1612
  %v1614 = vadd.f32 %v1610, %v1613
  %vm1615 = vweird.f32 %v1398
  %vm1616 = vweird.f32 %v1610
  %vm1617 = vmor %vm1615, %vm1616
  %v1618 = vsel %vm1617, %v1610, %v1614
  %v1619 = vand.u32 2147483647, %v1398
  %vm1620 = vcmp.eq.f32.partialorder %v1619, 8.507059e+37
  %v1621 = vand.u32 %v1398, 2147483648
  %v1622 = vor.u32 1.1754944e-38, %v1621
  %v1623 = vsel %vm1620, %v1622, %v1618
  %v1624 = vmul.f32 1.0, %v1623
  %v1625 = vrcp.pop %v1399
  %v1626 = vmul.f32 %v1399, %v1625
  %v1627 = vsub.f32 1.0, %v1626
  %v1628 = vmul.f32 %v1625, %v1627
  %v1629 = vadd.f32 %v1625, %v1628
  %vm1630 = vweird.f32 %v1399
  %vm1631 = vweird.f32 %v1625
  %vm1632 = vmor %vm1630, %vm1631
  %v1633 = vsel %vm1632, %v1625, %v1629
  %v1634 = vand.u32 2147483647, %v1399
  %vm1635 = vcmp.eq.f32.partialorder %v1634, 8.507059e+37
  %v1636 = vand.u32 %v1399, 2147483648
  %v1637 = vor.u32 1.1754944e-38, %v1636
  %v1638 = vsel %vm1635, %v1637, %v1633
  %v1639 = vmul.f32 1.0, %v1638
  %v1640 = vrcp.pop %v1400
  %v1641 = vmul.f32 %v1400, %v1640
  %v1642 = vsub.f32 1.0, %v1641
  %v1643 = vmul.f32 %v1640, %v1642
  %v1644 = vadd.f32 %v1640, %v1643
  %vm1645 = vweird.f32 %v1400
  %vm1646 = vweird.f32 %v1640
  %vm1647 = vmor %vm1645, %vm1646
  %v1648 = vsel %vm1647, %v1640, %v1644
  %v1649 = vand.u32 2147483647, %v1400
  %vm1650 = vcmp.eq.f32.partialorder %v1649, 8.507059e+37
  %v1651 = vand.u32 %v1400, 2147483648
  %v1652 = vor.u32 1.1754944e-38, %v1651
  %v1653 = vsel %vm1650, %v1652, %v1648
  %v1654 = vmul.f32 1.0, %v1653
  %v1655 = vrcp.pop %v1401
  %v1656 = vmul.f32 %v1401, %v1655
  %v1657 = vsub.f32 1.0, %v1656
  %v1658 = vmul.f32 %v1655, %v1657
  %v1659 = vadd.f32 %v1655, %v1658
  %vm1660 = vweird.f32 %v1401
  %vm1661 = vweird.f32 %v1655
  %vm1662 = vmor %vm1660, %vm1661
  %v1663 = vsel %vm1662, %v1655, %v1659
  %v1664 = vand.u32 2147483647, %v1401
  %vm1665 = vcmp.eq.f32.partialorder %v1664, 8.507059e+37
  %v1666 = vand.u32 %v1401, 2147483648
  %v1667 = vor.u32 1.1754944e-38, %v1666
  %v1668 = vsel %vm1665, %v1667, %v1663
  %v1669 = vmul.f32 1.0, %v1668
  %v1670 = vrcp.pop %v1402
  %v1671 = vmul.f32 %v1402, %v1670
  %v1672 = vsub.f32 1.0, %v1671
  %v1673 = vmul.f32 %v1670, %v1672
  %v1674 = vadd.f32 %v1670, %v1673
  %vm1675 = vweird.f32 %v1402
  %vm1676 = vweird.f32 %v1670
  %vm1677 = vmor %vm1675, %vm1676
  %v1678 = vsel %vm1677, %v1670, %v1674
  %v1679 = vand.u32 2147483647, %v1402
  %vm1680 = vcmp.eq.f32.partialorder %v1679, 8.507059e+37
  %v1681 = vand.u32 %v1402, 2147483648
  %v1682 = vor.u32 1.1754944e-38, %v1681
  %v1683 = vsel %vm1680, %v1682, %v1678
  %v1684 = vmul.f32 1.0, %v1683
  %v1685 = vrcp.pop %v1403
  %v1686 = vmul.f32 %v1403, %v1685
  %v1687 = vsub.f32 1.0, %v1686
  %v1688 = vmul.f32 %v1685, %v1687
  %v1689 = vadd.f32 %v1685, %v1688
  %vm1690 = vweird.f32 %v1403
  %vm1691 = vweird.f32 %v1685
  %vm1692 = vmor %vm1690, %vm1691
  %v1693 = vsel %vm1692, %v1685, %v1689
  %v1694 = vand.u32 2147483647, %v1403
  %vm1695 = vcmp.eq.f32.partialorder %v1694, 8.507059e+37
  %v1696 = vand.u32 %v1403, 2147483648
  %v1697 = vor.u32 1.1754944e-38, %v1696
  %v1698 = vsel %vm1695, %v1697, %v1693
  %v1699 = vmul.f32 1.0, %v1698
  %v1700 = vrcp.pop %v1404
  %v1701 = vmul.f32 %v1404, %v1700
  %v1702 = vsub.f32 1.0, %v1701
  %v1703 = vmul.f32 %v1700, %v1702
  %v1704 = vadd.f32 %v1700, %v1703
  %vm1705 = vweird.f32 %v1404
  %vm1706 = vweird.f32 %v1700
  %vm1707 = vmor %vm1705, %vm1706
  %v1708 = vsel %vm1707, %v1700, %v1704
  %v1709 = vand.u32 2147483647, %v1404
  %vm1710 = vcmp.eq.f32.partialorder %v1709, 8.507059e+37
  %v1711 = vand.u32 %v1404, 2147483648
  %v1712 = vor.u32 1.1754944e-38, %v1711
  %v1713 = vsel %vm1710, %v1712, %v1708
  %v1714 = vmul.f32 1.0, %v1713
  %v1715 = vrcp.pop %v1405
  %v1716 = vmul.f32 %v1405, %v1715
  %v1717 = vsub.f32 1.0, %v1716
  %v1718 = vmul.f32 %v1715, %v1717
  %v1719 = vadd.f32 %v1715, %v1718
  %vm1720 = vweird.f32 %v1405
  %vm1721 = vweird.f32 %v1715
  %vm1722 = vmor %vm1720, %vm1721
  %v1723 = vsel %vm1722, %v1715, %v1719
  %v1724 = vand.u32 2147483647, %v1405
  %vm1725 = vcmp.eq.f32.partialorder %v1724, 8.507059e+37
  %v1726 = vand.u32 %v1405, 2147483648
  %v1727 = vor.u32 1.1754944e-38, %v1726
  %v1728 = vsel %vm1725, %v1727, %v1723
  %v1729 = vmul.f32 1.0, %v1728
  %v1730 = vrcp.pop %v1406
  %v1731 = vmul.f32 %v1406, %v1730
  %v1732 = vsub.f32 1.0, %v1731
  %v1733 = vmul.f32 %v1730, %v1732
  %v1734 = vadd.f32 %v1730, %v1733
  %vm1735 = vweird.f32 %v1406
  %vm1736 = vweird.f32 %v1730
  %vm1737 = vmor %vm1735, %vm1736
  %v1738 = vsel %vm1737, %v1730, %v1734
  %v1739 = vand.u32 2147483647, %v1406
  %vm1740 = vcmp.eq.f32.partialorder %v1739, 8.507059e+37
  %v1741 = vand.u32 %v1406, 2147483648
  %v1742 = vor.u32 1.1754944e-38, %v1741
  %v1743 = vsel %vm1740, %v1742, %v1738
  %v1744 = vmul.f32 1.0, %v1743
  %v1745 = vrcp.pop %v1407
  %v1746 = vmul.f32 %v1407, %v1745
  %v1747 = vsub.f32 1.0, %v1746
  %v1748 = vmul.f32 %v1745, %v1747
  %v1749 = vadd.f32 %v1745, %v1748
  %vm1750 = vweird.f32 %v1407
  %vm1751 = vweird.f32 %v1745
  %vm1752 = vmor %vm1750, %vm1751
  %v1753 = vsel %vm1752, %v1745, %v1749
  %v1754 = vand.u32 2147483647, %v1407
  %vm1755 = vcmp.eq.f32.partialorder %v1754, 8.507059e+37
  %v1756 = vand.u32 %v1407, 2147483648
  %v1757 = vor.u32 1.1754944e-38, %v1756
  %v1758 = vsel %vm1755, %v1757, %v1753
  %v1759 = vmul.f32 1.0, %v1758
  %v1760 = vrcp.pop %v1408
  %v1761 = vmul.f32 %v1408, %v1760
  %v1762 = vsub.f32 1.0, %v1761
  %v1763 = vmul.f32 %v1760, %v1762
  %v1764 = vadd.f32 %v1760, %v1763
  %vm1765 = vweird.f32 %v1408
  %vm1766 = vweird.f32 %v1760
  %vm1767 = vmor %vm1765, %vm1766
  %v1768 = vsel %vm1767, %v1760, %v1764
  %v1769 = vand.u32 2147483647, %v1408
  %vm1770 = vcmp.eq.f32.partialorder %v1769, 8.507059e+37
  %v1771 = vand.u32 %v1408, 2147483648
  %v1772 = vor.u32 1.1754944e-38, %v1771
  %v1773 = vsel %vm1770, %v1772, %v1768
  %v1774 = vmul.f32 1.0, %v1773
  %v1775 = vrcp.pop %v1409
  %v1776 = vmul.f32 %v1409, %v1775
  %v1777 = vsub.f32 1.0, %v1776
  %v1778 = vmul.f32 %v1775, %v1777
  %v1779 = vadd.f32 %v1775, %v1778
  %vm1780 = vweird.f32 %v1409
  %vm1781 = vweird.f32 %v1775
  %vm1782 = vmor %vm1780, %vm1781
  %v1783 = vsel %vm1782, %v1775, %v1779
  %v1784 = vand.u32 2147483647, %v1409
  %vm1785 = vcmp.eq.f32.partialorder %v1784, 8.507059e+37
  %v1786 = vand.u32 %v1409, 2147483648
  %v1787 = vor.u32 1.1754944e-38, %v1786
  %v1788 = vsel %vm1785, %v1787, %v1783
  %v1789 = vmul.f32 1.0, %v1788
  %v1790 = vrcp.pop %v1410
  %v1791 = vmul.f32 %v1410, %v1790
  %v1792 = vsub.f32 1.0, %v1791
  %v1793 = vmul.f32 %v1790, %v1792
  %v1794 = vadd.f32 %v1790, %v1793
  %vm1795 = vweird.f32 %v1410
  %vm1796 = vweird.f32 %v1790
  %vm1797 = vmor %vm1795, %vm1796
  %v1798 = vsel %vm1797, %v1790, %v1794
  %v1799 = vand.u32 2147483647, %v1410
  %vm1800 = vcmp.eq.f32.partialorder %v1799, 8.507059e+37
  %v1801 = vand.u32 %v1410, 2147483648
  %v1802 = vor.u32 1.1754944e-38, %v1801
  %v1803 = vsel %vm1800, %v1802, %v1798
  %v1804 = vmul.f32 1.0, %v1803
  %v1805 = vrcp.pop %v1411
  %v1806 = vmul.f32 %v1411, %v1805
  %v1807 = vsub.f32 1.0, %v1806
  %v1808 = vmul.f32 %v1805, %v1807
  %v1809 = vadd.f32 %v1805, %v1808
  %vm1810 = vweird.f32 %v1411
  %vm1811 = vweird.f32 %v1805
  %vm1812 = vmor %vm1810, %vm1811
  %v1813 = vsel %vm1812, %v1805, %v1809
  %v1814 = vand.u32 2147483647, %v1411
  %vm1815 = vcmp.eq.f32.partialorder %v1814, 8.507059e+37
  %v1816 = vand.u32 %v1411, 2147483648
  %v1817 = vor.u32 1.1754944e-38, %v1816
  %v1818 = vsel %vm1815, %v1817, %v1813
  %v1819 = vmul.f32 1.0, %v1818
  %v1820 = vrcp.pop %v1412
  %v1821 = vmul.f32 %v1412, %v1820
  %v1822 = vsub.f32 1.0, %v1821
  %v1823 = vmul.f32 %v1820, %v1822
  %v1824 = vadd.f32 %v1820, %v1823
  %vm1825 = vweird.f32 %v1412
  %vm1826 = vweird.f32 %v1820
  %vm1827 = vmor %vm1825, %vm1826
  %v1828 = vsel %vm1827, %v1820, %v1824
  %v1829 = vand.u32 2147483647, %v1412
  %vm1830 = vcmp.eq.f32.partialorder %v1829, 8.507059e+37
  %v1831 = vand.u32 %v1412, 2147483648
  %v1832 = vor.u32 1.1754944e-38, %v1831
  %v1833 = vsel %vm1830, %v1832, %v1828
  %v1834 = vmul.f32 1.0, %v1833
  %v1835 = vrcp.pop %v1413
  %v1836 = vmul.f32 %v1413, %v1835
  %v1837 = vsub.f32 1.0, %v1836
  %v1838 = vmul.f32 %v1835, %v1837
  %v1839 = vadd.f32 %v1835, %v1838
  %vm1840 = vweird.f32 %v1413
  %vm1841 = vweird.f32 %v1835
  %vm1842 = vmor %vm1840, %vm1841
  %v1843 = vsel %vm1842, %v1835, %v1839
  %v1844 = vand.u32 2147483647, %v1413
  %vm1845 = vcmp.eq.f32.partialorder %v1844, 8.507059e+37
  %v1846 = vand.u32 %v1413, 2147483648
  %v1847 = vor.u32 1.1754944e-38, %v1846
  %v1848 = vsel %vm1845, %v1847, %v1843
  %v1849 = vmul.f32 1.0, %v1848
  %v1850 = vrcp.pop %v1414
  %v1851 = vmul.f32 %v1414, %v1850
  %v1852 = vsub.f32 1.0, %v1851
  %v1853 = vmul.f32 %v1850, %v1852
  %v1854 = vadd.f32 %v1850, %v1853
  %vm1855 = vweird.f32 %v1414
  %vm1856 = vweird.f32 %v1850
  %vm1857 = vmor %vm1855, %vm1856
  %v1858 = vsel %vm1857, %v1850, %v1854
  %v1859 = vand.u32 2147483647, %v1414
  %vm1860 = vcmp.eq.f32.partialorder %v1859, 8.507059e+37
  %v1861 = vand.u32 %v1414, 2147483648
  %v1862 = vor.u32 1.1754944e-38, %v1861
  %v1863 = vsel %vm1860, %v1862, %v1858
  %v1864 = vmul.f32 1.0, %v1863
  %v1865 = vrcp.pop %v1415
  %v1866 = vmul.f32 %v1415, %v1865
  %v1867 = vsub.f32 1.0, %v1866
  %v1868 = vmul.f32 %v1865, %v1867
  %v1869 = vadd.f32 %v1865, %v1868
  %vm1870 = vweird.f32 %v1415
  %vm1871 = vweird.f32 %v1865
  %vm1872 = vmor %vm1870, %vm1871
  %v1873 = vsel %vm1872, %v1865, %v1869
  %v1874 = vand.u32 2147483647, %v1415
  %vm1875 = vcmp.eq.f32.partialorder %v1874, 8.507059e+37
  %v1876 = vand.u32 %v1415, 2147483648
  %v1877 = vor.u32 1.1754944e-38, %v1876
  %v1878 = vsel %vm1875, %v1877, %v1873
  %v1879 = vmul.f32 1.0, %v1878
  %v1880 = vrcp.pop %v1416
  %v1881 = vmul.f32 %v1416, %v1880
  %v1882 = vsub.f32 1.0, %v1881
  %v1883 = vmul.f32 %v1880, %v1882
  %v1884 = vadd.f32 %v1880, %v1883
  %vm1885 = vweird.f32 %v1416
  %vm1886 = vweird.f32 %v1880
  %vm1887 = vmor %vm1885, %vm1886
  %v1888 = vsel %vm1887, %v1880, %v1884
  %v1889 = vand.u32 2147483647, %v1416
  %vm1890 = vcmp.eq.f32.partialorder %v1889, 8.507059e+37
  %v1891 = vand.u32 %v1416, 2147483648
  %v1892 = vor.u32 1.1754944e-38, %v1891
  %v1893 = vsel %vm1890, %v1892, %v1888
  %v1894 = vmul.f32 1.0, %v1893
  %v1895 = vrcp.pop %v1417
  %v1896 = vmul.f32 %v1417, %v1895
  %v1897 = vsub.f32 1.0, %v1896
  %v1898 = vmul.f32 %v1895, %v1897
  %v1899 = vadd.f32 %v1895, %v1898
  %vm1900 = vweird.f32 %v1417
  %vm1901 = vweird.f32 %v1895
  %vm1902 = vmor %vm1900, %vm1901
  %v1903 = vsel %vm1902, %v1895, %v1899
  %v1904 = vand.u32 2147483647, %v1417
  %vm1905 = vcmp.eq.f32.partialorder %v1904, 8.507059e+37
  %v1906 = vand.u32 %v1417, 2147483648
  %v1907 = vor.u32 1.1754944e-38, %v1906
  %v1908 = vsel %vm1905, %v1907, %v1903
  %v1909 = vmul.f32 1.0, %v1908
  %v1910 = vrcp.pop %v1418
  %v1911 = vmul.f32 %v1418, %v1910
  %v1912 = vsub.f32 1.0, %v1911
  %v1913 = vmul.f32 %v1910, %v1912
  %v1914 = vadd.f32 %v1910, %v1913
  %vm1915 = vweird.f32 %v1418
  %vm1916 = vweird.f32 %v1910
  %vm1917 = vmor %vm1915, %vm1916
  %v1918 = vsel %vm1917, %v1910, %v1914
  %v1919 = vand.u32 2147483647, %v1418
  %vm1920 = vcmp.eq.f32.partialorder %v1919, 8.507059e+37
  %v1921 = vand.u32 %v1418, 2147483648
  %v1922 = vor.u32 1.1754944e-38, %v1921
  %v1923 = vsel %vm1920, %v1922, %v1918
  %v1924 = vmul.f32 1.0, %v1923
  %v1925 = vrcp.pop %v1419
  %v1926 = vmul.f32 %v1419, %v1925
  %v1927 = vsub.f32 1.0, %v1926
  %v1928 = vmul.f32 %v1925, %v1927
  %v1929 = vadd.f32 %v1925, %v1928
  %vm1930 = vweird.f32 %v1419
  %vm1931 = vweird.f32 %v1925
  %vm1932 = vmor %vm1930, %vm1931
  %v1933 = vsel %vm1932, %v1925, %v1929
  %v1934 = vand.u32 2147483647, %v1419
  %vm1935 = vcmp.eq.f32.partialorder %v1934, 8.507059e+37
  %v1936 = vand.u32 %v1419, 2147483648
  %v1937 = vor.u32 1.1754944e-38, %v1936
  %v1938 = vsel %vm1935, %v1937, %v1933
  %v1939 = vmul.f32 1.0, %v1938
  %v1940 = vrcp.pop %v1420
  %v1941 = vmul.f32 %v1420, %v1940
  %v1942 = vsub.f32 1.0, %v1941
  %v1943 = vmul.f32 %v1940, %v1942
  %v1944 = vadd.f32 %v1940, %v1943
  %vm1945 = vweird.f32 %v1420
  %vm1946 = vweird.f32 %v1940
  %vm1947 = vmor %vm1945, %vm1946
  %v1948 = vsel %vm1947, %v1940, %v1944
  %v1949 = vand.u32 2147483647, %v1420
  %vm1950 = vcmp.eq.f32.partialorder %v1949, 8.507059e+37
  %v1951 = vand.u32 %v1420, 2147483648
  %v1952 = vor.u32 1.1754944e-38, %v1951
  %v1953 = vsel %vm1950, %v1952, %v1948
  %v1954 = vmul.f32 1.0, %v1953
  %v1955 = vrcp.pop %v1421
  %v1956 = vmul.f32 %v1421, %v1955
  %v1957 = vsub.f32 1.0, %v1956
  %v1958 = vmul.f32 %v1955, %v1957
  %v1959 = vadd.f32 %v1955, %v1958
  %vm1960 = vweird.f32 %v1421
  %vm1961 = vweird.f32 %v1955
  %vm1962 = vmor %vm1960, %vm1961
  %v1963 = vsel %vm1962, %v1955, %v1959
  %v1964 = vand.u32 2147483647, %v1421
  %vm1965 = vcmp.eq.f32.partialorder %v1964, 8.507059e+37
  %v1966 = vand.u32 %v1421, 2147483648
  %v1967 = vor.u32 1.1754944e-38, %v1966
  %v1968 = vsel %vm1965, %v1967, %v1963
  %v1969 = vmul.f32 1.0, %v1968
  %v1970 = vrcp.pop %v1422
  %v1971 = vmul.f32 %v1422, %v1970
  %v1972 = vsub.f32 1.0, %v1971
  %v1973 = vmul.f32 %v1970, %v1972
  %v1974 = vadd.f32 %v1970, %v1973
  %vm1975 = vweird.f32 %v1422
  %vm1976 = vweird.f32 %v1970
  %vm1977 = vmor %vm1975, %vm1976
  %v1978 = vsel %vm1977, %v1970, %v1974
  %v1979 = vand.u32 2147483647, %v1422
  %vm1980 = vcmp.eq.f32.partialorder %v1979, 8.507059e+37
  %v1981 = vand.u32 %v1422, 2147483648
  %v1982 = vor.u32 1.1754944e-38, %v1981
  %v1983 = vsel %vm1980, %v1982, %v1978
  %v1984 = vmul.f32 1.0, %v1983
  %v1985 = vrcp.pop %v1423
  %v1986 = vmul.f32 %v1423, %v1985
  %v1987 = vsub.f32 1.0, %v1986
  %v1988 = vmul.f32 %v1985, %v1987
  %v1989 = vadd.f32 %v1985, %v1988
  %vm1990 = vweird.f32 %v1423
  %vm1991 = vweird.f32 %v1985
  %vm1992 = vmor %vm1990, %vm1991
  %v1993 = vsel %vm1992, %v1985, %v1989
  %v1994 = vand.u32 2147483647, %v1423
  %vm1995 = vcmp.eq.f32.partialorder %v1994, 8.507059e+37
  %v1996 = vand.u32 %v1423, 2147483648
  %v1997 = vor.u32 1.1754944e-38, %v1996
  %v1998 = vsel %vm1995, %v1997, %v1993
  %v1999 = vmul.f32 1.0, %v1998
  %v2000 = vrcp.pop %v1424
  %v2001 = vmul.f32 %v1424, %v2000
  %v2002 = vsub.f32 1.0, %v2001
  %v2003 = vmul.f32 %v2000, %v2002
  %v2004 = vadd.f32 %v2000, %v2003
  %vm2005 = vweird.f32 %v1424
  %vm2006 = vweird.f32 %v2000
  %vm2007 = vmor %vm2005, %vm2006
  %v2008 = vsel %vm2007, %v2000, %v2004
  %v2009 = vand.u32 2147483647, %v1424
  %vm2010 = vcmp.eq.f32.partialorder %v2009, 8.507059e+37
  %v2011 = vand.u32 %v1424, 2147483648
  %v2012 = vor.u32 1.1754944e-38, %v2011
  %v2013 = vsel %vm2010, %v2012, %v2008
  %v2014 = vmul.f32 1.0, %v2013
  %v2015 = vrcp.pop %v1425
  %v2016 = vmul.f32 %v1425, %v2015
  %v2017 = vsub.f32 1.0, %v2016
  %v2018 = vmul.f32 %v2015, %v2017
  %v2019 = vadd.f32 %v2015, %v2018
  %vm2020 = vweird.f32 %v1425
  %vm2021 = vweird.f32 %v2015
  %vm2022 = vmor %vm2020, %vm2021
  %v2023 = vsel %vm2022, %v2015, %v2019
  %v2024 = vand.u32 2147483647, %v1425
  %vm2025 = vcmp.eq.f32.partialorder %v2024, 8.507059e+37
  %v2026 = vand.u32 %v1425, 2147483648
  %v2027 = vor.u32 1.1754944e-38, %v2026
  %v2028 = vsel %vm2025, %v2027, %v2023
  %v2029 = vmul.f32 1.0, %v2028
  %v2030 = vrcp.pop %v1426
  %v2031 = vmul.f32 %v1426, %v2030
  %v2032 = vsub.f32 1.0, %v2031
  %v2033 = vmul.f32 %v2030, %v2032
  %v2034 = vadd.f32 %v2030, %v2033
  %vm2035 = vweird.f32 %v1426
  %vm2036 = vweird.f32 %v2030
  %vm2037 = vmor %vm2035, %vm2036
  %v2038 = vsel %vm2037, %v2030, %v2034
  %v2039 = vand.u32 2147483647, %v1426
  %vm2040 = vcmp.eq.f32.partialorder %v2039, 8.507059e+37
  %v2041 = vand.u32 %v1426, 2147483648
  %v2042 = vor.u32 1.1754944e-38, %v2041
  %v2043 = vsel %vm2040, %v2042, %v2038
  %v2044 = vmul.f32 1.0, %v2043
  %v2045 = vrcp.pop %v1427
  %v2046 = vmul.f32 %v1427, %v2045
  %v2047 = vsub.f32 1.0, %v2046
  %v2048 = vmul.f32 %v2045, %v2047
  %v2049 = vadd.f32 %v2045, %v2048
  %vm2050 = vweird.f32 %v1427
  %vm2051 = vweird.f32 %v2045
  %vm2052 = vmor %vm2050, %vm2051
  %v2053 = vsel %vm2052, %v2045, %v2049
  %v2054 = vand.u32 2147483647, %v1427
  %vm2055 = vcmp.eq.f32.partialorder %v2054, 8.507059e+37
  %v2056 = vand.u32 %v1427, 2147483648
  %v2057 = vor.u32 1.1754944e-38, %v2056
  %v2058 = vsel %vm2055, %v2057, %v2053
  %v2059 = vmul.f32 1.0, %v2058
  %v2060 = vrcp.pop %v1428
  %v2061 = vmul.f32 %v1428, %v2060
  %v2062 = vsub.f32 1.0, %v2061
  %v2063 = vmul.f32 %v2060, %v2062
  %v2064 = vadd.f32 %v2060, %v2063
  %vm2065 = vweird.f32 %v1428
  %vm2066 = vweird.f32 %v2060
  %vm2067 = vmor %vm2065, %vm2066
  %v2068 = vsel %vm2067, %v2060, %v2064
  %v2069 = vand.u32 2147483647, %v1428
  %vm2070 = vcmp.eq.f32.partialorder %v2069, 8.507059e+37
  %v2071 = vand.u32 %v1428, 2147483648
  %v2072 = vor.u32 1.1754944e-38, %v2071
  %v2073 = vsel %vm2070, %v2072, %v2068
  %v2074 = vmul.f32 1.0, %v2073
  %v2075 = vrcp.pop %v1429
  %v2076 = vmul.f32 %v1429, %v2075
  %v2077 = vsub.f32 1.0, %v2076
  %v2078 = vmul.f32 %v2075, %v2077
  %v2079 = vadd.f32 %v2075, %v2078
  %vm2080 = vweird.f32 %v1429
  %vm2081 = vweird.f32 %v2075
  %vm2082 = vmor %vm2080, %vm2081
  %v2083 = vsel %vm2082, %v2075, %v2079
  %v2084 = vand.u32 2147483647, %v1429
  %vm2085 = vcmp.eq.f32.partialorder %v2084, 8.507059e+37
  %v2086 = vand.u32 %v1429, 2147483648
  %v2087 = vor.u32 1.1754944e-38, %v2086
  %v2088 = vsel %vm2085, %v2087, %v2083
  %v2089 = vmul.f32 1.0, %v2088
  %v2090 = vrcp.pop %v1430
  %v2091 = vmul.f32 %v1430, %v2090
  %v2092 = vsub.f32 1.0, %v2091
  %v2093 = vmul.f32 %v2090, %v2092
  %v2094 = vadd.f32 %v2090, %v2093
  %vm2095 = vweird.f32 %v1430
  %vm2096 = vweird.f32 %v2090
  %vm2097 = vmor %vm2095, %vm2096
  %v2098 = vsel %vm2097, %v2090, %v2094
  %v2099 = vand.u32 2147483647, %v1430
  %vm2100 = vcmp.eq.f32.partialorder %v2099, 8.507059e+37
  %v2101 = vand.u32 %v1430, 2147483648
  %v2102 = vor.u32 1.1754944e-38, %v2101
  %v2103 = vsel %vm2100, %v2102, %v2098
  %v2104 = vmul.f32 1.0, %v2103
  %v2105 = vrcp.pop %v1431
  %v2106 = vmul.f32 %v1431, %v2105
  %v2107 = vsub.f32 1.0, %v2106
  %v2108 = vmul.f32 %v2105, %v2107
  %v2109 = vadd.f32 %v2105, %v2108
  %vm2110 = vweird.f32 %v1431
  %vm2111 = vweird.f32 %v2105
  %vm2112 = vmor %vm2110, %vm2111
  %v2113 = vsel %vm2112, %v2105, %v2109
  %v2114 = vand.u32 2147483647, %v1431
  %vm2115 = vcmp.eq.f32.partialorder %v2114, 8.507059e+37
  %v2116 = vand.u32 %v1431, 2147483648
  %v2117 = vor.u32 1.1754944e-38, %v2116
  %v2118 = vsel %vm2115, %v2117, %v2113
  %v2119 = vmul.f32 1.0, %v2118
  %v2120 = vrcp.pop %v1432
  %v2121 = vmul.f32 %v1432, %v2120
  %v2122 = vsub.f32 1.0, %v2121
  %v2123 = vmul.f32 %v2120, %v2122
  %v2124 = vadd.f32 %v2120, %v2123
  %vm2125 = vweird.f32 %v1432
  %vm2126 = vweird.f32 %v2120
  %vm2127 = vmor %vm2125, %vm2126
  %v2128 = vsel %vm2127, %v2120, %v2124
  %v2129 = vand.u32 2147483647, %v1432
  %vm2130 = vcmp.eq.f32.partialorder %v2129, 8.507059e+37
  %v2131 = vand.u32 %v1432, 2147483648
  %v2132 = vor.u32 1.1754944e-38, %v2131
  %v2133 = vsel %vm2130, %v2132, %v2128
  %v2134 = vmul.f32 1.0, %v2133
  %v2135 = vrcp.pop %v1433
  %v2136 = vmul.f32 %v1433, %v2135
  %v2137 = vsub.f32 1.0, %v2136
  %v2138 = vmul.f32 %v2135, %v2137
  %v2139 = vadd.f32 %v2135, %v2138
  %vm2140 = vweird.f32 %v1433
  %vm2141 = vweird.f32 %v2135
  %vm2142 = vmor %vm2140, %vm2141
  %v2143 = vsel %vm2142, %v2135, %v2139
  %v2144 = vand.u32 2147483647, %v1433
  %vm2145 = vcmp.eq.f32.partialorder %v2144, 8.507059e+37
  %v2146 = vand.u32 %v1433, 2147483648
  %v2147 = vor.u32 1.1754944e-38, %v2146
  %v2148 = vsel %vm2145, %v2147, %v2143
  %v2149 = vmul.f32 1.0, %v2148
  %v2150 = vrcp.pop %v1434
  %v2151 = vmul.f32 %v1434, %v2150
  %v2152 = vsub.f32 1.0, %v2151
  %v2153 = vmul.f32 %v2150, %v2152
  %v2154 = vadd.f32 %v2150, %v2153
  %vm2155 = vweird.f32 %v1434
  %vm2156 = vweird.f32 %v2150
  %vm2157 = vmor %vm2155, %vm2156
  %v2158 = vsel %vm2157, %v2150, %v2154
  %v2159 = vand.u32 2147483647, %v1434
  %vm2160 = vcmp.eq.f32.partialorder %v2159, 8.507059e+37
  %v2161 = vand.u32 %v1434, 2147483648
  %v2162 = vor.u32 1.1754944e-38, %v2161
  %v2163 = vsel %vm2160, %v2162, %v2158
  %v2164 = vmul.f32 1.0, %v2163
  %v2165 = vrcp.pop %v1435
  %v2166 = vmul.f32 %v1435, %v2165
  %v2167 = vsub.f32 1.0, %v2166
  %v2168 = vmul.f32 %v2165, %v2167
  %v2169 = vadd.f32 %v2165, %v2168
  %vm2170 = vweird.f32 %v1435
  %vm2171 = vweird.f32 %v2165
  %vm2172 = vmor %vm2170, %vm2171
  %v2173 = vsel %vm2172, %v2165, %v2169
  %v2174 = vand.u32 2147483647, %v1435
  %vm2175 = vcmp.eq.f32.partialorder %v2174, 8.507059e+37
  %v2176 = vand.u32 %v1435, 2147483648
  %v2177 = vor.u32 1.1754944e-38, %v2176
  %v2178 = vsel %vm2175, %v2177, %v2173
  %v2179 = vmul.f32 1.0, %v2178
  %v2180 = vrcp.pop %v1436
  %v2181 = vmul.f32 %v1436, %v2180
  %v2182 = vsub.f32 1.0, %v2181
  %v2183 = vmul.f32 %v2180, %v2182
  %v2184 = vadd.f32 %v2180, %v2183
  %vm2185 = vweird.f32 %v1436
  %vm2186 = vweird.f32 %v2180
  %vm2187 = vmor %vm2185, %vm2186
  %v2188 = vsel %vm2187, %v2180, %v2184
  %v2189 = vand.u32 2147483647, %v1436
  %vm2190 = vcmp.eq.f32.partialorder %v2189, 8.507059e+37
  %v2191 = vand.u32 %v1436, 2147483648
  %v2192 = vor.u32 1.1754944e-38, %v2191
  %v2193 = vsel %vm2190, %v2192, %v2188
  %v2194 = vmul.f32 1.0, %v2193
  %v2195 = vrcp.pop %v1437
  %v2196 = vmul.f32 %v1437, %v2195
  %v2197 = vsub.f32 1.0, %v2196
  %v2198 = vmul.f32 %v2195, %v2197
  %v2199 = vadd.f32 %v2195, %v2198
  %vm2200 = vweird.f32 %v1437
  %vm2201 = vweird.f32 %v2195
  %vm2202 = vmor %vm2200, %vm2201
  %v2203 = vsel %vm2202, %v2195, %v2199
  %v2204 = vand.u32 2147483647, %v1437
  %vm2205 = vcmp.eq.f32.partialorder %v2204, 8.507059e+37
  %v2206 = vand.u32 %v1437, 2147483648
  %v2207 = vor.u32 1.1754944e-38, %v2206
  %v2208 = vsel %vm2205, %v2207, %v2203
  %v2209 = vmul.f32 1.0, %v2208
  %v2210 = vrcp.pop %v1438
  %v2211 = vmul.f32 %v1438, %v2210
  %v2212 = vsub.f32 1.0, %v2211
  %v2213 = vmul.f32 %v2210, %v2212
  %v2214 = vadd.f32 %v2210, %v2213
  %vm2215 = vweird.f32 %v1438
  %vm2216 = vweird.f32 %v2210
  %vm2217 = vmor %vm2215, %vm2216
  %v2218 = vsel %vm2217, %v2210, %v2214
  %v2219 = vand.u32 2147483647, %v1438
  %vm2220 = vcmp.eq.f32.partialorder %v2219, 8.507059e+37
  %v2221 = vand.u32 %v1438, 2147483648
  %v2222 = vor.u32 1.1754944e-38, %v2221
  %v2223 = vsel %vm2220, %v2222, %v2218
  %v2224 = vmul.f32 1.0, %v2223
  %v2225 = vrcp.pop %v1439
  %v2226 = vmul.f32 %v1439, %v2225
  %v2227 = vsub.f32 1.0, %v2226
  %v2228 = vmul.f32 %v2225, %v2227
  %v2229 = vadd.f32 %v2225, %v2228
  %vm2230 = vweird.f32 %v1439
  %vm2231 = vweird.f32 %v2225
  %vm2232 = vmor %vm2230, %vm2231
  %v2233 = vsel %vm2232, %v2225, %v2229
  %v2234 = vand.u32 2147483647, %v1439
  %vm2235 = vcmp.eq.f32.partialorder %v2234, 8.507059e+37
  %v2236 = vand.u32 %v1439, 2147483648
  %v2237 = vor.u32 1.1754944e-38, %v2236
  %v2238 = vsel %vm2235, %v2237, %v2233
  %v2239 = vmul.f32 1.0, %v2238
  %v2240 = vrcp.pop %v1440
  %v2241 = vmul.f32 %v1440, %v2240
  %v2242 = vsub.f32 1.0, %v2241
  %v2243 = vmul.f32 %v2240, %v2242
  %v2244 = vadd.f32 %v2240, %v2243
  %vm2245 = vweird.f32 %v1440
  %vm2246 = vweird.f32 %v2240
  %vm2247 = vmor %vm2245, %vm2246
  %v2248 = vsel %vm2247, %v2240, %v2244
  %v2249 = vand.u32 2147483647, %v1440
  %vm2250 = vcmp.eq.f32.partialorder %v2249, 8.507059e+37
  %v2251 = vand.u32 %v1440, 2147483648
  %v2252 = vor.u32 1.1754944e-38, %v2251
  %v2253 = vsel %vm2250, %v2252, %v2248
  %v2254 = vmul.f32 1.0, %v2253
  %v2255 = vrcp.pop %v1441
  %v2256 = vmul.f32 %v1441, %v2255
  %v2257 = vsub.f32 1.0, %v2256
  %v2258 = vmul.f32 %v2255, %v2257
  %v2259 = vadd.f32 %v2255, %v2258
  %vm2260 = vweird.f32 %v1441
  %vm2261 = vweird.f32 %v2255
  %vm2262 = vmor %vm2260, %vm2261
  %v2263 = vsel %vm2262, %v2255, %v2259
  %v2264 = vand.u32 2147483647, %v1441
  %vm2265 = vcmp.eq.f32.partialorder %v2264, 8.507059e+37
  %v2266 = vand.u32 %v1441, 2147483648
  %v2267 = vor.u32 1.1754944e-38, %v2266
  %v2268 = vsel %vm2265, %v2267, %v2263
  %v2269 = vmul.f32 1.0, %v2268
  %v2270 = vrcp.pop %v1442
  %v2271 = vmul.f32 %v1442, %v2270
  %v2272 = vsub.f32 1.0, %v2271
  %v2273 = vmul.f32 %v2270, %v2272
  %v2274 = vadd.f32 %v2270, %v2273
  %vm2275 = vweird.f32 %v1442
  %vm2276 = vweird.f32 %v2270
  %vm2277 = vmor %vm2275, %vm2276
  %v2278 = vsel %vm2277, %v2270, %v2274
  %v2279 = vand.u32 2147483647, %v1442
  %vm2280 = vcmp.eq.f32.partialorder %v2279, 8.507059e+37
  %v2281 = vand.u32 %v1442, 2147483648
  %v2282 = vor.u32 1.1754944e-38, %v2281
  %v2283 = vsel %vm2280, %v2282, %v2278
  %v2284 = vmul.f32 1.0, %v2283
  %v2285 = vrcp.pop %v1443
  %v2286 = vmul.f32 %v1443, %v2285
  %v2287 = vsub.f32 1.0, %v2286
  %v2288 = vmul.f32 %v2285, %v2287
  %v2289 = vadd.f32 %v2285, %v2288
  %vm2290 = vweird.f32 %v1443
  %vm2291 = vweird.f32 %v2285
  %vm2292 = vmor %vm2290, %vm2291
  %v2293 = vsel %vm2292, %v2285, %v2289
  %v2294 = vand.u32 2147483647, %v1443
  %vm2295 = vcmp.eq.f32.partialorder %v2294, 8.507059e+37
  %v2296 = vand.u32 %v1443, 2147483648
  %v2297 = vor.u32 1.1754944e-38, %v2296
  %v2298 = vsel %vm2295, %v2297, %v2293
  %v2299 = vmul.f32 1.0, %v2298
  %v2300 = vrcp.pop %v1444
  %v2301 = vmul.f32 %v1444, %v2300
  %v2302 = vsub.f32 1.0, %v2301
  %v2303 = vmul.f32 %v2300, %v2302
  %v2304 = vadd.f32 %v2300, %v2303
  %vm2305 = vweird.f32 %v1444
  %vm2306 = vweird.f32 %v2300
  %vm2307 = vmor %vm2305, %vm2306
  %v2308 = vsel %vm2307, %v2300, %v2304
  %v2309 = vand.u32 2147483647, %v1444
  %vm2310 = vcmp.eq.f32.partialorder %v2309, 8.507059e+37
  %v2311 = vand.u32 %v1444, 2147483648
  %v2312 = vor.u32 1.1754944e-38, %v2311
  %v2313 = vsel %vm2310, %v2312, %v2308
  %v2314 = vmul.f32 1.0, %v2313
  %v2315 = vrcp.pop %v1445
  %v2316 = vmul.f32 %v1445, %v2315
  %v2317 = vsub.f32 1.0, %v2316
  %v2318 = vmul.f32 %v2315, %v2317
  %v2319 = vadd.f32 %v2315, %v2318
  %vm2320 = vweird.f32 %v1445
  %vm2321 = vweird.f32 %v2315
  %vm2322 = vmor %vm2320, %vm2321
  %v2323 = vsel %vm2322, %v2315, %v2319
  %v2324 = vand.u32 2147483647, %v1445
  %vm2325 = vcmp.eq.f32.partialorder %v2324, 8.507059e+37
  %v2326 = vand.u32 %v1445, 2147483648
  %v2327 = vor.u32 1.1754944e-38, %v2326
  %v2328 = vsel %vm2325, %v2327, %v2323
  %v2329 = vmul.f32 1.0, %v2328
  %v2330 = vrcp.pop %v1446
  %v2331 = vmul.f32 %v1446, %v2330
  %v2332 = vsub.f32 1.0, %v2331
  %v2333 = vmul.f32 %v2330, %v2332
  %v2334 = vadd.f32 %v2330, %v2333
  %vm2335 = vweird.f32 %v1446
  %vm2336 = vweird.f32 %v2330
  %vm2337 = vmor %vm2335, %vm2336
  %v2338 = vsel %vm2337, %v2330, %v2334
  %v2339 = vand.u32 2147483647, %v1446
  %vm2340 = vcmp.eq.f32.partialorder %v2339, 8.507059e+37
  %v2341 = vand.u32 %v1446, 2147483648
  %v2342 = vor.u32 1.1754944e-38, %v2341
  %v2343 = vsel %vm2340, %v2342, %v2338
  %v2344 = vmul.f32 1.0, %v2343
  %v2345 = vrcp.pop %v1447
  %v2346 = vmul.f32 %v1447, %v2345
  %v2347 = vsub.f32 1.0, %v2346
  %v2348 = vmul.f32 %v2345, %v2347
  %v2349 = vadd.f32 %v2345, %v2348
  %vm2350 = vweird.f32 %v1447
  %vm2351 = vweird.f32 %v2345
  %vm2352 = vmor %vm2350, %vm2351
  %v2353 = vsel %vm2352, %v2345, %v2349
  %v2354 = vand.u32 2147483647, %v1447
  %vm2355 = vcmp.eq.f32.partialorder %v2354, 8.507059e+37
  %v2356 = vand.u32 %v1447, 2147483648
  %v2357 = vor.u32 1.1754944e-38, %v2356
  %v2358 = vsel %vm2355, %v2357, %v2353
  %v2359 = vmul.f32 1.0, %v2358
  %v2360 = vrcp.pop %v1448
  %v2361 = vmul.f32 %v1448, %v2360
  %v2362 = vsub.f32 1.0, %v2361
  %v2363 = vmul.f32 %v2360, %v2362
  %v2364 = vadd.f32 %v2360, %v2363
  %vm2365 = vweird.f32 %v1448
  %vm2366 = vweird.f32 %v2360
  %vm2367 = vmor %vm2365, %vm2366
  %v2368 = vsel %vm2367, %v2360, %v2364
  %v2369 = vand.u32 2147483647, %v1448
  %vm2370 = vcmp.eq.f32.partialorder %v2369, 8.507059e+37
  %v2371 = vand.u32 %v1448, 2147483648
  %v2372 = vor.u32 1.1754944e-38, %v2371
  %v2373 = vsel %vm2370, %v2372, %v2368
  %v2374 = vmul.f32 1.0, %v2373
  %v2375 = vrcp.pop %v1449
  %v2376 = vmul.f32 %v1449, %v2375
  %v2377 = vsub.f32 1.0, %v2376
  %v2378 = vmul.f32 %v2375, %v2377
  %v2379 = vadd.f32 %v2375, %v2378
  %vm2380 = vweird.f32 %v1449
  %vm2381 = vweird.f32 %v2375
  %vm2382 = vmor %vm2380, %vm2381
  %v2383 = vsel %vm2382, %v2375, %v2379
  %v2384 = vand.u32 2147483647, %v1449
  %vm2385 = vcmp.eq.f32.partialorder %v2384, 8.507059e+37
  %v2386 = vand.u32 %v1449, 2147483648
  %v2387 = vor.u32 1.1754944e-38, %v2386
  %v2388 = vsel %vm2385, %v2387, %v2383
  %v2389 = vmul.f32 1.0, %v2388
  %v2390 = vrcp.pop %v1450
  %v2391 = vmul.f32 %v1450, %v2390
  %v2392 = vsub.f32 1.0, %v2391
  %v2393 = vmul.f32 %v2390, %v2392
  %v2394 = vadd.f32 %v2390, %v2393
  %vm2395 = vweird.f32 %v1450
  %vm2396 = vweird.f32 %v2390
  %vm2397 = vmor %vm2395, %vm2396
  %v2398 = vsel %vm2397, %v2390, %v2394
  %v2399 = vand.u32 2147483647, %v1450
  %vm2400 = vcmp.eq.f32.partialorder %v2399, 8.507059e+37
  %v2401 = vand.u32 %v1450, 2147483648
  %v2402 = vor.u32 1.1754944e-38, %v2401
  %v2403 = vsel %vm2400, %v2402, %v2398
  %v2404 = vmul.f32 1.0, %v2403
  %v2405 = vrcp.pop %v1451
  %v2406 = vmul.f32 %v1451, %v2405
  %v2407 = vsub.f32 1.0, %v2406
  %v2408 = vmul.f32 %v2405, %v2407
  %v2409 = vadd.f32 %v2405, %v2408
  %vm2410 = vweird.f32 %v1451
  %vm2411 = vweird.f32 %v2405
  %vm2412 = vmor %vm2410, %vm2411
  %v2413 = vsel %vm2412, %v2405, %v2409
  %v2414 = vand.u32 2147483647, %v1451
  %vm2415 = vcmp.eq.f32.partialorder %v2414, 8.507059e+37
  %v2416 = vand.u32 %v1451, 2147483648
  %v2417 = vor.u32 1.1754944e-38, %v2416
  %v2418 = vsel %vm2415, %v2417, %v2413
  %v2419 = vmul.f32 1.0, %v2418
  %v2420 = vrcp.pop %v1452
  %v2421 = vmul.f32 %v1452, %v2420
  %v2422 = vsub.f32 1.0, %v2421
  %v2423 = vmul.f32 %v2420, %v2422
  %v2424 = vadd.f32 %v2420, %v2423
  %vm2425 = vweird.f32 %v1452
  %vm2426 = vweird.f32 %v2420
  %vm2427 = vmor %vm2425, %vm2426
  %v2428 = vsel %vm2427, %v2420, %v2424
  %v2429 = vand.u32 2147483647, %v1452
  %vm2430 = vcmp.eq.f32.partialorder %v2429, 8.507059e+37
  %v2431 = vand.u32 %v1452, 2147483648
  %v2432 = vor.u32 1.1754944e-38, %v2431
  %v2433 = vsel %vm2430, %v2432, %v2428
  %v2434 = vmul.f32 1.0, %v2433
  %v2435 = vrcp.pop %v1453
  %v2436 = vmul.f32 %v1453, %v2435
  %v2437 = vsub.f32 1.0, %v2436
  %v2438 = vmul.f32 %v2435, %v2437
  %v2439 = vadd.f32 %v2435, %v2438
  %vm2440 = vweird.f32 %v1453
  %vm2441 = vweird.f32 %v2435
  %vm2442 = vmor %vm2440, %vm2441
  %v2443 = vsel %vm2442, %v2435, %v2439
  %v2444 = vand.u32 2147483647, %v1453
  %vm2445 = vcmp.eq.f32.partialorder %v2444, 8.507059e+37
  %v2446 = vand.u32 %v1453, 2147483648
  %v2447 = vor.u32 1.1754944e-38, %v2446
  %v2448 = vsel %vm2445, %v2447, %v2443
  %v2449 = vmul.f32 1.0, %v2448
  %v2450 = vrcp.pop %v1454
  %v2451 = vmul.f32 %v1454, %v2450
  %v2452 = vsub.f32 1.0, %v2451
  %v2453 = vmul.f32 %v2450, %v2452
  %v2454 = vadd.f32 %v2450, %v2453
  %vm2455 = vweird.f32 %v1454
  %vm2456 = vweird.f32 %v2450
  %vm2457 = vmor %vm2455, %vm2456
  %v2458 = vsel %vm2457, %v2450, %v2454
  %v2459 = vand.u32 2147483647, %v1454
  %vm2460 = vcmp.eq.f32.partialorder %v2459, 8.507059e+37
  %v2461 = vand.u32 %v1454, 2147483648
  %v2462 = vor.u32 1.1754944e-38, %v2461
  %v2463 = vsel %vm2460, %v2462, %v2458
  %v2464 = vmul.f32 1.0, %v2463
  %v2465 = vrcp.pop %v1455
  %v2466 = vmul.f32 %v1455, %v2465
  %v2467 = vsub.f32 1.0, %v2466
  %v2468 = vmul.f32 %v2465, %v2467
  %v2469 = vadd.f32 %v2465, %v2468
  %vm2470 = vweird.f32 %v1455
  %vm2471 = vweird.f32 %v2465
  %vm2472 = vmor %vm2470, %vm2471
  %v2473 = vsel %vm2472, %v2465, %v2469
  %v2474 = vand.u32 2147483647, %v1455
  %vm2475 = vcmp.eq.f32.partialorder %v2474, 8.507059e+37
  %v2476 = vand.u32 %v1455, 2147483648
  %v2477 = vor.u32 1.1754944e-38, %v2476
  %v2478 = vsel %vm2475, %v2477, %v2473
  %v2479 = vmul.f32 1.0, %v2478
  %v2480 = vrcp.pop %v1456
  %v2481 = vmul.f32 %v1456, %v2480
  %v2482 = vsub.f32 1.0, %v2481
  %v2483 = vmul.f32 %v2480, %v2482
  %v2484 = vadd.f32 %v2480, %v2483
  %vm2485 = vweird.f32 %v1456
  %vm2486 = vweird.f32 %v2480
  %vm2487 = vmor %vm2485, %vm2486
  %v2488 = vsel %vm2487, %v2480, %v2484
  %v2489 = vand.u32 2147483647, %v1456
  %vm2490 = vcmp.eq.f32.partialorder %v2489, 8.507059e+37
  %v2491 = vand.u32 %v1456, 2147483648
  %v2492 = vor.u32 1.1754944e-38, %v2491
  %v2493 = vsel %vm2490, %v2492, %v2488
  %v2494 = vmul.f32 1.0, %v2493
  %v2495 = vrcp.pop %v1457
  %v2496 = vmul.f32 %v1457, %v2495
  %v2497 = vsub.f32 1.0, %v2496
  %v2498 = vmul.f32 %v2495, %v2497
  %v2499 = vadd.f32 %v2495, %v2498
  %vm2500 = vweird.f32 %v1457
  %vm2501 = vweird.f32 %v2495
  %vm2502 = vmor %vm2500, %vm2501
  %v2503 = vsel %vm2502, %v2495, %v2499
  %v2504 = vand.u32 2147483647, %v1457
  %vm2505 = vcmp.eq.f32.partialorder %v2504, 8.507059e+37
  %v2506 = vand.u32 %v1457, 2147483648
  %v2507 = vor.u32 1.1754944e-38, %v2506
  %v2508 = vsel %vm2505, %v2507, %v2503
  %v2509 = vmul.f32 1.0, %v2508
  %v2510 = vrcp.pop %v1458
  %v2511 = vmul.f32 %v1458, %v2510
  %v2512 = vsub.f32 1.0, %v2511
  %v2513 = vmul.f32 %v2510, %v2512
  %v2514 = vadd.f32 %v2510, %v2513
  %vm2515 = vweird.f32 %v1458
  %vm2516 = vweird.f32 %v2510
  %vm2517 = vmor %vm2515, %vm2516
  %v2518 = vsel %vm2517, %v2510, %v2514
  %v2519 = vand.u32 2147483647, %v1458
  %vm2520 = vcmp.eq.f32.partialorder %v2519, 8.507059e+37
  %v2521 = vand.u32 %v1458, 2147483648
  %v2522 = vor.u32 1.1754944e-38, %v2521
  %v2523 = vsel %vm2520, %v2522, %v2518
  %v2524 = vmul.f32 1.0, %v2523
  %v2525 = vrcp.pop %v1459
  %v2526 = vmul.f32 %v1459, %v2525
  %v2527 = vsub.f32 1.0, %v2526
  %v2528 = vmul.f32 %v2525, %v2527
  %v2529 = vadd.f32 %v2525, %v2528
  %vm2530 = vweird.f32 %v1459
  %vm2531 = vweird.f32 %v2525
  %vm2532 = vmor %vm2530, %vm2531
  %v2533 = vsel %vm2532, %v2525, %v2529
  %v2534 = vand.u32 2147483647, %v1459
  %vm2535 = vcmp.eq.f32.partialorder %v2534, 8.507059e+37
  %v2536 = vand.u32 %v1459, 2147483648
  %v2537 = vor.u32 1.1754944e-38, %v2536
  %v2538 = vsel %vm2535, %v2537, %v2533
  %v2539 = vmul.f32 1.0, %v2538
  %v2540 = vrcp.pop %v1460
  %v2541 = vmul.f32 %v1460, %v2540
  %v2542 = vsub.f32 1.0, %v2541
  %v2543 = vmul.f32 %v2540, %v2542
  %v2544 = vadd.f32 %v2540, %v2543
  %vm2545 = vweird.f32 %v1460
  %vm2546 = vweird.f32 %v2540
  %vm2547 = vmor %vm2545, %vm2546
  %v2548 = vsel %vm2547, %v2540, %v2544
  %v2549 = vand.u32 2147483647, %v1460
  %vm2550 = vcmp.eq.f32.partialorder %v2549, 8.507059e+37
  %v2551 = vand.u32 %v1460, 2147483648
  %v2552 = vor.u32 1.1754944e-38, %v2551
  %v2553 = vsel %vm2550, %v2552, %v2548
  %v2554 = vmul.f32 1.0, %v2553
  %v2555 = vrcp.pop %v1461
  %v2556 = vmul.f32 %v1461, %v2555
  %v2557 = vsub.f32 1.0, %v2556
  %v2558 = vmul.f32 %v2555, %v2557
  %v2559 = vadd.f32 %v2555, %v2558
  %vm2560 = vweird.f32 %v1461
  %vm2561 = vweird.f32 %v2555
  %vm2562 = vmor %vm2560, %vm2561
  %v2563 = vsel %vm2562, %v2555, %v2559
  %v2564 = vand.u32 2147483647, %v1461
  %vm2565 = vcmp.eq.f32.partialorder %v2564, 8.507059e+37
  %v2566 = vand.u32 %v1461, 2147483648
  %v2567 = vor.u32 1.1754944e-38, %v2566
  %v2568 = vsel %vm2565, %v2567, %v2563
  %v2569 = vmul.f32 1.0, %v2568
  %v2570 = vrcp.pop %v1462
  %v2571 = vmul.f32 %v1462, %v2570
  %v2572 = vsub.f32 1.0, %v2571
  %v2573 = vmul.f32 %v2570, %v2572
  %v2574 = vadd.f32 %v2570, %v2573
  %vm2575 = vweird.f32 %v1462
  %vm2576 = vweird.f32 %v2570
  %vm2577 = vmor %vm2575, %vm2576
  %v2578 = vsel %vm2577, %v2570, %v2574
  %v2579 = vand.u32 2147483647, %v1462
  %vm2580 = vcmp.eq.f32.partialorder %v2579, 8.507059e+37
  %v2581 = vand.u32 %v1462, 2147483648
  %v2582 = vor.u32 1.1754944e-38, %v2581
  %v2583 = vsel %vm2580, %v2582, %v2578
  %v2584 = vmul.f32 1.0, %v2583
  %v2585 = vrcp.pop %v1463
  %v2586 = vmul.f32 %v1463, %v2585
  %v2587 = vsub.f32 1.0, %v2586
  %v2588 = vmul.f32 %v2585, %v2587
  %v2589 = vadd.f32 %v2585, %v2588
  %vm2590 = vweird.f32 %v1463
  %vm2591 = vweird.f32 %v2585
  %vm2592 = vmor %vm2590, %vm2591
  %v2593 = vsel %vm2592, %v2585, %v2589
  %v2594 = vand.u32 2147483647, %v1463
  %vm2595 = vcmp.eq.f32.partialorder %v2594, 8.507059e+37
  %v2596 = vand.u32 %v1463, 2147483648
  %v2597 = vor.u32 1.1754944e-38, %v2596
  %v2598 = vsel %vm2595, %v2597, %v2593
  %v2599 = vmul.f32 1.0, %v2598
  %v2600 = vrcp.pop %v1464
  %v2601 = vmul.f32 %v1464, %v2600
  %v2602 = vsub.f32 1.0, %v2601
  %v2603 = vmul.f32 %v2600, %v2602
  %v2604 = vadd.f32 %v2600, %v2603
  %vm2605 = vweird.f32 %v1464
  %vm2606 = vweird.f32 %v2600
  %vm2607 = vmor %vm2605, %vm2606
  %v2608 = vsel %vm2607, %v2600, %v2604
  %v2609 = vand.u32 2147483647, %v1464
  %vm2610 = vcmp.eq.f32.partialorder %v2609, 8.507059e+37
  %v2611 = vand.u32 %v1464, 2147483648
  %v2612 = vor.u32 1.1754944e-38, %v2611
  %v2613 = vsel %vm2610, %v2612, %v2608
  %v2614 = vmul.f32 1.0, %v2613
  %v2615 = vrcp.pop %v1465
  %v2616 = vmul.f32 %v1465, %v2615
  %v2617 = vsub.f32 1.0, %v2616
  %v2618 = vmul.f32 %v2615, %v2617
  %v2619 = vadd.f32 %v2615, %v2618
  %vm2620 = vweird.f32 %v1465
  %vm2621 = vweird.f32 %v2615
  %vm2622 = vmor %vm2620, %vm2621
  %v2623 = vsel %vm2622, %v2615, %v2619
  %v2624 = vand.u32 2147483647, %v1465
  %vm2625 = vcmp.eq.f32.partialorder %v2624, 8.507059e+37
  %v2626 = vand.u32 %v1465, 2147483648
  %v2627 = vor.u32 1.1754944e-38, %v2626
  %v2628 = vsel %vm2625, %v2627, %v2623
  %v2629 = vmul.f32 1.0, %v2628
  %v2630 = vrcp.pop %v1466
  %v2631 = vmul.f32 %v1466, %v2630
  %v2632 = vsub.f32 1.0, %v2631
  %v2633 = vmul.f32 %v2630, %v2632
  %v2634 = vadd.f32 %v2630, %v2633
  %vm2635 = vweird.f32 %v1466
  %vm2636 = vweird.f32 %v2630
  %vm2637 = vmor %vm2635, %vm2636
  %v2638 = vsel %vm2637, %v2630, %v2634
  %v2639 = vand.u32 2147483647, %v1466
  %vm2640 = vcmp.eq.f32.partialorder %v2639, 8.507059e+37
  %v2641 = vand.u32 %v1466, 2147483648
  %v2642 = vor.u32 1.1754944e-38, %v2641
  %v2643 = vsel %vm2640, %v2642, %v2638
  %v2644 = vmul.f32 1.0, %v2643
  %v2645 = vrcp.pop %v1467
  %v2646 = vmul.f32 %v1467, %v2645
  %v2647 = vsub.f32 1.0, %v2646
  %v2648 = vmul.f32 %v2645, %v2647
  %v2649 = vadd.f32 %v2645, %v2648
  %vm2650 = vweird.f32 %v1467
  %vm2651 = vweird.f32 %v2645
  %vm2652 = vmor %vm2650, %vm2651
  %v2653 = vsel %vm2652, %v2645, %v2649
  %v2654 = vand.u32 2147483647, %v1467
  %vm2655 = vcmp.eq.f32.partialorder %v2654, 8.507059e+37
  %v2656 = vand.u32 %v1467, 2147483648
  %v2657 = vor.u32 1.1754944e-38, %v2656
  %v2658 = vsel %vm2655, %v2657, %v2653
  %v2659 = vmul.f32 1.0, %v2658
  %v2660 = vrcp.pop %v1468
  %v2661 = vmul.f32 %v1468, %v2660
  %v2662 = vsub.f32 1.0, %v2661
  %v2663 = vmul.f32 %v2660, %v2662
  %v2664 = vadd.f32 %v2660, %v2663
  %vm2665 = vweird.f32 %v1468
  %vm2666 = vweird.f32 %v2660
  %vm2667 = vmor %vm2665, %vm2666
  %v2668 = vsel %vm2667, %v2660, %v2664
  %v2669 = vand.u32 2147483647, %v1468
  %vm2670 = vcmp.eq.f32.partialorder %v2669, 8.507059e+37
  %v2671 = vand.u32 %v1468, 2147483648
  %v2672 = vor.u32 1.1754944e-38, %v2671
  %v2673 = vsel %vm2670, %v2672, %v2668
  %v2674 = vmul.f32 1.0, %v2673
  %v2675 = vrcp.pop %v1469
  %v2676 = vmul.f32 %v1469, %v2675
  %v2677 = vsub.f32 1.0, %v2676
  %v2678 = vmul.f32 %v2675, %v2677
  %v2679 = vadd.f32 %v2675, %v2678
  %vm2680 = vweird.f32 %v1469
  %vm2681 = vweird.f32 %v2675
  %vm2682 = vmor %vm2680, %vm2681
  %v2683 = vsel %vm2682, %v2675, %v2679
  %v2684 = vand.u32 2147483647, %v1469
  %vm2685 = vcmp.eq.f32.partialorder %v2684, 8.507059e+37
  %v2686 = vand.u32 %v1469, 2147483648
  %v2687 = vor.u32 1.1754944e-38, %v2686
  %v2688 = vsel %vm2685, %v2687, %v2683
  %v2689 = vmul.f32 1.0, %v2688
  %v2690 = vrcp.pop %v1470
  %v2691 = vmul.f32 %v1470, %v2690
  %v2692 = vsub.f32 1.0, %v2691
  %v2693 = vmul.f32 %v2690, %v2692
  %v2694 = vadd.f32 %v2690, %v2693
  %vm2695 = vweird.f32 %v1470
  %vm2696 = vweird.f32 %v2690
  %vm2697 = vmor %vm2695, %vm2696
  %v2698 = vsel %vm2697, %v2690, %v2694
  %v2699 = vand.u32 2147483647, %v1470
  %vm2700 = vcmp.eq.f32.partialorder %v2699, 8.507059e+37
  %v2701 = vand.u32 %v1470, 2147483648
  %v2702 = vor.u32 1.1754944e-38, %v2701
  %v2703 = vsel %vm2700, %v2702, %v2698
  %v2704 = vmul.f32 1.0, %v2703
  %v2705 = vrcp.pop %v1471
  %v2706 = vmul.f32 %v1471, %v2705
  %v2707 = vsub.f32 1.0, %v2706
  %v2708 = vmul.f32 %v2705, %v2707
  %v2709 = vadd.f32 %v2705, %v2708
  %vm2710 = vweird.f32 %v1471
  %vm2711 = vweird.f32 %v2705
  %vm2712 = vmor %vm2710, %vm2711
  %v2713 = vsel %vm2712, %v2705, %v2709
  %v2714 = vand.u32 2147483647, %v1471
  %vm2715 = vcmp.eq.f32.partialorder %v2714, 8.507059e+37
  %v2716 = vand.u32 %v1471, 2147483648
  %v2717 = vor.u32 1.1754944e-38, %v2716
  %v2718 = vsel %vm2715, %v2717, %v2713
  %v2719 = vmul.f32 1.0, %v2718
  %v2720 = vrcp.pop %v1472
  %v2721 = vmul.f32 %v1472, %v2720
  %v2722 = vsub.f32 1.0, %v2721
  %v2723 = vmul.f32 %v2720, %v2722
  %v2724 = vadd.f32 %v2720, %v2723
  %vm2725 = vweird.f32 %v1472
  %vm2726 = vweird.f32 %v2720
  %vm2727 = vmor %vm2725, %vm2726
  %v2728 = vsel %vm2727, %v2720, %v2724
  %v2729 = vand.u32 2147483647, %v1472
  %vm2730 = vcmp.eq.f32.partialorder %v2729, 8.507059e+37
  %v2731 = vand.u32 %v1472, 2147483648
  %v2732 = vor.u32 1.1754944e-38, %v2731
  %v2733 = vsel %vm2730, %v2732, %v2728
  %v2734 = vmul.f32 1.0, %v2733
  %v2735 = vrcp.pop %v1473
  %v2736 = vmul.f32 %v1473, %v2735
  %v2737 = vsub.f32 1.0, %v2736
  %v2738 = vmul.f32 %v2735, %v2737
  %v2739 = vadd.f32 %v2735, %v2738
  %vm2740 = vweird.f32 %v1473
  %vm2741 = vweird.f32 %v2735
  %vm2742 = vmor %vm2740, %vm2741
  %v2743 = vsel %vm2742, %v2735, %v2739
  %v2744 = vand.u32 2147483647, %v1473
  %vm2745 = vcmp.eq.f32.partialorder %v2744, 8.507059e+37
  %v2746 = vand.u32 %v1473, 2147483648
  %v2747 = vor.u32 1.1754944e-38, %v2746
  %v2748 = vsel %vm2745, %v2747, %v2743
  %v2749 = vmul.f32 1.0, %v2748
  %v2750 = vrcp.pop %v1474
  %v2751 = vmul.f32 %v1474, %v2750
  %v2752 = vsub.f32 1.0, %v2751
  %v2753 = vmul.f32 %v2750, %v2752
  %v2754 = vadd.f32 %v2750, %v2753
  %vm2755 = vweird.f32 %v1474
  %vm2756 = vweird.f32 %v2750
  %vm2757 = vmor %vm2755, %vm2756
  %v2758 = vsel %vm2757, %v2750, %v2754
  %v2759 = vand.u32 2147483647, %v1474
  %vm2760 = vcmp.eq.f32.partialorder %v2759, 8.507059e+37
  %v2761 = vand.u32 %v1474, 2147483648
  %v2762 = vor.u32 1.1754944e-38, %v2761
  %v2763 = vsel %vm2760, %v2762, %v2758
  %v2764 = vmul.f32 1.0, %v2763
  %v2765 = vrcp.pop %v1475
  %v2766 = vmul.f32 %v1475, %v2765
  %v2767 = vsub.f32 1.0, %v2766
  %v2768 = vmul.f32 %v2765, %v2767
  %v2769 = vadd.f32 %v2765, %v2768
  %vm2770 = vweird.f32 %v1475
  %vm2771 = vweird.f32 %v2765
  %vm2772 = vmor %vm2770, %vm2771
  %v2773 = vsel %vm2772, %v2765, %v2769
  %v2774 = vand.u32 2147483647, %v1475
  %vm2775 = vcmp.eq.f32.partialorder %v2774, 8.507059e+37
  %v2776 = vand.u32 %v1475, 2147483648
  %v2777 = vor.u32 1.1754944e-38, %v2776
  %v2778 = vsel %vm2775, %v2777, %v2773
  %v2779 = vmul.f32 1.0, %v2778
  %v2780 = vrcp.pop %v1476
  %v2781 = vmul.f32 %v1476, %v2780
  %v2782 = vsub.f32 1.0, %v2781
  %v2783 = vmul.f32 %v2780, %v2782
  %v2784 = vadd.f32 %v2780, %v2783
  %vm2785 = vweird.f32 %v1476
  %vm2786 = vweird.f32 %v2780
  %vm2787 = vmor %vm2785, %vm2786
  %v2788 = vsel %vm2787, %v2780, %v2784
  %v2789 = vand.u32 2147483647, %v1476
  %vm2790 = vcmp.eq.f32.partialorder %v2789, 8.507059e+37
  %v2791 = vand.u32 %v1476, 2147483648
  %v2792 = vor.u32 1.1754944e-38, %v2791
  %v2793 = vsel %vm2790, %v2792, %v2788
  %v2794 = vmul.f32 1.0, %v2793
  %v2795 = vrcp.pop %v1477
  %v2796 = vmul.f32 %v1477, %v2795
  %v2797 = vsub.f32 1.0, %v2796
  %v2798 = vmul.f32 %v2795, %v2797
  %v2799 = vadd.f32 %v2795, %v2798
  %vm2800 = vweird.f32 %v1477
  %vm2801 = vweird.f32 %v2795
  %vm2802 = vmor %vm2800, %vm2801
  %v2803 = vsel %vm2802, %v2795, %v2799
  %v2804 = vand.u32 2147483647, %v1477
  %vm2805 = vcmp.eq.f32.partialorder %v2804, 8.507059e+37
  %v2806 = vand.u32 %v1477, 2147483648
  %v2807 = vor.u32 1.1754944e-38, %v2806
  %v2808 = vsel %vm2805, %v2807, %v2803
  %v2809 = vmul.f32 1.0, %v2808
  %v2810 = vrcp.pop %v1478
  %v2811 = vmul.f32 %v1478, %v2810
  %v2812 = vsub.f32 1.0, %v2811
  %v2813 = vmul.f32 %v2810, %v2812
  %v2814 = vadd.f32 %v2810, %v2813
  %vm2815 = vweird.f32 %v1478
  %vm2816 = vweird.f32 %v2810
  %vm2817 = vmor %vm2815, %vm2816
  %v2818 = vsel %vm2817, %v2810, %v2814
  %v2819 = vand.u32 2147483647, %v1478
  %vm2820 = vcmp.eq.f32.partialorder %v2819, 8.507059e+37
  %v2821 = vand.u32 %v1478, 2147483648
  %v2822 = vor.u32 1.1754944e-38, %v2821
  %v2823 = vsel %vm2820, %v2822, %v2818
  %v2824 = vmul.f32 1.0, %v2823
  %v2825 = vrcp.pop %v1479
  %v2826 = vmul.f32 %v1479, %v2825
  %v2827 = vsub.f32 1.0, %v2826
  %v2828 = vmul.f32 %v2825, %v2827
  %v2829 = vadd.f32 %v2825, %v2828
  %vm2830 = vweird.f32 %v1479
  %vm2831 = vweird.f32 %v2825
  %vm2832 = vmor %vm2830, %vm2831
  %v2833 = vsel %vm2832, %v2825, %v2829
  %v2834 = vand.u32 2147483647, %v1479
  %vm2835 = vcmp.eq.f32.partialorder %v2834, 8.507059e+37
  %v2836 = vand.u32 %v1479, 2147483648
  %v2837 = vor.u32 1.1754944e-38, %v2836
  %v2838 = vsel %vm2835, %v2837, %v2833
  %v2839 = vmul.f32 1.0, %v2838
  %v2840 = vrcp.pop %v1480
  %v2841 = vmul.f32 %v1480, %v2840
  %v2842 = vsub.f32 1.0, %v2841
  %v2843 = vmul.f32 %v2840, %v2842
  %v2844 = vadd.f32 %v2840, %v2843
  %vm2845 = vweird.f32 %v1480
  %vm2846 = vweird.f32 %v2840
  %vm2847 = vmor %vm2845, %vm2846
  %v2848 = vsel %vm2847, %v2840, %v2844
  %v2849 = vand.u32 2147483647, %v1480
  %vm2850 = vcmp.eq.f32.partialorder %v2849, 8.507059e+37
  %v2851 = vand.u32 %v1480, 2147483648
  %v2852 = vor.u32 1.1754944e-38, %v2851
  %v2853 = vsel %vm2850, %v2852, %v2848
  %v2854 = vmul.f32 1.0, %v2853
  %v2855 = vrcp.pop %v1481
  %v2856 = vmul.f32 %v1481, %v2855
  %v2857 = vsub.f32 1.0, %v2856
  %v2858 = vmul.f32 %v2855, %v2857
  %v2859 = vadd.f32 %v2855, %v2858
  %vm2860 = vweird.f32 %v1481
  %vm2861 = vweird.f32 %v2855
  %vm2862 = vmor %vm2860, %vm2861
  %v2863 = vsel %vm2862, %v2855, %v2859
  %v2864 = vand.u32 2147483647, %v1481
  %vm2865 = vcmp.eq.f32.partialorder %v2864, 8.507059e+37
  %v2866 = vand.u32 %v1481, 2147483648
  %v2867 = vor.u32 1.1754944e-38, %v2866
  %v2868 = vsel %vm2865, %v2867, %v2863
  %v2869 = vmul.f32 1.0, %v2868
  %v2870 = vrcp.pop %v1482
  %v2871 = vmul.f32 %v1482, %v2870
  %v2872 = vsub.f32 1.0, %v2871
  %v2873 = vmul.f32 %v2870, %v2872
  %v2874 = vadd.f32 %v2870, %v2873
  %vm2875 = vweird.f32 %v1482
  %vm2876 = vweird.f32 %v2870
  %vm2877 = vmor %vm2875, %vm2876
  %v2878 = vsel %vm2877, %v2870, %v2874
  %v2879 = vand.u32 2147483647, %v1482
  %vm2880 = vcmp.eq.f32.partialorder %v2879, 8.507059e+37
  %v2881 = vand.u32 %v1482, 2147483648
  %v2882 = vor.u32 1.1754944e-38, %v2881
  %v2883 = vsel %vm2880, %v2882, %v2878
  %v2884 = vmul.f32 1.0, %v2883
  %v2885 = vrcp.pop %v1483
  %v2886 = vmul.f32 %v1483, %v2885
  %v2887 = vsub.f32 1.0, %v2886
  %v2888 = vmul.f32 %v2885, %v2887
  %v2889 = vadd.f32 %v2885, %v2888
  %vm2890 = vweird.f32 %v1483
  %vm2891 = vweird.f32 %v2885
  %vm2892 = vmor %vm2890, %vm2891
  %v2893 = vsel %vm2892, %v2885, %v2889
  %v2894 = vand.u32 2147483647, %v1483
  %vm2895 = vcmp.eq.f32.partialorder %v2894, 8.507059e+37
  %v2896 = vand.u32 %v1483, 2147483648
  %v2897 = vor.u32 1.1754944e-38, %v2896
  %v2898 = vsel %vm2895, %v2897, %v2893
  %v2899 = vmul.f32 1.0, %v2898
  %v2900 = vrcp.pop %v1484
  %v2901 = vmul.f32 %v1484, %v2900
  %v2902 = vsub.f32 1.0, %v2901
  %v2903 = vmul.f32 %v2900, %v2902
  %v2904 = vadd.f32 %v2900, %v2903
  %vm2905 = vweird.f32 %v1484
  %vm2906 = vweird.f32 %v2900
  %vm2907 = vmor %vm2905, %vm2906
  %v2908 = vsel %vm2907, %v2900, %v2904
  %v2909 = vand.u32 2147483647, %v1484
  %vm2910 = vcmp.eq.f32.partialorder %v2909, 8.507059e+37
  %v2911 = vand.u32 %v1484, 2147483648
  %v2912 = vor.u32 1.1754944e-38, %v2911
  %v2913 = vsel %vm2910, %v2912, %v2908
  %v2914 = vmul.f32 1.0, %v2913
  %v2915 = vrcp.pop %v1485
  %v2916 = vmul.f32 %v1485, %v2915
  %v2917 = vsub.f32 1.0, %v2916
  %v2918 = vmul.f32 %v2915, %v2917
  %v2919 = vadd.f32 %v2915, %v2918
  %vm2920 = vweird.f32 %v1485
  %vm2921 = vweird.f32 %v2915
  %vm2922 = vmor %vm2920, %vm2921
  %v2923 = vsel %vm2922, %v2915, %v2919
  %v2924 = vand.u32 2147483647, %v1485
  %vm2925 = vcmp.eq.f32.partialorder %v2924, 8.507059e+37
  %v2926 = vand.u32 %v1485, 2147483648
  %v2927 = vor.u32 1.1754944e-38, %v2926
  %v2928 = vsel %vm2925, %v2927, %v2923
  %v2929 = vmul.f32 1.0, %v2928
  %v2930 = vrcp.pop %v1486
  %v2931 = vmul.f32 %v1486, %v2930
  %v2932 = vsub.f32 1.0, %v2931
  %v2933 = vmul.f32 %v2930, %v2932
  %v2934 = vadd.f32 %v2930, %v2933
  %vm2935 = vweird.f32 %v1486
  %vm2936 = vweird.f32 %v2930
  %vm2937 = vmor %vm2935, %vm2936
  %v2938 = vsel %vm2937, %v2930, %v2934
  %v2939 = vand.u32 2147483647, %v1486
  %vm2940 = vcmp.eq.f32.partialorder %v2939, 8.507059e+37
  %v2941 = vand.u32 %v1486, 2147483648
  %v2942 = vor.u32 1.1754944e-38, %v2941
  %v2943 = vsel %vm2940, %v2942, %v2938
  %v2944 = vmul.f32 1.0, %v2943
  %v2945 = vrcp.pop %v1487
  %v2946 = vmul.f32 %v1487, %v2945
  %v2947 = vsub.f32 1.0, %v2946
  %v2948 = vmul.f32 %v2945, %v2947
  %v2949 = vadd.f32 %v2945, %v2948
  %vm2950 = vweird.f32 %v1487
  %vm2951 = vweird.f32 %v2945
  %vm2952 = vmor %vm2950, %vm2951
  %v2953 = vsel %vm2952, %v2945, %v2949
  %v2954 = vand.u32 2147483647, %v1487
  %vm2955 = vcmp.eq.f32.partialorder %v2954, 8.507059e+37
  %v2956 = vand.u32 %v1487, 2147483648
  %v2957 = vor.u32 1.1754944e-38, %v2956
  %v2958 = vsel %vm2955, %v2957, %v2953
  %v2959 = vmul.f32 1.0, %v2958
  %v2960 = vrcp.pop %v1488
  %v2961 = vmul.f32 %v1488, %v2960
  %v2962 = vsub.f32 1.0, %v2961
  %v2963 = vmul.f32 %v2960, %v2962
  %v2964 = vadd.f32 %v2960, %v2963
  %vm2965 = vweird.f32 %v1488
  %vm2966 = vweird.f32 %v2960
  %vm2967 = vmor %vm2965, %vm2966
  %v2968 = vsel %vm2967, %v2960, %v2964
  %v2969 = vand.u32 2147483647, %v1488
  %vm2970 = vcmp.eq.f32.partialorder %v2969, 8.507059e+37
  %v2971 = vand.u32 %v1488, 2147483648
  %v2972 = vor.u32 1.1754944e-38, %v2971
  %v2973 = vsel %vm2970, %v2972, %v2968
  %v2974 = vmul.f32 1.0, %v2973
  %v2975 = vrcp.pop %v1489
  %v2976 = vmul.f32 %v1489, %v2975
  %v2977 = vsub.f32 1.0, %v2976
  %v2978 = vmul.f32 %v2975, %v2977
  %v2979 = vadd.f32 %v2975, %v2978
  %vm2980 = vweird.f32 %v1489
  %vm2981 = vweird.f32 %v2975
  %vm2982 = vmor %vm2980, %vm2981
  %v2983 = vsel %vm2982, %v2975, %v2979
  %v2984 = vand.u32 2147483647, %v1489
  %vm2985 = vcmp.eq.f32.partialorder %v2984, 8.507059e+37
  %v2986 = vand.u32 %v1489, 2147483648
  %v2987 = vor.u32 1.1754944e-38, %v2986
  %v2988 = vsel %vm2985, %v2987, %v2983
  %v2989 = vmul.f32 1.0, %v2988
  %v2990 = vrcp.pop %v1490
  %v2991 = vmul.f32 %v1490, %v2990
  %v2992 = vsub.f32 1.0, %v2991
  %v2993 = vmul.f32 %v2990, %v2992
  %v2994 = vadd.f32 %v2990, %v2993
  %vm2995 = vweird.f32 %v1490
  %vm2996 = vweird.f32 %v2990
  %vm2997 = vmor %vm2995, %vm2996
  %v2998 = vsel %vm2997, %v2990, %v2994
  %v2999 = vand.u32 2147483647, %v1490
  %vm3000 = vcmp.eq.f32.partialorder %v2999, 8.507059e+37
  %v3001 = vand.u32 %v1490, 2147483648
  %v3002 = vor.u32 1.1754944e-38, %v3001
  %v3003 = vsel %vm3000, %v3002, %v2998
  %v3004 = vmul.f32 1.0, %v3003
  %v3005 = vrcp.pop %v1491
  %v3006 = vmul.f32 %v1491, %v3005
  %v3007 = vsub.f32 1.0, %v3006
  %v3008 = vmul.f32 %v3005, %v3007
  %v3009 = vadd.f32 %v3005, %v3008
  %vm3010 = vweird.f32 %v1491
  %vm3011 = vweird.f32 %v3005
  %vm3012 = vmor %vm3010, %vm3011
  %v3013 = vsel %vm3012, %v3005, %v3009
  %v3014 = vand.u32 2147483647, %v1491
  %vm3015 = vcmp.eq.f32.partialorder %v3014, 8.507059e+37
  %v3016 = vand.u32 %v1491, 2147483648
  %v3017 = vor.u32 1.1754944e-38, %v3016
  %v3018 = vsel %vm3015, %v3017, %v3013
  %v3019 = vmul.f32 1.0, %v3018
  %v3020 = vrcp.pop %v1492
  %v3021 = vmul.f32 %v1492, %v3020
  %v3022 = vsub.f32 1.0, %v3021
  %v3023 = vmul.f32 %v3020, %v3022
  %v3024 = vadd.f32 %v3020, %v3023
  %vm3025 = vweird.f32 %v1492
  %vm3026 = vweird.f32 %v3020
  %vm3027 = vmor %vm3025, %vm3026
  %v3028 = vsel %vm3027, %v3020, %v3024
  %v3029 = vand.u32 2147483647, %v1492
  %vm3030 = vcmp.eq.f32.partialorder %v3029, 8.507059e+37
  %v3031 = vand.u32 %v1492, 2147483648
  %v3032 = vor.u32 1.1754944e-38, %v3031
  %v3033 = vsel %vm3030, %v3032, %v3028
  %v3034 = vmul.f32 1.0, %v3033
  %v3035 = vrcp.pop %v1493
  %v3036 = vmul.f32 %v1493, %v3035
  %v3037 = vsub.f32 1.0, %v3036
  %v3038 = vmul.f32 %v3035, %v3037
  %v3039 = vadd.f32 %v3035, %v3038
  %vm3040 = vweird.f32 %v1493
  %vm3041 = vweird.f32 %v3035
  %vm3042 = vmor %vm3040, %vm3041
  %v3043 = vsel %vm3042, %v3035, %v3039
  %v3044 = vand.u32 2147483647, %v1493
  %vm3045 = vcmp.eq.f32.partialorder %v3044, 8.507059e+37
  %v3046 = vand.u32 %v1493, 2147483648
  %v3047 = vor.u32 1.1754944e-38, %v3046
  %v3048 = vsel %vm3045, %v3047, %v3043
  %v3049 = vmul.f32 1.0, %v3048
  %v3050 = vrcp.pop %v1494
  %v3051 = vmul.f32 %v1494, %v3050
  %v3052 = vsub.f32 1.0, %v3051
  %v3053 = vmul.f32 %v3050, %v3052
  %v3054 = vadd.f32 %v3050, %v3053
  %vm3055 = vweird.f32 %v1494
  %vm3056 = vweird.f32 %v3050
  %vm3057 = vmor %vm3055, %vm3056
  %v3058 = vsel %vm3057, %v3050, %v3054
  %v3059 = vand.u32 2147483647, %v1494
  %vm3060 = vcmp.eq.f32.partialorder %v3059, 8.507059e+37
  %v3061 = vand.u32 %v1494, 2147483648
  %v3062 = vor.u32 1.1754944e-38, %v3061
  %v3063 = vsel %vm3060, %v3062, %v3058
  %v3064 = vmul.f32 1.0, %v3063
  %v3065 = vrcp.pop %v1495
  %v3066 = vmul.f32 %v1495, %v3065
  %v3067 = vsub.f32 1.0, %v3066
  %v3068 = vmul.f32 %v3065, %v3067
  %v3069 = vadd.f32 %v3065, %v3068
  %vm3070 = vweird.f32 %v1495
  %vm3071 = vweird.f32 %v3065
  %vm3072 = vmor %vm3070, %vm3071
  %v3073 = vsel %vm3072, %v3065, %v3069
  %v3074 = vand.u32 2147483647, %v1495
  %vm3075 = vcmp.eq.f32.partialorder %v3074, 8.507059e+37
  %v3076 = vand.u32 %v1495, 2147483648
  %v3077 = vor.u32 1.1754944e-38, %v3076
  %v3078 = vsel %vm3075, %v3077, %v3073
  %v3079 = vmul.f32 1.0, %v3078
  %v3080 = vrcp.pop %v1496
  %v3081 = vmul.f32 %v1496, %v3080
  %v3082 = vsub.f32 1.0, %v3081
  %v3083 = vmul.f32 %v3080, %v3082
  %v3084 = vadd.f32 %v3080, %v3083
  %vm3085 = vweird.f32 %v1496
  %vm3086 = vweird.f32 %v3080
  %vm3087 = vmor %vm3085, %vm3086
  %v3088 = vsel %vm3087, %v3080, %v3084
  %v3089 = vand.u32 2147483647, %v1496
  %vm3090 = vcmp.eq.f32.partialorder %v3089, 8.507059e+37
  %v3091 = vand.u32 %v1496, 2147483648
  %v3092 = vor.u32 1.1754944e-38, %v3091
  %v3093 = vsel %vm3090, %v3092, %v3088
  %v3094 = vmul.f32 1.0, %v3093
  %v3095 = vrcp.pop %v1497
  %v3096 = vmul.f32 %v1497, %v3095
  %v3097 = vsub.f32 1.0, %v3096
  %v3098 = vmul.f32 %v3095, %v3097
  %v3099 = vadd.f32 %v3095, %v3098
  %vm3100 = vweird.f32 %v1497
  %vm3101 = vweird.f32 %v3095
  %vm3102 = vmor %vm3100, %vm3101
  %v3103 = vsel %vm3102, %v3095, %v3099
  %v3104 = vand.u32 2147483647, %v1497
  %vm3105 = vcmp.eq.f32.partialorder %v3104, 8.507059e+37
  %v3106 = vand.u32 %v1497, 2147483648
  %v3107 = vor.u32 1.1754944e-38, %v3106
  %v3108 = vsel %vm3105, %v3107, %v3103
  %v3109 = vmul.f32 1.0, %v3108
  %v3110 = vrcp.pop %v1498
  %v3111 = vmul.f32 %v1498, %v3110
  %v3112 = vsub.f32 1.0, %v3111
  %v3113 = vmul.f32 %v3110, %v3112
  %v3114 = vadd.f32 %v3110, %v3113
  %vm3115 = vweird.f32 %v1498
  %vm3116 = vweird.f32 %v3110
  %vm3117 = vmor %vm3115, %vm3116
  %v3118 = vsel %vm3117, %v3110, %v3114
  %v3119 = vand.u32 2147483647, %v1498
  %vm3120 = vcmp.eq.f32.partialorder %v3119, 8.507059e+37
  %v3121 = vand.u32 %v1498, 2147483648
  %v3122 = vor.u32 1.1754944e-38, %v3121
  %v3123 = vsel %vm3120, %v3122, %v3118
  %v3124 = vmul.f32 1.0, %v3123
  %v3125 = vrcp.pop %v1499
  %v3126 = vmul.f32 %v1499, %v3125
  %v3127 = vsub.f32 1.0, %v3126
  %v3128 = vmul.f32 %v3125, %v3127
  %v3129 = vadd.f32 %v3125, %v3128
  %vm3130 = vweird.f32 %v1499
  %vm3131 = vweird.f32 %v3125
  %vm3132 = vmor %vm3130, %vm3131
  %v3133 = vsel %vm3132, %v3125, %v3129
  %v3134 = vand.u32 2147483647, %v1499
  %vm3135 = vcmp.eq.f32.partialorder %v3134, 8.507059e+37
  %v3136 = vand.u32 %v1499, 2147483648
  %v3137 = vor.u32 1.1754944e-38, %v3136
  %v3138 = vsel %vm3135, %v3137, %v3133
  %v3139 = vmul.f32 1.0, %v3138
  %v3140 = vrcp.pop %v1500
  %v3141 = vmul.f32 %v1500, %v3140
  %v3142 = vsub.f32 1.0, %v3141
  %v3143 = vmul.f32 %v3140, %v3142
  %v3144 = vadd.f32 %v3140, %v3143
  %vm3145 = vweird.f32 %v1500
  %vm3146 = vweird.f32 %v3140
  %vm3147 = vmor %vm3145, %vm3146
  %v3148 = vsel %vm3147, %v3140, %v3144
  %v3149 = vand.u32 2147483647, %v1500
  %vm3150 = vcmp.eq.f32.partialorder %v3149, 8.507059e+37
  %v3151 = vand.u32 %v1500, 2147483648
  %v3152 = vor.u32 1.1754944e-38, %v3151
  %v3153 = vsel %vm3150, %v3152, %v3148
  %v3154 = vmul.f32 1.0, %v3153
  %v3155 = vrcp.pop %v1501
  %v3156 = vmul.f32 %v1501, %v3155
  %v3157 = vsub.f32 1.0, %v3156
  %v3158 = vmul.f32 %v3155, %v3157
  %v3159 = vadd.f32 %v3155, %v3158
  %vm3160 = vweird.f32 %v1501
  %vm3161 = vweird.f32 %v3155
  %vm3162 = vmor %vm3160, %vm3161
  %v3163 = vsel %vm3162, %v3155, %v3159
  %v3164 = vand.u32 2147483647, %v1501
  %vm3165 = vcmp.eq.f32.partialorder %v3164, 8.507059e+37
  %v3166 = vand.u32 %v1501, 2147483648
  %v3167 = vor.u32 1.1754944e-38, %v3166
  %v3168 = vsel %vm3165, %v3167, %v3163
  %v3169 = vmul.f32 1.0, %v3168
  %v3170 = vrcp.pop %v1502
  %v3171 = vmul.f32 %v1502, %v3170
  %v3172 = vsub.f32 1.0, %v3171
  %v3173 = vmul.f32 %v3170, %v3172
  %v3174 = vadd.f32 %v3170, %v3173
  %vm3175 = vweird.f32 %v1502
  %vm3176 = vweird.f32 %v3170
  %vm3177 = vmor %vm3175, %vm3176
  %v3178 = vsel %vm3177, %v3170, %v3174
  %v3179 = vand.u32 2147483647, %v1502
  %vm3180 = vcmp.eq.f32.partialorder %v3179, 8.507059e+37
  %v3181 = vand.u32 %v1502, 2147483648
  %v3182 = vor.u32 1.1754944e-38, %v3181
  %v3183 = vsel %vm3180, %v3182, %v3178
  %v3184 = vmul.f32 1.0, %v3183
  %v3185 = vrcp.pop %v1503
  %v3186 = vmul.f32 %v1503, %v3185
  %v3187 = vsub.f32 1.0, %v3186
  %v3188 = vmul.f32 %v3185, %v3187
  %v3189 = vadd.f32 %v3185, %v3188
  %vm3190 = vweird.f32 %v1503
  %vm3191 = vweird.f32 %v3185
  %vm3192 = vmor %vm3190, %vm3191
  %v3193 = vsel %vm3192, %v3185, %v3189
  %v3194 = vand.u32 2147483647, %v1503
  %vm3195 = vcmp.eq.f32.partialorder %v3194, 8.507059e+37
  %v3196 = vand.u32 %v1503, 2147483648
  %v3197 = vor.u32 1.1754944e-38, %v3196
  %v3198 = vsel %vm3195, %v3197, %v3193
  %v3199 = vmul.f32 1.0, %v3198
  %v3200 = vrcp.pop %v1504
  %v3201 = vmul.f32 %v1504, %v3200
  %v3202 = vsub.f32 1.0, %v3201
  %v3203 = vmul.f32 %v3200, %v3202
  %v3204 = vadd.f32 %v3200, %v3203
  %vm3205 = vweird.f32 %v1504
  %vm3206 = vweird.f32 %v3200
  %vm3207 = vmor %vm3205, %vm3206
  %v3208 = vsel %vm3207, %v3200, %v3204
  %v3209 = vand.u32 2147483647, %v1504
  %vm3210 = vcmp.eq.f32.partialorder %v3209, 8.507059e+37
  %v3211 = vand.u32 %v1504, 2147483648
  %v3212 = vor.u32 1.1754944e-38, %v3211
  %v3213 = vsel %vm3210, %v3212, %v3208
  %v3214 = vmul.f32 1.0, %v3213
  %v3215 = vrcp.pop %v1505
  %v3216 = vmul.f32 %v1505, %v3215
  %v3217 = vsub.f32 1.0, %v3216
  %v3218 = vmul.f32 %v3215, %v3217
  %v3219 = vadd.f32 %v3215, %v3218
  %vm3220 = vweird.f32 %v1505
  %vm3221 = vweird.f32 %v3215
  %vm3222 = vmor %vm3220, %vm3221
  %v3223 = vsel %vm3222, %v3215, %v3219
  %v3224 = vand.u32 2147483647, %v1505
  %vm3225 = vcmp.eq.f32.partialorder %v3224, 8.507059e+37
  %v3226 = vand.u32 %v1505, 2147483648
  %v3227 = vor.u32 1.1754944e-38, %v3226
  %v3228 = vsel %vm3225, %v3227, %v3223
  %v3229 = vmul.f32 1.0, %v3228
  %v3230 = vrcp.pop %v1506
  %v3231 = vmul.f32 %v1506, %v3230
  %v3232 = vsub.f32 1.0, %v3231
  %v3233 = vmul.f32 %v3230, %v3232
  %v3234 = vadd.f32 %v3230, %v3233
  %vm3235 = vweird.f32 %v1506
  %vm3236 = vweird.f32 %v3230
  %vm3237 = vmor %vm3235, %vm3236
  %v3238 = vsel %vm3237, %v3230, %v3234
  %v3239 = vand.u32 2147483647, %v1506
  %vm3240 = vcmp.eq.f32.partialorder %v3239, 8.507059e+37
  %v3241 = vand.u32 %v1506, 2147483648
  %v3242 = vor.u32 1.1754944e-38, %v3241
  %v3243 = vsel %vm3240, %v3242, %v3238
  %v3244 = vmul.f32 1.0, %v3243
  %v3245 = vrcp.pop %v1507
  %v3246 = vmul.f32 %v1507, %v3245
  %v3247 = vsub.f32 1.0, %v3246
  %v3248 = vmul.f32 %v3245, %v3247
  %v3249 = vadd.f32 %v3245, %v3248
  %vm3250 = vweird.f32 %v1507
  %vm3251 = vweird.f32 %v3245
  %vm3252 = vmor %vm3250, %vm3251
  %v3253 = vsel %vm3252, %v3245, %v3249
  %v3254 = vand.u32 2147483647, %v1507
  %vm3255 = vcmp.eq.f32.partialorder %v3254, 8.507059e+37
  %v3256 = vand.u32 %v1507, 2147483648
  %v3257 = vor.u32 1.1754944e-38, %v3256
  %v3258 = vsel %vm3255, %v3257, %v3253
  %v3259 = vmul.f32 1.0, %v3258
  %v3260 = vrcp.pop %v1508
  %v3261 = vmul.f32 %v1508, %v3260
  %v3262 = vsub.f32 1.0, %v3261
  %v3263 = vmul.f32 %v3260, %v3262
  %v3264 = vadd.f32 %v3260, %v3263
  %vm3265 = vweird.f32 %v1508
  %vm3266 = vweird.f32 %v3260
  %vm3267 = vmor %vm3265, %vm3266
  %v3268 = vsel %vm3267, %v3260, %v3264
  %v3269 = vand.u32 2147483647, %v1508
  %vm3270 = vcmp.eq.f32.partialorder %v3269, 8.507059e+37
  %v3271 = vand.u32 %v1508, 2147483648
  %v3272 = vor.u32 1.1754944e-38, %v3271
  %v3273 = vsel %vm3270, %v3272, %v3268
  %v3274 = vmul.f32 1.0, %v3273
  %v3275 = vrcp.pop %v1509
  %v3276 = vmul.f32 %v1509, %v3275
  %v3277 = vsub.f32 1.0, %v3276
  %v3278 = vmul.f32 %v3275, %v3277
  %v3279 = vadd.f32 %v3275, %v3278
  %vm3280 = vweird.f32 %v1509
  %vm3281 = vweird.f32 %v3275
  %vm3282 = vmor %vm3280, %vm3281
  %v3283 = vsel %vm3282, %v3275, %v3279
  %v3284 = vand.u32 2147483647, %v1509
  %vm3285 = vcmp.eq.f32.partialorder %v3284, 8.507059e+37
  %v3286 = vand.u32 %v1509, 2147483648
  %v3287 = vor.u32 1.1754944e-38, %v3286
  %v3288 = vsel %vm3285, %v3287, %v3283
  %v3289 = vmul.f32 1.0, %v3288
  %v3290 = vrcp.pop %v1510
  %v3291 = vmul.f32 %v1510, %v3290
  %v3292 = vsub.f32 1.0, %v3291
  %v3293 = vmul.f32 %v3290, %v3292
  %v3294 = vadd.f32 %v3290, %v3293
  %vm3295 = vweird.f32 %v1510
  %vm3296 = vweird.f32 %v3290
  %vm3297 = vmor %vm3295, %vm3296
  %v3298 = vsel %vm3297, %v3290, %v3294
  %v3299 = vand.u32 2147483647, %v1510
  %vm3300 = vcmp.eq.f32.partialorder %v3299, 8.507059e+37
  %v3301 = vand.u32 %v1510, 2147483648
  %v3302 = vor.u32 1.1754944e-38, %v3301
  %v3303 = vsel %vm3300, %v3302, %v3298
  %v3304 = vmul.f32 1.0, %v3303
  %v3305 = vrcp.pop %v1511
  %v3306 = vmul.f32 %v1511, %v3305
  %v3307 = vsub.f32 1.0, %v3306
  %v3308 = vmul.f32 %v3305, %v3307
  %v3309 = vadd.f32 %v3305, %v3308
  %vm3310 = vweird.f32 %v1511
  %vm3311 = vweird.f32 %v3305
  %vm3312 = vmor %vm3310, %vm3311
  %v3313 = vsel %vm3312, %v3305, %v3309
  %v3314 = vand.u32 2147483647, %v1511
  %vm3315 = vcmp.eq.f32.partialorder %v3314, 8.507059e+37
  %v3316 = vand.u32 %v1511, 2147483648
  %v3317 = vor.u32 1.1754944e-38, %v3316
  %v3318 = vsel %vm3315, %v3317, %v3313
  %v3319 = vmul.f32 1.0, %v3318
  %v3320 = vrcp.pop %v1512
  %v3321 = vmul.f32 %v1512, %v3320
  %v3322 = vsub.f32 1.0, %v3321
  %v3323 = vmul.f32 %v3320, %v3322
  %v3324 = vadd.f32 %v3320, %v3323
  %vm3325 = vweird.f32 %v1512
  %vm3326 = vweird.f32 %v3320
  %vm3327 = vmor %vm3325, %vm3326
  %v3328 = vsel %vm3327, %v3320, %v3324
  %v3329 = vand.u32 2147483647, %v1512
  %vm3330 = vcmp.eq.f32.partialorder %v3329, 8.507059e+37
  %v3331 = vand.u32 %v1512, 2147483648
  %v3332 = vor.u32 1.1754944e-38, %v3331
  %v3333 = vsel %vm3330, %v3332, %v3328
  %v3334 = vmul.f32 1.0, %v3333
  %v3335 = vrcp.pop %v1513
  %v3336 = vmul.f32 %v1513, %v3335
  %v3337 = vsub.f32 1.0, %v3336
  %v3338 = vmul.f32 %v3335, %v3337
  %v3339 = vadd.f32 %v3335, %v3338
  %vm3340 = vweird.f32 %v1513
  %vm3341 = vweird.f32 %v3335
  %vm3342 = vmor %vm3340, %vm3341
  %v3343 = vsel %vm3342, %v3335, %v3339
  %v3344 = vand.u32 2147483647, %v1513
  %vm3345 = vcmp.eq.f32.partialorder %v3344, 8.507059e+37
  %v3346 = vand.u32 %v1513, 2147483648
  %v3347 = vor.u32 1.1754944e-38, %v3346
  %v3348 = vsel %vm3345, %v3347, %v3343
  %v3349 = vmul.f32 1.0, %v3348
  %v3350 = vrcp.pop %v1514
  %v3351 = vmul.f32 %v1514, %v3350
  %v3352 = vsub.f32 1.0, %v3351
  %v3353 = vmul.f32 %v3350, %v3352
  %v3354 = vadd.f32 %v3350, %v3353
  %vm3355 = vweird.f32 %v1514
  %vm3356 = vweird.f32 %v3350
  %vm3357 = vmor %vm3355, %vm3356
  %v3358 = vsel %vm3357, %v3350, %v3354
  %v3359 = vand.u32 2147483647, %v1514
  %vm3360 = vcmp.eq.f32.partialorder %v3359, 8.507059e+37
  %v3361 = vand.u32 %v1514, 2147483648
  %v3362 = vor.u32 1.1754944e-38, %v3361
  %v3363 = vsel %vm3360, %v3362, %v3358
  %v3364 = vmul.f32 1.0, %v3363
  %v3365 = vrcp.pop %v1515
  %v3366 = vmul.f32 %v1515, %v3365
  %v3367 = vsub.f32 1.0, %v3366
  %v3368 = vmul.f32 %v3365, %v3367
  %v3369 = vadd.f32 %v3365, %v3368
  %vm3370 = vweird.f32 %v1515
  %vm3371 = vweird.f32 %v3365
  %vm3372 = vmor %vm3370, %vm3371
  %v3373 = vsel %vm3372, %v3365, %v3369
  %v3374 = vand.u32 2147483647, %v1515
  %vm3375 = vcmp.eq.f32.partialorder %v3374, 8.507059e+37
  %v3376 = vand.u32 %v1515, 2147483648
  %v3377 = vor.u32 1.1754944e-38, %v3376
  %v3378 = vsel %vm3375, %v3377, %v3373
  %v3379 = vmul.f32 1.0, %v3378
  %v3380 = vrcp.pop %v1516
  %v3381 = vmul.f32 %v1516, %v3380
  %v3382 = vsub.f32 1.0, %v3381
  %v3383 = vmul.f32 %v3380, %v3382
  %v3384 = vadd.f32 %v3380, %v3383
  %vm3385 = vweird.f32 %v1516
  %vm3386 = vweird.f32 %v3380
  %vm3387 = vmor %vm3385, %vm3386
  %v3388 = vsel %vm3387, %v3380, %v3384
  %v3389 = vand.u32 2147483647, %v1516
  %vm3390 = vcmp.eq.f32.partialorder %v3389, 8.507059e+37
  %v3391 = vand.u32 %v1516, 2147483648
  %v3392 = vor.u32 1.1754944e-38, %v3391
  %v3393 = vsel %vm3390, %v3392, %v3388
  %v3394 = vmul.f32 1.0, %v3393
  %v3395 = vrcp.pop %v1517
  %v3396 = vmul.f32 %v1517, %v3395
  %v3397 = vsub.f32 1.0, %v3396
  %v3398 = vmul.f32 %v3395, %v3397
  %v3399 = vadd.f32 %v3395, %v3398
  %vm3400 = vweird.f32 %v1517
  %vm3401 = vweird.f32 %v3395
  %vm3402 = vmor %vm3400, %vm3401
  %v3403 = vsel %vm3402, %v3395, %v3399
  %v3404 = vand.u32 2147483647, %v1517
  %vm3405 = vcmp.eq.f32.partialorder %v3404, 8.507059e+37
  %v3406 = vand.u32 %v1517, 2147483648
  %v3407 = vor.u32 1.1754944e-38, %v3406
  %v3408 = vsel %vm3405, %v3407, %v3403
  %v3409 = vmul.f32 1.0, %v3408
  %v3410 = vrcp.pop %v1518
  %v3411 = vmul.f32 %v1518, %v3410
  %v3412 = vsub.f32 1.0, %v3411
  %v3413 = vmul.f32 %v3410, %v3412
  %v3414 = vadd.f32 %v3410, %v3413
  %vm3415 = vweird.f32 %v1518
  %vm3416 = vweird.f32 %v3410
  %vm3417 = vmor %vm3415, %vm3416
  %v3418 = vsel %vm3417, %v3410, %v3414
  %v3419 = vand.u32 2147483647, %v1518
  %vm3420 = vcmp.eq.f32.partialorder %v3419, 8.507059e+37
  %v3421 = vand.u32 %v1518, 2147483648
  %v3422 = vor.u32 1.1754944e-38, %v3421
  %v3423 = vsel %vm3420, %v3422, %v3418
  %v3424 = vmul.f32 1.0, %v3423
  %v3425 = vrcp.pop %v1519
  %v3426 = vmul.f32 %v1519, %v3425
  %v3427 = vsub.f32 1.0, %v3426
  %v3428 = vmul.f32 %v3425, %v3427
  %v3429 = vadd.f32 %v3425, %v3428
  %vm3430 = vweird.f32 %v1519
  %vm3431 = vweird.f32 %v3425
  %vm3432 = vmor %vm3430, %vm3431
  %v3433 = vsel %vm3432, %v3425, %v3429
  %v3434 = vand.u32 2147483647, %v1519
  %vm3435 = vcmp.eq.f32.partialorder %v3434, 8.507059e+37
  %v3436 = vand.u32 %v1519, 2147483648
  %v3437 = vor.u32 1.1754944e-38, %v3436
  %v3438 = vsel %vm3435, %v3437, %v3433
  %v3439 = vmul.f32 1.0, %v3438
  %v3440 = vmul.f32 %v689, %v1534
  %v3441 = vmul.f32 %v691, %v1549
  %v3442 = vmul.f32 %v694, %v1564
  %v3443 = vmul.f32 %v696, %v1579
  %v3444 = vmul.f32 %v699, %v1594
  %v3445 = vmul.f32 %v701, %v1609
  %v3446 = vmul.f32 %v704, %v1624
  %v3447 = vmul.f32 %v706, %v1639
  %v3448 = vmul.f32 %v709, %v1654
  %v3449 = vmul.f32 %v711, %v1669
  %v3450 = vmul.f32 %v714, %v1684
  %v3451 = vmul.f32 %v716, %v1699
  %v3452 = vmul.f32 %v719, %v1714
  %v3453 = vmul.f32 %v721, %v1729
  %v3454 = vmul.f32 %v724, %v1744
  %v3455 = vmul.f32 %v726, %v1759
  %v3456 = vmul.f32 %v729, %v1774
  %v3457 = vmul.f32 %v731, %v1789
  %v3458 = vmul.f32 %v734, %v1804
  %v3459 = vmul.f32 %v736, %v1819
  %v3460 = vmul.f32 %v739, %v1834
  %v3461 = vmul.f32 %v741, %v1849
  %v3462 = vmul.f32 %v744, %v1864
  %v3463 = vmul.f32 %v746, %v1879
  %v3464 = vmul.f32 %v749, %v1894
  %v3465 = vmul.f32 %v751, %v1909
  %v3466 = vmul.f32 %v754, %v1924
  %v3467 = vmul.f32 %v756, %v1939
  %v3468 = vmul.f32 %v759, %v1954
  %v3469 = vmul.f32 %v761, %v1969
  %v3470 = vmul.f32 %v764, %v1984
  %v3471 = vmul.f32 %v766, %v1999
  %v3472 = vmul.f32 %v769, %v2014
  %v3473 = vmul.f32 %v771, %v2029
  %v3474 = vmul.f32 %v774, %v2044
  %v3475 = vmul.f32 %v776, %v2059
  %v3476 = vmul.f32 %v779, %v2074
  %v3477 = vmul.f32 %v781, %v2089
  %v3478 = vmul.f32 %v784, %v2104
  %v3479 = vmul.f32 %v786, %v2119
  %v3480 = vmul.f32 %v789, %v2134
  %v3481 = vmul.f32 %v791, %v2149
  %v3482 = vmul.f32 %v794, %v2164
  %v3483 = vmul.f32 %v796, %v2179
  %v3484 = vmul.f32 %v799, %v2194
  %v3485 = vmul.f32 %v801, %v2209
  %v3486 = vmul.f32 %v804, %v2224
  %v3487 = vmul.f32 %v806, %v2239
  %v3488 = vmul.f32 %v809, %v2254
  %v3489 = vmul.f32 %v811, %v2269
  %v3490 = vmul.f32 %v814, %v2284
  %v3491 = vmul.f32 %v816, %v2299
  %v3492 = vmul.f32 %v819, %v2314
  %v3493 = vmul.f32 %v821, %v2329
  %v3494 = vmul.f32 %v824, %v2344
  %v3495 = vmul.f32 %v826, %v2359
  %v3496 = vmul.f32 %v829, %v2374
  %v3497 = vmul.f32 %v831, %v2389
  %v3498 = vmul.f32 %v834, %v2404
  %v3499 = vmul.f32 %v836, %v2419
  %v3500 = vmul.f32 %v839, %v2434
  %v3501 = vmul.f32 %v841, %v2449
  %v3502 = vmul.f32 %v844, %v2464
  %v3503 = vmul.f32 %v846, %v2479
  %v3504 = vmul.f32 %v849, %v2494
  %v3505 = vmul.f32 %v851, %v2509
  %v3506 = vmul.f32 %v854, %v2524
  %v3507 = vmul.f32 %v856, %v2539
  %v3508 = vmul.f32 %v859, %v2554
  %v3509 = vmul.f32 %v861, %v2569
  %v3510 = vmul.f32 %v864, %v2584
  %v3511 = vmul.f32 %v866, %v2599
  %v3512 = vmul.f32 %v869, %v2614
  %v3513 = vmul.f32 %v871, %v2629
  %v3514 = vmul.f32 %v874, %v2644
  %v3515 = vmul.f32 %v876, %v2659
  %v3516 = vmul.f32 %v879, %v2674
  %v3517 = vmul.f32 %v881, %v2689
  %v3518 = vmul.f32 %v884, %v2704
  %v3519 = vmul.f32 %v886, %v2719
  %v3520 = vmul.f32 %v889, %v2734
  %v3521 = vmul.f32 %v891, %v2749
  %v3522 = vmul.f32 %v894, %v2764
  %v3523 = vmul.f32 %v896, %v2779
  %v3524 = vmul.f32 %v899, %v2794
  %v3525 = vmul.f32 %v901, %v2809
  %v3526 = vmul.f32 %v904, %v2824
  %v3527 = vmul.f32 %v906, %v2839
  %v3528 = vmul.f32 %v909, %v2854
  %v3529 = vmul.f32 %v911, %v2869
  %v3530 = vmul.f32 %v914, %v2884
  %v3531 = vmul.f32 %v916, %v2899
  %v3532 = vmul.f32 %v919, %v2914
  %v3533 = vmul.f32 %v921, %v2929
  %v3534 = vmul.f32 %v924, %v2944
  %v3535 = vmul.f32 %v926, %v2959
  %v3536 = vmul.f32 %v929, %v2974
  %v3537 = vmul.f32 %v931, %v2989
  %v3538 = vmul.f32 %v934, %v3004
  %v3539 = vmul.f32 %v936, %v3019
  %v3540 = vmul.f32 %v939, %v3034
  %v3541 = vmul.f32 %v941, %v3049
  %v3542 = vmul.f32 %v944, %v3064
  %v3543 = vmul.f32 %v946, %v3079
  %v3544 = vmul.f32 %v949, %v3094
  %v3545 = vmul.f32 %v951, %v3109
  %v3546 = vmul.f32 %v954, %v3124
  %v3547 = vmul.f32 %v956, %v3139
  %v3548 = vmul.f32 %v959, %v3154
  %v3549 = vmul.f32 %v961, %v3169
  %v3550 = vmul.f32 %v964, %v3184
  %v3551 = vmul.f32 %v966, %v3199
  %v3552 = vmul.f32 %v969, %v3214
  %v3553 = vmul.f32 %v971, %v3229
  %v3554 = vmul.f32 %v974, %v3244
  %v3555 = vmul.f32 %v976, %v3259
  %v3556 = vmul.f32 %v979, %v3274
  %v3557 = vmul.f32 %v981, %v3289
  %v3558 = vmul.f32 %v984, %v3304
  %v3559 = vmul.f32 %v986, %v3319
  %v3560 = vmul.f32 %v989, %v3334
  %v3561 = vmul.f32 %v991, %v3349
  %v3562 = vmul.f32 %v994, %v3364
  %v3563 = vmul.f32 %v996, %v3379
  %v3564 = vmul.f32 %v999, %v3394
  %v3565 = vmul.f32 %v1001, %v3409
  %v3566 = vmul.f32 %v1004, %v3424
  %v3567 = vmul.f32 %v1006, %v3439
  %v3568 = vsel %vm486, %v3440, 0.0
  %v3569 = vsel %vm486, %v3441, 0.0
  %v3570 = vadd.f32 %v3568, %v3569
  %v3571 = vsel %vm486, %v3442, 0.0
  %v3572 = vadd.f32 %v3570, %v3571
  %v3573 = vsel %vm486, %v3443, 0.0
  %v3574 = vadd.f32 %v3572, %v3573
  %v3575 = vsel %vm486, %v3444, 0.0
  %v3576 = vadd.f32 %v3574, %v3575
  %v3577 = vsel %vm486, %v3445, 0.0
  %v3578 = vadd.f32 %v3576, %v3577
  %v3579 = vsel %vm486, %v3446, 0.0
  %v3580 = vadd.f32 %v3578, %v3579
  %v3581 = vsel %vm486, %v3447, 0.0
  %v3582 = vadd.f32 %v3580, %v3581
  %v3583 = vsel %vm486, %v3448, 0.0
  %v3584 = vadd.f32 %v3582, %v3583
  %v3585 = vsel %vm486, %v3449, 0.0
  %v3586 = vadd.f32 %v3584, %v3585
  %v3587 = vsel %vm486, %v3450, 0.0
  %v3588 = vadd.f32 %v3586, %v3587
  %v3589 = vsel %vm486, %v3451, 0.0
  %v3590 = vadd.f32 %v3588, %v3589
  %v3591 = vsel %vm486, %v3452, 0.0
  %v3592 = vadd.f32 %v3590, %v3591
  %v3593 = vsel %vm486, %v3453, 0.0
  %v3594 = vadd.f32 %v3592, %v3593
  %v3595 = vsel %vm486, %v3454, 0.0
  %v3596 = vadd.f32 %v3594, %v3595
  %v3597 = vsel %vm486, %v3455, 0.0
  %v3598 = vadd.f32 %v3596, %v3597
  %v3599 = vsel %vm486, %v3456, 0.0
  %v3600 = vadd.f32 %v3598, %v3599
  %v3601 = vsel %vm486, %v3457, 0.0
  %v3602 = vadd.f32 %v3600, %v3601
  %v3603 = vsel %vm486, %v3458, 0.0
  %v3604 = vadd.f32 %v3602, %v3603
  %v3605 = vsel %vm486, %v3459, 0.0
  %v3606 = vadd.f32 %v3604, %v3605
  %v3607 = vsel %vm486, %v3460, 0.0
  %v3608 = vadd.f32 %v3606, %v3607
  %v3609 = vsel %vm486, %v3461, 0.0
  %v3610 = vadd.f32 %v3608, %v3609
  %v3611 = vsel %vm486, %v3462, 0.0
  %v3612 = vadd.f32 %v3610, %v3611
  %v3613 = vsel %vm486, %v3463, 0.0
  %v3614 = vadd.f32 %v3612, %v3613
  %v3615 = vsel %vm486, %v3464, 0.0
  %v3616 = vadd.f32 %v3614, %v3615
  %v3617 = vsel %vm486, %v3465, 0.0
  %v3618 = vadd.f32 %v3616, %v3617
  %v3619 = vsel %vm486, %v3466, 0.0
  %v3620 = vadd.f32 %v3618, %v3619
  %v3621 = vsel %vm486, %v3467, 0.0
  %v3622 = vadd.f32 %v3620, %v3621
  %v3623 = vsel %vm486, %v3468, 0.0
  %v3624 = vadd.f32 %v3622, %v3623
  %v3625 = vsel %vm486, %v3469, 0.0
  %v3626 = vadd.f32 %v3624, %v3625
  %v3627 = vsel %vm486, %v3470, 0.0
  %v3628 = vadd.f32 %v3626, %v3627
  %v3629 = vsel %vm486, %v3471, 0.0
  %v3630 = vadd.f32 %v3628, %v3629
  %v3631 = vrot.slane %v3630, 4
  %v3632 = vadd.f32 %v3630, %v3631
  %v3633 = vrot.slane %v3632, 2
  %v3634 = vadd.f32 %v3632, %v3633
  %v3635 = vrot.slane %v3634, 1
  %v3636 = vadd.f32 %v3634, %v3635
  %v3637 = vsel %vm486, %v3504, 0.0
  %v3638 = vsel %vm486, %v3505, 0.0
  %v3639 = vadd.f32 %v3637, %v3638
  %v3640 = vsel %vm486, %v3506, 0.0
  %v3641 = vadd.f32 %v3639, %v3640
  %v3642 = vsel %vm486, %v3507, 0.0
  %v3643 = vadd.f32 %v3641, %v3642
  %v3644 = vsel %vm486, %v3508, 0.0
  %v3645 = vadd.f32 %v3643, %v3644
  %v3646 = vsel %vm486, %v3509, 0.0
  %v3647 = vadd.f32 %v3645, %v3646
  %v3648 = vsel %vm486, %v3510, 0.0
  %v3649 = vadd.f32 %v3647, %v3648
  %v3650 = vsel %vm486, %v3511, 0.0
  %v3651 = vadd.f32 %v3649, %v3650
  %v3652 = vsel %vm486, %v3512, 0.0
  %v3653 = vadd.f32 %v3651, %v3652
  %v3654 = vsel %vm486, %v3513, 0.0
  %v3655 = vadd.f32 %v3653, %v3654
  %v3656 = vsel %vm486, %v3514, 0.0
  %v3657 = vadd.f32 %v3655, %v3656
  %v3658 = vsel %vm486, %v3515, 0.0
  %v3659 = vadd.f32 %v3657, %v3658
  %v3660 = vsel %vm486, %v3516, 0.0
  %v3661 = vadd.f32 %v3659, %v3660
  %v3662 = vsel %vm486, %v3517, 0.0
  %v3663 = vadd.f32 %v3661, %v3662
  %v3664 = vsel %vm486, %v3518, 0.0
  %v3665 = vadd.f32 %v3663, %v3664
  %v3666 = vsel %vm486, %v3519, 0.0
  %v3667 = vadd.f32 %v3665, %v3666
  %v3668 = vsel %vm486, %v3520, 0.0
  %v3669 = vadd.f32 %v3667, %v3668
  %v3670 = vsel %vm486, %v3521, 0.0
  %v3671 = vadd.f32 %v3669, %v3670
  %v3672 = vsel %vm486, %v3522, 0.0
  %v3673 = vadd.f32 %v3671, %v3672
  %v3674 = vsel %vm486, %v3523, 0.0
  %v3675 = vadd.f32 %v3673, %v3674
  %v3676 = vsel %vm486, %v3524, 0.0
  %v3677 = vadd.f32 %v3675, %v3676
  %v3678 = vsel %vm486, %v3525, 0.0
  %v3679 = vadd.f32 %v3677, %v3678
  %v3680 = vsel %vm486, %v3526, 0.0
  %v3681 = vadd.f32 %v3679, %v3680
  %v3682 = vsel %vm486, %v3527, 0.0
  %v3683 = vadd.f32 %v3681, %v3682
  %v3684 = vsel %vm486, %v3528, 0.0
  %v3685 = vadd.f32 %v3683, %v3684
  %v3686 = vsel %vm486, %v3529, 0.0
  %v3687 = vadd.f32 %v3685, %v3686
  %v3688 = vsel %vm486, %v3530, 0.0
  %v3689 = vadd.f32 %v3687, %v3688
  %v3690 = vsel %vm486, %v3531, 0.0
  %v3691 = vadd.f32 %v3689, %v3690
  %v3692 = vsel %vm486, %v3532, 0.0
  %v3693 = vadd.f32 %v3691, %v3692
  %v3694 = vsel %vm486, %v3533, 0.0
  %v3695 = vadd.f32 %v3693, %v3694
  %v3696 = vsel %vm486, %v3534, 0.0
  %v3697 = vadd.f32 %v3695, %v3696
  %v3698 = vsel %vm486, %v3535, 0.0
  %v3699 = vadd.f32 %v3697, %v3698
  %v3700 = vrot.slane %v3699, 4
  %v3701 = vadd.f32 %v3699, %v3700
  %v3702 = vrot.slane %v3701, 2
  %v3703 = vadd.f32 %v3701, %v3702
  %v3704 = vrot.slane %v3703, 1
  %v3705 = vadd.f32 %v3703, %v3704
  %v3706 = vsub.f32 %v3636, %v3705
  %v3707 = vmul.f32 %v3706, 0.00390625
  %v3708 = vsel %vm486, %v3472, 0.0
  %v3709 = vsel %vm486, %v3473, 0.0
  %v3710 = vadd.f32 %v3708, %v3709
  %v3711 = vsel %vm486, %v3474, 0.0
  %v3712 = vadd.f32 %v3710, %v3711
  %v3713 = vsel %vm486, %v3475, 0.0
  %v3714 = vadd.f32 %v3712, %v3713
  %v3715 = vsel %vm486, %v3476, 0.0
  %v3716 = vadd.f32 %v3714, %v3715
  %v3717 = vsel %vm486, %v3477, 0.0
  %v3718 = vadd.f32 %v3716, %v3717
  %v3719 = vsel %vm486, %v3478, 0.0
  %v3720 = vadd.f32 %v3718, %v3719
  %v3721 = vsel %vm486, %v3479, 0.0
  %v3722 = vadd.f32 %v3720, %v3721
  %v3723 = vsel %vm486, %v3480, 0.0
  %v3724 = vadd.f32 %v3722, %v3723
  %v3725 = vsel %vm486, %v3481, 0.0
  %v3726 = vadd.f32 %v3724, %v3725
  %v3727 = vsel %vm486, %v3482, 0.0
  %v3728 = vadd.f32 %v3726, %v3727
  %v3729 = vsel %vm486, %v3483, 0.0
  %v3730 = vadd.f32 %v3728, %v3729
  %v3731 = vsel %vm486, %v3484, 0.0
  %v3732 = vadd.f32 %v3730, %v3731
  %v3733 = vsel %vm486, %v3485, 0.0
  %v3734 = vadd.f32 %v3732, %v3733
  %v3735 = vsel %vm486, %v3486, 0.0
  %v3736 = vadd.f32 %v3734, %v3735
  %v3737 = vsel %vm486, %v3487, 0.0
  %v3738 = vadd.f32 %v3736, %v3737
  %v3739 = vsel %vm486, %v3488, 0.0
  %v3740 = vadd.f32 %v3738, %v3739
  %v3741 = vsel %vm486, %v3489, 0.0
  %v3742 = vadd.f32 %v3740, %v3741
  %v3743 = vsel %vm486, %v3490, 0.0
  %v3744 = vadd.f32 %v3742, %v3743
  %v3745 = vsel %vm486, %v3491, 0.0
  %v3746 = vadd.f32 %v3744, %v3745
  %v3747 = vsel %vm486, %v3492, 0.0
  %v3748 = vadd.f32 %v3746, %v3747
  %v3749 = vsel %vm486, %v3493, 0.0
  %v3750 = vadd.f32 %v3748, %v3749
  %v3751 = vsel %vm486, %v3494, 0.0
  %v3752 = vadd.f32 %v3750, %v3751
  %v3753 = vsel %vm486, %v3495, 0.0
  %v3754 = vadd.f32 %v3752, %v3753
  %v3755 = vsel %vm486, %v3496, 0.0
  %v3756 = vadd.f32 %v3754, %v3755
  %v3757 = vsel %vm486, %v3497, 0.0
  %v3758 = vadd.f32 %v3756, %v3757
  %v3759 = vsel %vm486, %v3498, 0.0
  %v3760 = vadd.f32 %v3758, %v3759
  %v3761 = vsel %vm486, %v3499, 0.0
  %v3762 = vadd.f32 %v3760, %v3761
  %v3763 = vsel %vm486, %v3500, 0.0
  %v3764 = vadd.f32 %v3762, %v3763
  %v3765 = vsel %vm486, %v3501, 0.0
  %v3766 = vadd.f32 %v3764, %v3765
  %v3767 = vsel %vm486, %v3502, 0.0
  %v3768 = vadd.f32 %v3766, %v3767
  %v3769 = vsel %vm486, %v3503, 0.0
  %v3770 = vadd.f32 %v3768, %v3769
  %v3771 = vrot.slane %v3770, 4
  %v3772 = vadd.f32 %v3770, %v3771
  %v3773 = vrot.slane %v3772, 2
  %v3774 = vadd.f32 %v3772, %v3773
  %v3775 = vrot.slane %v3774, 1
  %v3776 = vadd.f32 %v3774, %v3775
  %v3777 = vsel %vm486, %v3536, 0.0
  %v3778 = vsel %vm486, %v3537, 0.0
  %v3779 = vadd.f32 %v3777, %v3778
  %v3780 = vsel %vm486, %v3538, 0.0
  %v3781 = vadd.f32 %v3779, %v3780
  %v3782 = vsel %vm486, %v3539, 0.0
  %v3783 = vadd.f32 %v3781, %v3782
  %v3784 = vsel %vm486, %v3540, 0.0
  %v3785 = vadd.f32 %v3783, %v3784
  %v3786 = vsel %vm486, %v3541, 0.0
  %v3787 = vadd.f32 %v3785, %v3786
  %v3788 = vsel %vm486, %v3542, 0.0
  %v3789 = vadd.f32 %v3787, %v3788
  %v3790 = vsel %vm486, %v3543, 0.0
  %v3791 = vadd.f32 %v3789, %v3790
  %v3792 = vsel %vm486, %v3544, 0.0
  %v3793 = vadd.f32 %v3791, %v3792
  %v3794 = vsel %vm486, %v3545, 0.0
  %v3795 = vadd.f32 %v3793, %v3794
  %v3796 = vsel %vm486, %v3546, 0.0
  %v3797 = vadd.f32 %v3795, %v3796
  %v3798 = vsel %vm486, %v3547, 0.0
  %v3799 = vadd.f32 %v3797, %v3798
  %v3800 = vsel %vm486, %v3548, 0.0
  %v3801 = vadd.f32 %v3799, %v3800
  %v3802 = vsel %vm486, %v3549, 0.0
  %v3803 = vadd.f32 %v3801, %v3802
  %v3804 = vsel %vm486, %v3550, 0.0
  %v3805 = vadd.f32 %v3803, %v3804
  %v3806 = vsel %vm486, %v3551, 0.0
  %v3807 = vadd.f32 %v3805, %v3806
  %v3808 = vsel %vm486, %v3552, 0.0
  %v3809 = vadd.f32 %v3807, %v3808
  %v3810 = vsel %vm486, %v3553, 0.0
  %v3811 = vadd.f32 %v3809, %v3810
  %v3812 = vsel %vm486, %v3554, 0.0
  %v3813 = vadd.f32 %v3811, %v3812
  %v3814 = vsel %vm486, %v3555, 0.0
  %v3815 = vadd.f32 %v3813, %v3814
  %v3816 = vsel %vm486, %v3556, 0.0
  %v3817 = vadd.f32 %v3815, %v3816
  %v3818 = vsel %vm486, %v3557, 0.0
  %v3819 = vadd.f32 %v3817, %v3818
  %v3820 = vsel %vm486, %v3558, 0.0
  %v3821 = vadd.f32 %v3819, %v3820
  %v3822 = vsel %vm486, %v3559, 0.0
  %v3823 = vadd.f32 %v3821, %v3822
  %v3824 = vsel %vm486, %v3560, 0.0
  %v3825 = vadd.f32 %v3823, %v3824
  %v3826 = vsel %vm486, %v3561, 0.0
  %v3827 = vadd.f32 %v3825, %v3826
  %v3828 = vsel %vm486, %v3562, 0.0
  %v3829 = vadd.f32 %v3827, %v3828
  %v3830 = vsel %vm486, %v3563, 0.0
  %v3831 = vadd.f32 %v3829, %v3830
  %v3832 = vsel %vm486, %v3564, 0.0
  %v3833 = vadd.f32 %v3831, %v3832
  %v3834 = vsel %vm486, %v3565, 0.0
  %v3835 = vadd.f32 %v3833, %v3834
  %v3836 = vsel %vm486, %v3566, 0.0
  %v3837 = vadd.f32 %v3835, %v3836
  %v3838 = vsel %vm486, %v3567, 0.0
  %v3839 = vadd.f32 %v3837, %v3838
  %v3840 = vrot.slane %v3839, 4
  %v3841 = vadd.f32 %v3839, %v3840
  %v3842 = vrot.slane %v3841, 2
  %v3843 = vadd.f32 %v3841, %v3842
  %v3844 = vrot.slane %v3843, 1
  %v3845 = vadd.f32 %v3843, %v3844
  %v3846 = vsub.f32 %v3776, %v3845
  %v3847 = vmul.f32 %v3846, 0.00390625
  %vm3848 = vcmask 1040384
  %v3849 = vsel %vm3848, %v3707, %v3847
  %v3850 = vld [vmem:[%s3] sm:$0xff]
  %v3851 = vld [vmem:[%s3 + $0x8] sm:$0xff]
  %v3852 = vld [vmem:[%s3 + $0x10] sm:$0xff]
  %v3853 = vld [vmem:[%s3 + $0x18] sm:$0xff]
  %v3855 = vsel %vm486, %v3849, 0
  %3857 = vmatpush.msra.mxu0 0.0
  %3858 = vmatpush.msra.mxu0 0.0
  %3859 = vmatpush.msra.mxu0 0.0
  %3860 = vmatpush.msra.mxu0 0.0
  %3861 = vmatpush.msra.mxu0 0.0
  %3862 = vmatpush.msra.mxu0 0.0
  %3863 = vmatpush.msra.mxu0 0.0
  %3864 = vmatpush.msra.mxu0 0.0
  %3865 = vmatpush.msra.mxu0 0.0
  %3866 = vmatpush.msra.mxu0 0.0
  %3867 = vmatpush.msra.mxu0 0.0
  %3868 = vmatpush.msra.mxu0 0.0
  %3869 = vmatpush.msra.mxu0 %v3853
  %3870 = vmatpush.msra.mxu0 %v3852
  %3871 = vmatpush.msra.mxu0 %v3851
  %3872 = vmatpush.msra.mxu0 %v3850
  %3873 = vmatmul.f32.gmra.mxu0 %v3855
  %v3874 = vpop.f32.mrf.mxu0
  %v3875 = vadd.f32 1e-06, %v3874
  %3876 = vdwg.mxu0
  %v3877 = vmul.f32 %v3875, %v3875
  %vm3878 = vcmask 402432
  %v3879 = vsel %vm3878, %v3877, 0.0
  %3880 = vadd.xlane.f32.xlu0 %v3879
  %v3881 = vpop.xlane.xlu0 %3880
  %v3882 = vrsqrt.pop %v3881
  %v3883 = vmul.f32 %v3882, %v3881
  %v3884 = vmul.f32 %v3883, %v3882
  %v3885 = vmul.f32 0.5, %v3884
  %v3886 = vsub.f32 1.5, %v3885
  %v3887 = vmul.f32 %v3882, %v3886
  %v3888 = vmul.f32 %v3881, %v3887
  %vm3889 = vcmp.eq.f32.partialorder %v3881, inf
  %v3890 = vsel %vm3889, %v3881, %v3888
  %vm3891 = vcmp.eq.f32.partialorder %v3881, 0.0
  %v3892 = vand.u32 %v3881, 2147483648
  %v3893 = vsel %vm3891, %v3892, %v3890
  %vm3894 = vcmask 1024
  %3895 = vst.msk [vmem:[%s4] sm:$0x3] %vm3894, %v3893
  // Predicated region
  $region18: #{base_model_forward.1} parent=0 // pred_check
    _
  $region19: #{base_model_forward.1} parent=0 // pred_check_branch
    %3897 = sbr.rel (0) target = $region21
  $region20: #{base_model_forward.1} parent=0 // pred_region
    _
  $region21: #{base_model_forward.1} parent=0 // pred_fallthru
    _
  // Predicated region
  $region22: #{base_model_forward.1} parent=0 // pred_check
    _
  $region23: #{base_model_forward.1} parent=0 // pred_check_branch
    %3899 = sbr.rel (0) target = $region25
  $region24: #{base_model_forward.1} parent=0 // pred_region
    _
  $region25: #{base_model_forward.1} parent=0 // pred_fallthru
    _

</llo_original>
